<compile_context>
chip_gen: v7x
topology: tpu7x:2x2x1
jax: 0.10.0
libtpu: 0.0.40
codegen_flags: <defaults>
</compile_context>

<pallas_src>
import functools

import jax
import jax.numpy as jnp
from jax.experimental import pallas as pl
from jax.experimental.pallas import tpu as pltpu


# ----------------------------------------------------------------------------
# Pallas kernel 1: per-mode complex channel mixing (lane-dense over modes)
# ----------------------------------------------------------------------------
def _mix_kernel(xr_ref, xi_ref, wr_ref, wi_ref, yr_ref, yi_ref):
    """y[b, o, :] = sum_i x[b, i, :] * w[i, o, :]  (complex, Gauss 3-multiply).

    Shapes (per grid step): x* (B, Cin, Mt), w* (Cin, Cout, Mt), y* (B, Cout, Mt).
    The mode axis Mt sits on lanes; the loop over Cin is a static Python unroll
    of VPU FMAs (channels are far too small to feed the MXU usefully).
    """
    cin = wr_ref.shape[0]
    acc_r = None
    acc_i = None
    for i in range(cin):
        xr = xr_ref[:, i:i + 1, :]          # (B, 1, Mt)
        xi = xi_ref[:, i:i + 1, :]
        wr = wr_ref[i]                      # (Cout, Mt)
        wi = wi_ref[i]
        rr = xr * wr                        # (B, Cout, Mt) via broadcast
        ii = xi * wi
        t = (xr + xi) * (wr + wi)
        cr = rr - ii                        # real contribution
        ci = t - rr - ii                    # imag contribution
        acc_r = cr if acc_r is None else acc_r + cr
        acc_i = ci if acc_i is None else acc_i + ci
    yr_ref[...] = acc_r
    yi_ref[...] = acc_i


def _pick_tile_m(m_pad, b, cin, cout, budget_bytes=8 << 20):
    """Largest mode-axis tile (multiple of 128 dividing m_pad) whose
    double-buffered working set (4 inputs + 2 outputs) fits the VMEM budget
    (budget kept well under v7x's smaller scoped VMEM)."""
    bytes_per_mode = 4 * (2 * b * cin + 2 * cin * cout + 2 * b * cout)
    tile = m_pad
    while tile > 128 and 2 * tile * bytes_per_mode > budget_bytes:
        if tile % 2 == 0 and (tile // 2) % 128 == 0:
            tile //= 2
        else:
            break
    return tile


def spectral_mix_pallas(xr, xi, wr, wi):
    """Complex batched per-mode channel mixing, mode axis last (lane-dense)."""
    B, Cin, Mp = xr.shape
    Cout = wr.shape[1]
    assert Mp % 128 == 0, "mode axis must be padded to a multiple of 128"
    tile_m = _pick_tile_m(Mp, B, Cin, Cout)
    grid = (Mp // tile_m,)

    act_spec = pl.BlockSpec((B, Cin, tile_m), lambda m: (0, 0, m))
    w_spec = pl.BlockSpec((Cin, Cout, tile_m), lambda m: (0, 0, m))
    out_spec = pl.BlockSpec((B, Cout, tile_m), lambda m: (0, 0, m))

    return pl.pallas_call(
        _mix_kernel,
        out_shape=(jax.ShapeDtypeStruct((B, Cout, Mp), jnp.float32),
                   jax.ShapeDtypeStruct((B, Cout, Mp), jnp.float32)),
        grid=grid,
        in_specs=[act_spec, act_spec, w_spec, w_spec],
        out_specs=(out_spec, out_spec),
        compiler_params=pltpu.CompilerParams(dimension_semantics=("parallel",)),
    )(xr, xi, wr, wi)


# ----------------------------------------------------------------------------
# Pallas kernel 2: exact GELU (erf form, matches torch.nn.GELU default)
# ----------------------------------------------------------------------------
def _gelu_kernel(x_ref, o_ref):
    x = x_ref[...]
    o_ref[...] = 0.5 * x * (1.0 + jax.lax.erf(x * jnp.float32(0.7071067811865476)))


def _pick_tile_rows(rows, cols, budget_bytes=8 << 20):
    tile = rows
    while 2 * 2 * tile * cols * 4 > budget_bytes:   # in+out, double-buffered
        if tile % 2 == 0 and (tile // 2) % 8 == 0:
            tile //= 2
        else:
            break
    return tile


def gelu_pallas(x):
    B, C, H, W = x.shape
    flat = x.reshape(B * C, H * W)                  # lane-dense 2-D slab
    rows, cols = flat.shape
    tile_r = _pick_tile_rows(rows, cols)            # one grid step at small sizes
    grid = (rows // tile_r,)
    out = pl.pallas_call(
        _gelu_kernel,
        out_shape=jax.ShapeDtypeStruct((rows, cols), jnp.float32),
        grid=grid,
        in_specs=[pl.BlockSpec((tile_r, cols), lambda r: (r, 0))],
        out_specs=pl.BlockSpec((tile_r, cols), lambda r: (r, 0)),
        compiler_params=pltpu.CompilerParams(dimension_semantics=("parallel",)),
    )(flat)
    return out.reshape(B, C, H, W)


# ----------------------------------------------------------------------------
# Weight packing (done ONCE, outside the forward pass)
# ----------------------------------------------------------------------------
def init_spectral_weights(key, in_ch, out_ch, m1, m2):
    # torch convention: scale * rand(...) per corner block, split into re/im.
    scale = 1.0 / (in_ch * out_ch)
    ks = jax.random.split(key, 4)
    shape = (in_ch, out_ch, m1, m2)
    return tuple(scale * jax.random.uniform(k, shape, dtype=jnp.float32) for k in ks)


def pack_spectral_weights(w1_re, w1_im, w2_re, w2_im, m_pad):
    """(Cin, Cout, m1, m2) x 4 -> real/imag weights of shape (Cin, Cout, Mp)
    with both corner blocks concatenated along the lane-dense mode axis."""
    def pack(wa, wb):
        cin, cout, m1, m2 = wa.shape
        m = 2 * m1 * m2
        w = jnp.concatenate(
            [wa.reshape(cin, cout, m1 * m2), wb.reshape(cin, cout, m1 * m2)],
            axis=-1)
        if m_pad > m:
            w = jnp.pad(w, ((0, 0), (0, 0), (0, m_pad - m)))
        return w.astype(jnp.float32)
    return pack(w1_re, w2_re), pack(w1_im, w2_im)


# ----------------------------------------------------------------------------
# SpectralConvND (2-D case) around the Pallas mix kernel
# ----------------------------------------------------------------------------
def spectral_conv_2d_pallas(u, wr, wi, m1, m2):
    """FNO 2-D spectral conv. wr/wi: packed (Cin, Cout, Mp) kernel-layout weights."""
    B, Cin, H, W = u.shape
    Cout = wr.shape[1]
    Mp = wr.shape[2]
    M = 2 * m1 * m2
    Wr = W // 2 + 1

    u_ft = jnp.fft.rfft2(u.astype(jnp.float32), axes=(-2, -1))   # (B, Cin, H, Wr)
    top = u_ft[:, :, :m1, :m2].reshape(B, Cin, m1 * m2)          # low +row freqs
    bot = u_ft[:, :, H - m1:, :m2].reshape(B, Cin, m1 * m2)      # low -row freqs
    x = jnp.concatenate([top, bot], axis=-1)                     # (B, Cin, M)
    xr = jnp.real(x)
    xi = jnp.imag(x)
    if Mp > M:
        pad = ((0, 0), (0, 0), (0, Mp - M))
        xr = jnp.pad(xr, pad)
        xi = jnp.pad(xi, pad)

    yr, yi = spectral_mix_pallas(xr, xi, wr, wi)                 # (B, Cout, Mp)
    y = yr[..., :M] + 1j * yi[..., :M]                           # (B, Cout, M)
    y_top = y[..., :m1 * m2].reshape(B, Cout, m1, m2)
    y_bot = y[..., m1 * m2:].reshape(B, Cout, m1, m2)

    # Assemble out_ft with pad/concat (no zeros + scatter).
    col_pad = jnp.zeros((B, Cout, m1, Wr - m2), dtype=y.dtype)
    top_full = jnp.concatenate([y_top, col_pad], axis=-1)
    bot_full = jnp.concatenate([y_bot, col_pad], axis=-1)
    mid = jnp.zeros((B, Cout, H - 2 * m1, Wr), dtype=y.dtype)
    out_ft = jnp.concatenate([top_full, mid, bot_full], axis=2)  # (B, Cout, H, Wr)
    return jnp.fft.irfft2(out_ft, s=(H, W), axes=(-2, -1)).astype(jnp.float32)


# ----------------------------------------------------------------------------
# SpatialExtension forward: SpectralConv -> GELU -> SpectralConv
# ----------------------------------------------------------------------------
def spatial_extension_forward(u, packed_params, modes):
    m1, m2 = modes
    h = spectral_conv_2d_pallas(u, *packed_params["conv1"], m1, m2)
    h = gelu_pallas(h)
    return spectral_conv_2d_pallas(h, *packed_params["conv2"], m1, m2)


# ----------------------------------------------------------------------------
# Pure-JAX reference (standard FNO formulation on unpacked weights)
# ----------------------------------------------------------------------------
def spectral_conv_2d_ref(u, w1_re, w1_im, w2_re, w2_im, m1, m2):
    B, Cin, H, W = u.shape
    Cout = w1_re.shape[1]
    Wr = W // 2 + 1
    u_ft = jnp.fft.rfft2(u.astype(jnp.float32), axes=(-2, -1))
    w1 = w1_re + 1j * w1_im
    w2 = w2_re + 1j * w2_im
    out_ft = jnp.zeros((B, Cout, H, Wr), dtype=u_ft.dtype)
    out_ft = out_ft.at[:, :, :m1, :m2].set(
        jnp.einsum("bixy,ioxy->boxy", u_ft[:, :, :m1, :m2], w1))
    out_ft = out_ft.at[:, :, H - m1:, :m2].set(
        jnp.einsum("bixy,ioxy->boxy", u_ft[:, :, H - m1:, :m2], w2))
    return jnp.fft.irfft2(out_ft, s=(H, W), axes=(-2, -1)).astype(jnp.float32)


def spatial_extension_ref(u, raw_params, modes):
    m1, m2 = modes
    h = spectral_conv_2d_ref(u, *raw_params["conv1"], m1, m2)
    h = jax.nn.gelu(h, approximate=False)
    return spectral_conv_2d_ref(h, *raw_params["conv2"], m1, m2)


if __name__ == "__main__":
    B, in_ch, hidden_ch = 2, 4, 32
    H = W = 16
    modes = (8, 5)                       # m1 <= H//2, m2 <= W//2 + 1
    m1, m2 = modes
    m_total = 2 * m1 * m2                # 80 retained modes
    m_pad = ((m_total + 127) // 128) * 128   # 128 (lane-dense mode axis)

    key = jax.random.PRNGKey(0)
    k_u, k_w1, k_w2 = jax.random.split(key, 3)
    u = jax.random.normal(k_u, (B, in_ch, H, W), dtype=jnp.float32)

    raw_params = {
        "conv1": init_spectral_weights(k_w1, in_ch, hidden_ch, m1, m2),
        "conv2": init_spectral_weights(k_w2, hidden_ch, in_ch, m1, m2),
    }
    # Pack weights into the kernel layout once, outside the forward pass.
    packed_params = {
        name: pack_spectral_weights(*ws, m_pad) for name, ws in raw_params.items()
    }

    fwd = jax.jit(functools.partial(spatial_extension_forward, modes=modes))
    out = jax.block_until_ready(fwd(u, packed_params))
    assert out.shape == u.shape and out.dtype == jnp.float32

    # Validate the Pallas path against the pure-JAX reference.
    ref = jax.block_until_ready(spatial_extension_ref(u, raw_params, modes))
    assert jnp.allclose(out, ref, rtol=1e-4, atol=1e-4), "Pallas output mismatch"

    print("KERNEL_OK")
</pallas_src>

<mosaic_0001>
module attributes {stable_mosaic.version = 11 : i64} {
  func.func @_mix_kernel(%arg0: i32, %arg1: memref<2x4x128xf32, #tpu.memory_space<vmem>>, %arg2: memref<2x4x128xf32, #tpu.memory_space<vmem>>, %arg3: memref<4x32x128xf32, #tpu.memory_space<vmem>>, %arg4: memref<4x32x128xf32, #tpu.memory_space<vmem>>, %arg5: memref<2x32x128xf32, #tpu.memory_space<vmem>>, %arg6: memref<2x32x128xf32, #tpu.memory_space<vmem>>) attributes {dimension_semantics = [#tpu.dimension_semantics<parallel>], iteration_bounds = array<i64: 1>, scalar_prefetch = 0 : i64, scratch_operands = 0 : i64, tpu.core_type = #tpu.core_type<tc>, window_params = [{transform_indices = @transform_0, window_bounds = array<i64: 2, 4, 128>}, {transform_indices = @transform_1, window_bounds = array<i64: 2, 4, 128>}, {transform_indices = @transform_2, window_bounds = array<i64: 4, 32, 128>}, {transform_indices = @transform_3, window_bounds = array<i64: 4, 32, 128>}, {transform_indices = @transform_4, window_bounds = array<i64: 2, 32, 128>}, {transform_indices = @transform_5, window_bounds = array<i64: 2, 32, 128>}]} {
    %c0 = arith.constant 0 : index
    %c0_0 = arith.constant 0 : index
    %c0_1 = arith.constant 0 : index
    %0 = vector.load %arg1[%c0, %c0_0, %c0_1] : memref<2x4x128xf32, #tpu.memory_space<vmem>>, vector<2x1x128xf32>
    %c0_2 = arith.constant 0 : index
    %c0_3 = arith.constant 0 : index
    %c0_4 = arith.constant 0 : index
    %1 = vector.load %arg2[%c0_2, %c0_3, %c0_4] : memref<2x4x128xf32, #tpu.memory_space<vmem>>, vector<2x1x128xf32>
    %c0_5 = arith.constant 0 : index
    %c0_6 = arith.constant 0 : index
    %c0_7 = arith.constant 0 : index
    %2 = vector.load %arg3[%c0_5, %c0_6, %c0_7] : memref<4x32x128xf32, #tpu.memory_space<vmem>>, vector<1x32x128xf32>
    %3 = vector.shape_cast %2 : vector<1x32x128xf32> to vector<32x128xf32>
    %c0_8 = arith.constant 0 : index
    %c0_9 = arith.constant 0 : index
    %c0_10 = arith.constant 0 : index
    %4 = vector.load %arg4[%c0_8, %c0_9, %c0_10] : memref<4x32x128xf32, #tpu.memory_space<vmem>>, vector<1x32x128xf32>
    %5 = vector.shape_cast %4 : vector<1x32x128xf32> to vector<32x128xf32>
    %6 = vector.shape_cast %3 : vector<32x128xf32> to vector<1x32x128xf32>
    %7 = vector.broadcast %0 : vector<2x1x128xf32> to vector<2x32x128xf32>
    %8 = vector.broadcast %6 : vector<1x32x128xf32> to vector<2x32x128xf32>
    %9 = arith.mulf %7, %8 : vector<2x32x128xf32>
    %10 = vector.shape_cast %5 : vector<32x128xf32> to vector<1x32x128xf32>
    %11 = vector.broadcast %1 : vector<2x1x128xf32> to vector<2x32x128xf32>
    %12 = vector.broadcast %10 : vector<1x32x128xf32> to vector<2x32x128xf32>
    %13 = arith.mulf %11, %12 : vector<2x32x128xf32>
    %14 = arith.addf %0, %1 : vector<2x1x128xf32>
    %15 = arith.addf %3, %5 : vector<32x128xf32>
    %16 = vector.shape_cast %15 : vector<32x128xf32> to vector<1x32x128xf32>
    %17 = vector.broadcast %14 : vector<2x1x128xf32> to vector<2x32x128xf32>
    %18 = vector.broadcast %16 : vector<1x32x128xf32> to vector<2x32x128xf32>
    %19 = arith.mulf %17, %18 : vector<2x32x128xf32>
    %20 = arith.subf %9, %13 : vector<2x32x128xf32>
    %21 = arith.subf %19, %9 : vector<2x32x128xf32>
    %22 = arith.subf %21, %13 : vector<2x32x128xf32>
    %c0_11 = arith.constant 0 : index
    %c1 = arith.constant 1 : index
    %c0_12 = arith.constant 0 : index
    %23 = vector.load %arg1[%c0_11, %c1, %c0_12] : memref<2x4x128xf32, #tpu.memory_space<vmem>>, vector<2x1x128xf32>
    %c0_13 = arith.constant 0 : index
    %c1_14 = arith.constant 1 : index
    %c0_15 = arith.constant 0 : index
    %24 = vector.load %arg2[%c0_13, %c1_14, %c0_15] : memref<2x4x128xf32, #tpu.memory_space<vmem>>, vector<2x1x128xf32>
    %c1_16 = arith.constant 1 : index
    %c0_17 = arith.constant 0 : index
    %c0_18 = arith.constant 0 : index
    %25 = vector.load %arg3[%c1_16, %c0_17, %c0_18] : memref<4x32x128xf32, #tpu.memory_space<vmem>>, vector<1x32x128xf32>
    %26 = vector.shape_cast %25 : vector<1x32x128xf32> to vector<32x128xf32>
    %c1_19 = arith.constant 1 : index
    %c0_20 = arith.constant 0 : index
    %c0_21 = arith.constant 0 : index
    %27 = vector.load %arg4[%c1_19, %c0_20, %c0_21] : memref<4x32x128xf32, #tpu.memory_space<vmem>>, vector<1x32x128xf32>
    %28 = vector.shape_cast %27 : vector<1x32x128xf32> to vector<32x128xf32>
    %29 = vector.shape_cast %26 : vector<32x128xf32> to vector<1x32x128xf32>
    %30 = vector.broadcast %23 : vector<2x1x128xf32> to vector<2x32x128xf32>
    %31 = vector.broadcast %29 : vector<1x32x128xf32> to vector<2x32x128xf32>
    %32 = arith.mulf %30, %31 : vector<2x32x128xf32>
    %33 = vector.shape_cast %28 : vector<32x128xf32> to vector<1x32x128xf32>
    %34 = vector.broadcast %24 : vector<2x1x128xf32> to vector<2x32x128xf32>
    %35 = vector.broadcast %33 : vector<1x32x128xf32> to vector<2x32x128xf32>
    %36 = arith.mulf %34, %35 : vector<2x32x128xf32>
    %37 = arith.addf %23, %24 : vector<2x1x128xf32>
    %38 = arith.addf %26, %28 : vector<32x128xf32>
    %39 = vector.shape_cast %38 : vector<32x128xf32> to vector<1x32x128xf32>
    %40 = vector.broadcast %37 : vector<2x1x128xf32> to vector<2x32x128xf32>
    %41 = vector.broadcast %39 : vector<1x32x128xf32> to vector<2x32x128xf32>
    %42 = arith.mulf %40, %41 : vector<2x32x128xf32>
    %43 = arith.subf %32, %36 : vector<2x32x128xf32>
    %44 = arith.subf %42, %32 : vector<2x32x128xf32>
    %45 = arith.subf %44, %36 : vector<2x32x128xf32>
    %46 = arith.addf %20, %43 : vector<2x32x128xf32>
    %47 = arith.addf %22, %45 : vector<2x32x128xf32>
    %c0_22 = arith.constant 0 : index
    %c2 = arith.constant 2 : index
    %c0_23 = arith.constant 0 : index
    %48 = vector.load %arg1[%c0_22, %c2, %c0_23] : memref<2x4x128xf32, #tpu.memory_space<vmem>>, vector<2x1x128xf32>
    %c0_24 = arith.constant 0 : index
    %c2_25 = arith.constant 2 : index
    %c0_26 = arith.constant 0 : index
    %49 = vector.load %arg2[%c0_24, %c2_25, %c0_26] : memref<2x4x128xf32, #tpu.memory_space<vmem>>, vector<2x1x128xf32>
    %c2_27 = arith.constant 2 : index
    %c0_28 = arith.constant 0 : index
    %c0_29 = arith.constant 0 : index
    %50 = vector.load %arg3[%c2_27, %c0_28, %c0_29] : memref<4x32x128xf32, #tpu.memory_space<vmem>>, vector<1x32x128xf32>
    %51 = vector.shape_cast %50 : vector<1x32x128xf32> to vector<32x128xf32>
    %c2_30 = arith.constant 2 : index
    %c0_31 = arith.constant 0 : index
    %c0_32 = arith.constant 0 : index
    %52 = vector.load %arg4[%c2_30, %c0_31, %c0_32] : memref<4x32x128xf32, #tpu.memory_space<vmem>>, vector<1x32x128xf32>
    %53 = vector.shape_cast %52 : vector<1x32x128xf32> to vector<32x128xf32>
    %54 = vector.shape_cast %51 : vector<32x128xf32> to vector<1x32x128xf32>
    %55 = vector.broadcast %48 : vector<2x1x128xf32> to vector<2x32x128xf32>
    %56 = vector.broadcast %54 : vector<1x32x128xf32> to vector<2x32x128xf32>
    %57 = arith.mulf %55, %56 : vector<2x32x128xf32>
    %58 = vector.shape_cast %53 : vector<32x128xf32> to vector<1x32x128xf32>
    %59 = vector.broadcast %49 : vector<2x1x128xf32> to vector<2x32x128xf32>
    %60 = vector.broadcast %58 : vector<1x32x128xf32> to vector<2x32x128xf32>
    %61 = arith.mulf %59, %60 : vector<2x32x128xf32>
    %62 = arith.addf %48, %49 : vector<2x1x128xf32>
    %63 = arith.addf %51, %53 : vector<32x128xf32>
    %64 = vector.shape_cast %63 : vector<32x128xf32> to vector<1x32x128xf32>
    %65 = vector.broadcast %62 : vector<2x1x128xf32> to vector<2x32x128xf32>
    %66 = vector.broadcast %64 : vector<1x32x128xf32> to vector<2x32x128xf32>
    %67 = arith.mulf %65, %66 : vector<2x32x128xf32>
    %68 = arith.subf %57, %61 : vector<2x32x128xf32>
    %69 = arith.subf %67, %57 : vector<2x32x128xf32>
    %70 = arith.subf %69, %61 : vector<2x32x128xf32>
    %71 = arith.addf %46, %68 : vector<2x32x128xf32>
    %72 = arith.addf %47, %70 : vector<2x32x128xf32>
    %c0_33 = arith.constant 0 : index
    %c3 = arith.constant 3 : index
    %c0_34 = arith.constant 0 : index
    %73 = vector.load %arg1[%c0_33, %c3, %c0_34] : memref<2x4x128xf32, #tpu.memory_space<vmem>>, vector<2x1x128xf32>
    %c0_35 = arith.constant 0 : index
    %c3_36 = arith.constant 3 : index
    %c0_37 = arith.constant 0 : index
    %74 = vector.load %arg2[%c0_35, %c3_36, %c0_37] : memref<2x4x128xf32, #tpu.memory_space<vmem>>, vector<2x1x128xf32>
    %c3_38 = arith.constant 3 : index
    %c0_39 = arith.constant 0 : index
    %c0_40 = arith.constant 0 : index
    %75 = vector.load %arg3[%c3_38, %c0_39, %c0_40] : memref<4x32x128xf32, #tpu.memory_space<vmem>>, vector<1x32x128xf32>
    %76 = vector.shape_cast %75 : vector<1x32x128xf32> to vector<32x128xf32>
    %c3_41 = arith.constant 3 : index
    %c0_42 = arith.constant 0 : index
    %c0_43 = arith.constant 0 : index
    %77 = vector.load %arg4[%c3_41, %c0_42, %c0_43] : memref<4x32x128xf32, #tpu.memory_space<vmem>>, vector<1x32x128xf32>
    %78 = vector.shape_cast %77 : vector<1x32x128xf32> to vector<32x128xf32>
    %79 = vector.shape_cast %76 : vector<32x128xf32> to vector<1x32x128xf32>
    %80 = vector.broadcast %73 : vector<2x1x128xf32> to vector<2x32x128xf32>
    %81 = vector.broadcast %79 : vector<1x32x128xf32> to vector<2x32x128xf32>
    %82 = arith.mulf %80, %81 : vector<2x32x128xf32>
    %83 = vector.shape_cast %78 : vector<32x128xf32> to vector<1x32x128xf32>
    %84 = vector.broadcast %74 : vector<2x1x128xf32> to vector<2x32x128xf32>
    %85 = vector.broadcast %83 : vector<1x32x128xf32> to vector<2x32x128xf32>
    %86 = arith.mulf %84, %85 : vector<2x32x128xf32>
    %87 = arith.addf %73, %74 : vector<2x1x128xf32>
    %88 = arith.addf %76, %78 : vector<32x128xf32>
    %89 = vector.shape_cast %88 : vector<32x128xf32> to vector<1x32x128xf32>
    %90 = vector.broadcast %87 : vector<2x1x128xf32> to vector<2x32x128xf32>
    %91 = vector.broadcast %89 : vector<1x32x128xf32> to vector<2x32x128xf32>
    %92 = arith.mulf %90, %91 : vector<2x32x128xf32>
    %93 = arith.subf %82, %86 : vector<2x32x128xf32>
    %94 = arith.subf %92, %82 : vector<2x32x128xf32>
    %95 = arith.subf %94, %86 : vector<2x32x128xf32>
    %96 = arith.addf %71, %93 : vector<2x32x128xf32>
    %97 = arith.addf %72, %95 : vector<2x32x128xf32>
    %c0_44 = arith.constant 0 : index
    %c0_45 = arith.constant 0 : index
    %c0_46 = arith.constant 0 : index
    %98 = vector.load %arg5[%c0_44, %c0_45, %c0_46] : memref<2x32x128xf32, #tpu.memory_space<vmem>>, vector<2x32x128xf32>
    tpu.vector_store %arg5[%c0_44, %c0_45, %c0_46], %96 {strides = array<i32>} : memref<2x32x128xf32, #tpu.memory_space<vmem>>, vector<2x32x128xf32>,
    %c0_47 = arith.constant 0 : index
    %c0_48 = arith.constant 0 : index
    %c0_49 = arith.constant 0 : index
    %99 = vector.load %arg6[%c0_47, %c0_48, %c0_49] : memref<2x32x128xf32, #tpu.memory_space<vmem>>, vector<2x32x128xf32>
    tpu.vector_store %arg6[%c0_47, %c0_48, %c0_49], %97 {strides = array<i32>} : memref<2x32x128xf32, #tpu.memory_space<vmem>>, vector<2x32x128xf32>,
    return
  }
  func.func @transform_0(%arg0: i32) -> (i32, i32, i32) {
    %c0_i32 = arith.constant 0 : i32
    %c0_i32_0 = arith.constant 0 : i32
    %c0_i32_1 = arith.constant 0 : i32
    return %c0_i32, %c0_i32_0, %arg0 : i32, i32, i32
  }
  func.func @transform_1(%arg0: i32) -> (i32, i32, i32) {
    %c0_i32 = arith.constant 0 : i32
    %c0_i32_0 = arith.constant 0 : i32
    %c0_i32_1 = arith.constant 0 : i32
    return %c0_i32, %c0_i32_0, %arg0 : i32, i32, i32
  }
  func.func @transform_2(%arg0: i32) -> (i32, i32, i32) {
    %c0_i32 = arith.constant 0 : i32
    %c0_i32_0 = arith.constant 0 : i32
    %c0_i32_1 = arith.constant 0 : i32
    return %c0_i32, %c0_i32_0, %arg0 : i32, i32, i32
  }
  func.func @transform_3(%arg0: i32) -> (i32, i32, i32) {
    %c0_i32 = arith.constant 0 : i32
    %c0_i32_0 = arith.constant 0 : i32
    %c0_i32_1 = arith.constant 0 : i32
    return %c0_i32, %c0_i32_0, %arg0 : i32, i32, i32
  }
  func.func @transform_4(%arg0: i32) -> (i32, i32, i32) {
    %c0_i32 = arith.constant 0 : i32
    %c0_i32_0 = arith.constant 0 : i32
    %c0_i32_1 = arith.constant 0 : i32
    return %c0_i32, %c0_i32_0, %arg0 : i32, i32, i32
  }
  func.func @transform_5(%arg0: i32) -> (i32, i32, i32) {
    %c0_i32 = arith.constant 0 : i32
    %c0_i32_0 = arith.constant 0 : i32
    %c0_i32_1 = arith.constant 0 : i32
    return %c0_i32, %c0_i32_0, %arg0 : i32, i32, i32
  }
}

module attributes {stable_mosaic.version = 11 : i64} {
  func.func @_gelu_kernel(%arg0: i32, %arg1: memref<64x256xf32, #tpu.memory_space<vmem>>, %arg2: memref<64x256xf32, #tpu.memory_space<vmem>>) attributes {dimension_semantics = [#tpu.dimension_semantics<parallel>], iteration_bounds = array<i64: 1>, scalar_prefetch = 0 : i64, scratch_operands = 0 : i64, tpu.core_type = #tpu.core_type<tc>, window_params = [{transform_indices = @transform_0, window_bounds = array<i64: 64, 256>}, {transform_indices = @transform_1, window_bounds = array<i64: 64, 256>}]} {
    %c0 = arith.constant 0 : index
    %c0_0 = arith.constant 0 : index
    %0 = vector.load %arg1[%c0, %c0_0] : memref<64x256xf32, #tpu.memory_space<vmem>>, vector<64x256xf32>
    %cst = arith.constant 5.000000e-01 : f32
    %1 = vector.broadcast %cst : f32 to vector<64x256xf32>
    %2 = arith.mulf %1, %0 : vector<64x256xf32>
    %cst_1 = arith.constant 0.707106769 : f32
    %3 = vector.broadcast %cst_1 : f32 to vector<64x256xf32>
    %4 = arith.mulf %0, %3 : vector<64x256xf32>
    %5 = math.erf %4 : vector<64x256xf32>
    %cst_2 = arith.constant 1.000000e+00 : f32
    %6 = vector.broadcast %cst_2 : f32 to vector<64x256xf32>
    %7 = arith.addf %6, %5 : vector<64x256xf32>
    %8 = arith.mulf %2, %7 : vector<64x256xf32>
    %c0_3 = arith.constant 0 : index
    %c0_4 = arith.constant 0 : index
    %9 = vector.load %arg2[%c0_3, %c0_4] : memref<64x256xf32, #tpu.memory_space<vmem>>, vector<64x256xf32>
    tpu.vector_store %arg2[%c0_3, %c0_4], %8 {strides = array<i32>} : memref<64x256xf32, #tpu.memory_space<vmem>>, vector<64x256xf32>,
    return
  }
  func.func @transform_0(%arg0: i32) -> (i32, i32) {
    %c0_i32 = arith.constant 0 : i32
    %c0_i32_0 = arith.constant 0 : i32
    return %arg0, %c0_i32 : i32, i32
  }
  func.func @transform_1(%arg0: i32) -> (i32, i32) {
    %c0_i32 = arith.constant 0 : i32
    %c0_i32_0 = arith.constant 0 : i32
    return %arg0, %c0_i32 : i32, i32
  }
}

module attributes {stable_mosaic.version = 11 : i64} {
  func.func @_mix_kernel(%arg0: i32, %arg1: memref<2x32x128xf32, #tpu.memory_space<vmem>>, %arg2: memref<2x32x128xf32, #tpu.memory_space<vmem>>, %arg3: memref<32x4x128xf32, #tpu.memory_space<vmem>>, %arg4: memref<32x4x128xf32, #tpu.memory_space<vmem>>, %arg5: memref<2x4x128xf32, #tpu.memory_space<vmem>>, %arg6: memref<2x4x128xf32, #tpu.memory_space<vmem>>) attributes {dimension_semantics = [#tpu.dimension_semantics<parallel>], iteration_bounds = array<i64: 1>, scalar_prefetch = 0 : i64, scratch_operands = 0 : i64, tpu.core_type = #tpu.core_type<tc>, window_params = [{transform_indices = @transform_0, window_bounds = array<i64: 2, 32, 128>}, {transform_indices = @transform_1, window_bounds = array<i64: 2, 32, 128>}, {transform_indices = @transform_2, window_bounds = array<i64: 32, 4, 128>}, {transform_indices = @transform_3, window_bounds = array<i64: 32, 4, 128>}, {transform_indices = @transform_4, window_bounds = array<i64: 2, 4, 128>}, {transform_indices = @transform_5, window_bounds = array<i64: 2, 4, 128>}]} {
    %c0 = arith.constant 0 : index
    %c0_0 = arith.constant 0 : index
    %c0_1 = arith.constant 0 : index
    %0 = vector.load %arg1[%c0, %c0_0, %c0_1] : memref<2x32x128xf32, #tpu.memory_space<vmem>>, vector<2x1x128xf32>
    %c0_2 = arith.constant 0 : index
    %c0_3 = arith.constant 0 : index
    %c0_4 = arith.constant 0 : index
    %1 = vector.load %arg2[%c0_2, %c0_3, %c0_4] : memref<2x32x128xf32, #tpu.memory_space<vmem>>, vector<2x1x128xf32>
    %c0_5 = arith.constant 0 : index
    %c0_6 = arith.constant 0 : index
    %c0_7 = arith.constant 0 : index
    %2 = vector.load %arg3[%c0_5, %c0_6, %c0_7] : memref<32x4x128xf32, #tpu.memory_space<vmem>>, vector<1x4x128xf32>
    %3 = vector.shape_cast %2 : vector<1x4x128xf32> to vector<4x128xf32>
    %c0_8 = arith.constant 0 : index
    %c0_9 = arith.constant 0 : index
    %c0_10 = arith.constant 0 : index
    %4 = vector.load %arg4[%c0_8, %c0_9, %c0_10] : memref<32x4x128xf32, #tpu.memory_space<vmem>>, vector<1x4x128xf32>
    %5 = vector.shape_cast %4 : vector<1x4x128xf32> to vector<4x128xf32>
    %6 = vector.shape_cast %3 : vector<4x128xf32> to vector<1x4x128xf32>
    %7 = vector.broadcast %0 : vector<2x1x128xf32> to vector<2x4x128xf32>
    %8 = vector.broadcast %6 : vector<1x4x128xf32> to vector<2x4x128xf32>
    %9 = arith.mulf %7, %8 : vector<2x4x128xf32>
    %10 = vector.shape_cast %5 : vector<4x128xf32> to vector<1x4x128xf32>
    %11 = vector.broadcast %1 : vector<2x1x128xf32> to vector<2x4x128xf32>
    %12 = vector.broadcast %10 : vector<1x4x128xf32> to vector<2x4x128xf32>
    %13 = arith.mulf %11, %12 : vector<2x4x128xf32>
    %14 = arith.addf %0, %1 : vector<2x1x128xf32>
    %15 = arith.addf %3, %5 : vector<4x128xf32>
    %16 = vector.shape_cast %15 : vector<4x128xf32> to vector<1x4x128xf32>
    %17 = vector.broadcast %14 : vector<2x1x128xf32> to vector<2x4x128xf32>
    %18 = vector.broadcast %16 : vector<1x4x128xf32> to vector<2x4x128xf32>
    %19 = arith.mulf %17, %18 : vector<2x4x128xf32>
    %20 = arith.subf %9, %13 : vector<2x4x128xf32>
    %21 = arith.subf %19, %9 : vector<2x4x128xf32>
    %22 = arith.subf %21, %13 : vector<2x4x128xf32>
    %c0_11 = arith.constant 0 : index
    %c1 = arith.constant 1 : index
    %c0_12 = arith.constant 0 : index
    %23 = vector.load %arg1[%c0_11, %c1, %c0_12] : memref<2x32x128xf32, #tpu.memory_space<vmem>>, vector<2x1x128xf32>
    %c0_13 = arith.constant 0 : index
    %c1_14 = arith.constant 1 : index
    %c0_15 = arith.constant 0 : index
    %24 = vector.load %arg2[%c0_13, %c1_14, %c0_15] : memref<2x32x128xf32, #tpu.memory_space<vmem>>, vector<2x1x128xf32>
    %c1_16 = arith.constant 1 : index
    %c0_17 = arith.constant 0 : index
    %c0_18 = arith.constant 0 : index
    %25 = vector.load %arg3[%c1_16, %c0_17, %c0_18] : memref<32x4x128xf32, #tpu.memory_space<vmem>>, vector<1x4x128xf32>
    %26 = vector.shape_cast %25 : vector<1x4x128xf32> to vector<4x128xf32>
    %c1_19 = arith.constant 1 : index
    %c0_20 = arith.constant 0 : index
    %c0_21 = arith.constant 0 : index
    %27 = vector.load %arg4[%c1_19, %c0_20, %c0_21] : memref<32x4x128xf32, #tpu.memory_space<vmem>>, vector<1x4x128xf32>
    %28 = vector.shape_cast %27 : vector<1x4x128xf32> to vector<4x128xf32>
    %29 = vector.shape_cast %26 : vector<4x128xf32> to vector<1x4x128xf32>
    %30 = vector.broadcast %23 : vector<2x1x128xf32> to vector<2x4x128xf32>
    %31 = vector.broadcast %29 : vector<1x4x128xf32> to vector<2x4x128xf32>
    %32 = arith.mulf %30, %31 : vector<2x4x128xf32>
    %33 = vector.shape_cast %28 : vector<4x128xf32> to vector<1x4x128xf32>
    %34 = vector.broadcast %24 : vector<2x1x128xf32> to vector<2x4x128xf32>
    %35 = vector.broadcast %33 : vector<1x4x128xf32> to vector<2x4x128xf32>
    %36 = arith.mulf %34, %35 : vector<2x4x128xf32>
    %37 = arith.addf %23, %24 : vector<2x1x128xf32>
    %38 = arith.addf %26, %28 : vector<4x128xf32>
    %39 = vector.shape_cast %38 : vector<4x128xf32> to vector<1x4x128xf32>
    %40 = vector.broadcast %37 : vector<2x1x128xf32> to vector<2x4x128xf32>
    %41 = vector.broadcast %39 : vector<1x4x128xf32> to vector<2x4x128xf32>
    %42 = arith.mulf %40, %41 : vector<2x4x128xf32>
    %43 = arith.subf %32, %36 : vector<2x4x128xf32>
    %44 = arith.subf %42, %32 : vector<2x4x128xf32>
    %45 = arith.subf %44, %36 : vector<2x4x128xf32>
    %46 = arith.addf %20, %43 : vector<2x4x128xf32>
    %47 = arith.addf %22, %45 : vector<2x4x128xf32>
    %c0_22 = arith.constant 0 : index
    %c2 = arith.constant 2 : index
    %c0_23 = arith.constant 0 : index
    %48 = vector.load %arg1[%c0_22, %c2, %c0_23] : memref<2x32x128xf32, #tpu.memory_space<vmem>>, vector<2x1x128xf32>
    %c0_24 = arith.constant 0 : index
    %c2_25 = arith.constant 2 : index
    %c0_26 = arith.constant 0 : index
    %49 = vector.load %arg2[%c0_24, %c2_25, %c0_26] : memref<2x32x128xf32, #tpu.memory_space<vmem>>, vector<2x1x128xf32>
    %c2_27 = arith.constant 2 : index
    %c0_28 = arith.constant 0 : index
    %c0_29 = arith.constant 0 : index
    %50 = vector.load %arg3[%c2_27, %c0_28, %c0_29] : memref<32x4x128xf32, #tpu.memory_space<vmem>>, vector<1x4x128xf32>
    %51 = vector.shape_cast %50 : vector<1x4x128xf32> to vector<4x128xf32>
    %c2_30 = arith.constant 2 : index
    %c0_31 = arith.constant 0 : index
    %c0_32 = arith.constant 0 : index
    %52 = vector.load %arg4[%c2_30, %c0_31, %c0_32] : memref<32x4x128xf32, #tpu.memory_space<vmem>>, vector<1x4x128xf32>
    %53 = vector.shape_cast %52 : vector<1x4x128xf32> to vector<4x128xf32>
    %54 = vector.shape_cast %51 : vector<4x128xf32> to vector<1x4x128xf32>
    %55 = vector.broadcast %48 : vector<2x1x128xf32> to vector<2x4x128xf32>
    %56 = vector.broadcast %54 : vector<1x4x128xf32> to vector<2x4x128xf32>
    %57 = arith.mulf %55, %56 : vector<2x4x128xf32>
    %58 = vector.shape_cast %53 : vector<4x128xf32> to vector<1x4x128xf32>
    %59 = vector.broadcast %49 : vector<2x1x128xf32> to vector<2x4x128xf32>
    %60 = vector.broadcast %58 : vector<1x4x128xf32> to vector<2x4x128xf32>
    %61 = arith.mulf %59, %60 : vector<2x4x128xf32>
    %62 = arith.addf %48, %49 : vector<2x1x128xf32>
    %63 = arith.addf %51, %53 : vector<4x128xf32>
    %64 = vector.shape_cast %63 : vector<4x128xf32> to vector<1x4x128xf32>
    %65 = vector.broadcast %62 : vector<2x1x128xf32> to vector<2x4x128xf32>
    %66 = vector.broadcast %64 : vector<1x4x128xf32> to vector<2x4x128xf32>
    %67 = arith.mulf %65, %66 : vector<2x4x128xf32>
    %68 = arith.subf %57, %61 : vector<2x4x128xf32>
    %69 = arith.subf %67, %57 : vector<2x4x128xf32>
    %70 = arith.subf %69, %61 : vector<2x4x128xf32>
    %71 = arith.addf %46, %68 : vector<2x4x128xf32>
    %72 = arith.addf %47, %70 : vector<2x4x128xf32>
    %c0_33 = arith.constant 0 : index
    %c3 = arith.constant 3 : index
    %c0_34 = arith.constant 0 : index
    %73 = vector.load %arg1[%c0_33, %c3, %c0_34] : memref<2x32x128xf32, #tpu.memory_space<vmem>>, vector<2x1x128xf32>
    %c0_35 = arith.constant 0 : index
    %c3_36 = arith.constant 3 : index
    %c0_37 = arith.constant 0 : index
    %74 = vector.load %arg2[%c0_35, %c3_36, %c0_37] : memref<2x32x128xf32, #tpu.memory_space<vmem>>, vector<2x1x128xf32>
    %c3_38 = arith.constant 3 : index
    %c0_39 = arith.constant 0 : index
    %c0_40 = arith.constant 0 : index
    %75 = vector.load %arg3[%c3_38, %c0_39, %c0_40] : memref<32x4x128xf32, #tpu.memory_space<vmem>>, vector<1x4x128xf32>
    %76 = vector.shape_cast %75 : vector<1x4x128xf32> to vector<4x128xf32>
    %c3_41 = arith.constant 3 : index
    %c0_42 = arith.constant 0 : index
    %c0_43 = arith.constant 0 : index
    %77 = vector.load %arg4[%c3_41, %c0_42, %c0_43] : memref<32x4x128xf32, #tpu.memory_space<vmem>>, vector<1x4x128xf32>
    %78 = vector.shape_cast %77 : vector<1x4x128xf32> to vector<4x128xf32>
    %79 = vector.shape_cast %76 : vector<4x128xf32> to vector<1x4x128xf32>
    %80 = vector.broadcast %73 : vector<2x1x128xf32> to vector<2x4x128xf32>
    %81 = vector.broadcast %79 : vector<1x4x128xf32> to vector<2x4x128xf32>
    %82 = arith.mulf %80, %81 : vector<2x4x128xf32>
    %83 = vector.shape_cast %78 : vector<4x128xf32> to vector<1x4x128xf32>
    %84 = vector.broadcast %74 : vector<2x1x128xf32> to vector<2x4x128xf32>
    %85 = vector.broadcast %83 : vector<1x4x128xf32> to vector<2x4x128xf32>
    %86 = arith.mulf %84, %85 : vector<2x4x128xf32>
    %87 = arith.addf %73, %74 : vector<2x1x128xf32>
    %88 = arith.addf %76, %78 : vector<4x128xf32>
    %89 = vector.shape_cast %88 : vector<4x128xf32> to vector<1x4x128xf32>
    %90 = vector.broadcast %87 : vector<2x1x128xf32> to vector<2x4x128xf32>
    %91 = vector.broadcast %89 : vector<1x4x128xf32> to vector<2x4x128xf32>
    %92 = arith.mulf %90, %91 : vector<2x4x128xf32>
    %93 = arith.subf %82, %86 : vector<2x4x128xf32>
    %94 = arith.subf %92, %82 : vector<2x4x128xf32>
    %95 = arith.subf %94, %86 : vector<2x4x128xf32>
    %96 = arith.addf %71, %93 : vector<2x4x128xf32>
    %97 = arith.addf %72, %95 : vector<2x4x128xf32>
    %c0_44 = arith.constant 0 : index
    %c4 = arith.constant 4 : index
    %c0_45 = arith.constant 0 : index
    %98 = vector.load %arg1[%c0_44, %c4, %c0_45] : memref<2x32x128xf32, #tpu.memory_space<vmem>>, vector<2x1x128xf32>
    %c0_46 = arith.constant 0 : index
    %c4_47 = arith.constant 4 : index
    %c0_48 = arith.constant 0 : index
    %99 = vector.load %arg2[%c0_46, %c4_47, %c0_48] : memref<2x32x128xf32, #tpu.memory_space<vmem>>, vector<2x1x128xf32>
    %c4_49 = arith.constant 4 : index
    %c0_50 = arith.constant 0 : index
    %c0_51 = arith.constant 0 : index
    %100 = vector.load %arg3[%c4_49, %c0_50, %c0_51] : memref<32x4x128xf32, #tpu.memory_space<vmem>>, vector<1x4x128xf32>
    %101 = vector.shape_cast %100 : vector<1x4x128xf32> to vector<4x128xf32>
    %c4_52 = arith.constant 4 : index
    %c0_53 = arith.constant 0 : index
    %c0_54 = arith.constant 0 : index
    %102 = vector.load %arg4[%c4_52, %c0_53, %c0_54] : memref<32x4x128xf32, #tpu.memory_space<vmem>>, vector<1x4x128xf32>
    %103 = vector.shape_cast %102 : vector<1x4x128xf32> to vector<4x128xf32>
    %104 = vector.shape_cast %101 : vector<4x128xf32> to vector<1x4x128xf32>
    %105 = vector.broadcast %98 : vector<2x1x128xf32> to vector<2x4x128xf32>
    %106 = vector.broadcast %104 : vector<1x4x128xf32> to vector<2x4x128xf32>
    %107 = arith.mulf %105, %106 : vector<2x4x128xf32>
    %108 = vector.shape_cast %103 : vector<4x128xf32> to vector<1x4x128xf32>
    %109 = vector.broadcast %99 : vector<2x1x128xf32> to vector<2x4x128xf32>
    %110 = vector.broadcast %108 : vector<1x4x128xf32> to vector<2x4x128xf32>
    %111 = arith.mulf %109, %110 : vector<2x4x128xf32>
    %112 = arith.addf %98, %99 : vector<2x1x128xf32>
    %113 = arith.addf %101, %103 : vector<4x128xf32>
    %114 = vector.shape_cast %113 : vector<4x128xf32> to vector<1x4x128xf32>
    %115 = vector.broadcast %112 : vector<2x1x128xf32> to vector<2x4x128xf32>
    %116 = vector.broadcast %114 : vector<1x4x128xf32> to vector<2x4x128xf32>
    %117 = arith.mulf %115, %116 : vector<2x4x128xf32>
    %118 = arith.subf %107, %111 : vector<2x4x128xf32>
    %119 = arith.subf %117, %107 : vector<2x4x128xf32>
    %120 = arith.subf %119, %111 : vector<2x4x128xf32>
    %121 = arith.addf %96, %118 : vector<2x4x128xf32>
    %122 = arith.addf %97, %120 : vector<2x4x128xf32>
    %c0_55 = arith.constant 0 : index
    %c5 = arith.constant 5 : index
    %c0_56 = arith.constant 0 : index
    %123 = vector.load %arg1[%c0_55, %c5, %c0_56] : memref<2x32x128xf32, #tpu.memory_space<vmem>>, vector<2x1x128xf32>
    %c0_57 = arith.constant 0 : index
    %c5_58 = arith.constant 5 : index
    %c0_59 = arith.constant 0 : index
    %124 = vector.load %arg2[%c0_57, %c5_58, %c0_59] : memref<2x32x128xf32, #tpu.memory_space<vmem>>, vector<2x1x128xf32>
    %c5_60 = arith.constant 5 : index
    %c0_61 = arith.constant 0 : index
    %c0_62 = arith.constant 0 : index
    %125 = vector.load %arg3[%c5_60, %c0_61, %c0_62] : memref<32x4x128xf32, #tpu.memory_space<vmem>>, vector<1x4x128xf32>
    %126 = vector.shape_cast %125 : vector<1x4x128xf32> to vector<4x128xf32>
    %c5_63 = arith.constant 5 : index
    %c0_64 = arith.constant 0 : index
    %c0_65 = arith.constant 0 : index
    %127 = vector.load %arg4[%c5_63, %c0_64, %c0_65] : memref<32x4x128xf32, #tpu.memory_space<vmem>>, vector<1x4x128xf32>
    %128 = vector.shape_cast %127 : vector<1x4x128xf32> to vector<4x128xf32>
    %129 = vector.shape_cast %126 : vector<4x128xf32> to vector<1x4x128xf32>
    %130 = vector.broadcast %123 : vector<2x1x128xf32> to vector<2x4x128xf32>
    %131 = vector.broadcast %129 : vector<1x4x128xf32> to vector<2x4x128xf32>
    %132 = arith.mulf %130, %131 : vector<2x4x128xf32>
    %133 = vector.shape_cast %128 : vector<4x128xf32> to vector<1x4x128xf32>
    %134 = vector.broadcast %124 : vector<2x1x128xf32> to vector<2x4x128xf32>
    %135 = vector.broadcast %133 : vector<1x4x128xf32> to vector<2x4x128xf32>
    %136 = arith.mulf %134, %135 : vector<2x4x128xf32>
    %137 = arith.addf %123, %124 : vector<2x1x128xf32>
    %138 = arith.addf %126, %128 : vector<4x128xf32>
    %139 = vector.shape_cast %138 : vector<4x128xf32> to vector<1x4x128xf32>
    %140 = vector.broadcast %137 : vector<2x1x128xf32> to vector<2x4x128xf32>
    %141 = vector.broadcast %139 : vector<1x4x128xf32> to vector<2x4x128xf32>
    %142 = arith.mulf %140, %141 : vector<2x4x128xf32>
    %143 = arith.subf %132, %136 : vector<2x4x128xf32>
    %144 = arith.subf %142, %132 : vector<2x4x128xf32>
    %145 = arith.subf %144, %136 : vector<2x4x128xf32>
    %146 = arith.addf %121, %143 : vector<2x4x128xf32>
    %147 = arith.addf %122, %145 : vector<2x4x128xf32>
    %c0_66 = arith.constant 0 : index
    %c6 = arith.constant 6 : index
    %c0_67 = arith.constant 0 : index
    %148 = vector.load %arg1[%c0_66, %c6, %c0_67] : memref<2x32x128xf32, #tpu.memory_space<vmem>>, vector<2x1x128xf32>
    %c0_68 = arith.constant 0 : index
    %c6_69 = arith.constant 6 : index
    %c0_70 = arith.constant 0 : index
    %149 = vector.load %arg2[%c0_68, %c6_69, %c0_70] : memref<2x32x128xf32, #tpu.memory_space<vmem>>, vector<2x1x128xf32>
    %c6_71 = arith.constant 6 : index
    %c0_72 = arith.constant 0 : index
    %c0_73 = arith.constant 0 : index
    %150 = vector.load %arg3[%c6_71, %c0_72, %c0_73] : memref<32x4x128xf32, #tpu.memory_space<vmem>>, vector<1x4x128xf32>
    %151 = vector.shape_cast %150 : vector<1x4x128xf32> to vector<4x128xf32>
    %c6_74 = arith.constant 6 : index
    %c0_75 = arith.constant 0 : index
    %c0_76 = arith.constant 0 : index
    %152 = vector.load %arg4[%c6_74, %c0_75, %c0_76] : memref<32x4x128xf32, #tpu.memory_space<vmem>>, vector<1x4x128xf32>
    %153 = vector.shape_cast %152 : vector<1x4x128xf32> to vector<4x128xf32>
    %154 = vector.shape_cast %151 : vector<4x128xf32> to vector<1x4x128xf32>
    %155 = vector.broadcast %148 : vector<2x1x128xf32> to vector<2x4x128xf32>
    %156 = vector.broadcast %154 : vector<1x4x128xf32> to vector<2x4x128xf32>
    %157 = arith.mulf %155, %156 : vector<2x4x128xf32>
    %158 = vector.shape_cast %153 : vector<4x128xf32> to vector<1x4x128xf32>
    %159 = vector.broadcast %149 : vector<2x1x128xf32> to vector<2x4x128xf32>
    %160 = vector.broadcast %158 : vector<1x4x128xf32> to vector<2x4x128xf32>
    %161 = arith.mulf %159, %160 : vector<2x4x128xf32>
    %162 = arith.addf %148, %149 : vector<2x1x128xf32>
    %163 = arith.addf %151, %153 : vector<4x128xf32>
    %164 = vector.shape_cast %163 : vector<4x128xf32> to vector<1x4x128xf32>
    %165 = vector.broadcast %162 : vector<2x1x128xf32> to vector<2x4x128xf32>
    %166 = vector.broadcast %164 : vector<1x4x128xf32> to vector<2x4x128xf32>
    %167 = arith.mulf %165, %166 : vector<2x4x128xf32>
    %168 = arith.subf %157, %161 : vector<2x4x128xf32>
    %169 = arith.subf %167, %157 : vector<2x4x128xf32>
    %170 = arith.subf %169, %161 : vector<2x4x128xf32>
    %171 = arith.addf %146, %168 : vector<2x4x128xf32>
    %172 = arith.addf %147, %170 : vector<2x4x128xf32>
    %c0_77 = arith.constant 0 : index
    %c7 = arith.constant 7 : index
    %c0_78 = arith.constant 0 : index
    %173 = vector.load %arg1[%c0_77, %c7, %c0_78] : memref<2x32x128xf32, #tpu.memory_space<vmem>>, vector<2x1x128xf32>
    %c0_79 = arith.constant 0 : index
    %c7_80 = arith.constant 7 : index
    %c0_81 = arith.constant 0 : index
    %174 = vector.load %arg2[%c0_79, %c7_80, %c0_81] : memref<2x32x128xf32, #tpu.memory_space<vmem>>, vector<2x1x128xf32>
    %c7_82 = arith.constant 7 : index
    %c0_83 = arith.constant 0 : index
    %c0_84 = arith.constant 0 : index
    %175 = vector.load %arg3[%c7_82, %c0_83, %c0_84] : memref<32x4x128xf32, #tpu.memory_space<vmem>>, vector<1x4x128xf32>
    %176 = vector.shape_cast %175 : vector<1x4x128xf32> to vector<4x128xf32>
    %c7_85 = arith.constant 7 : index
    %c0_86 = arith.constant 0 : index
    %c0_87 = arith.constant 0 : index
    %177 = vector.load %arg4[%c7_85, %c0_86, %c0_87] : memref<32x4x128xf32, #tpu.memory_space<vmem>>, vector<1x4x128xf32>
    %178 = vector.shape_cast %177 : vector<1x4x128xf32> to vector<4x128xf32>
    %179 = vector.shape_cast %176 : vector<4x128xf32> to vector<1x4x128xf32>
    %180 = vector.broadcast %173 : vector<2x1x128xf32> to vector<2x4x128xf32>
    %181 = vector.broadcast %179 : vector<1x4x128xf32> to vector<2x4x128xf32>
    %182 = arith.mulf %180, %181 : vector<2x4x128xf32>
    %183 = vector.shape_cast %178 : vector<4x128xf32> to vector<1x4x128xf32>
    %184 = vector.broadcast %174 : vector<2x1x128xf32> to vector<2x4x128xf32>
    %185 = vector.broadcast %183 : vector<1x4x128xf32> to vector<2x4x128xf32>
    %186 = arith.mulf %184, %185 : vector<2x4x128xf32>
    %187 = arith.addf %173, %174 : vector<2x1x128xf32>
    %188 = arith.addf %176, %178 : vector<4x128xf32>
    %189 = vector.shape_cast %188 : vector<4x128xf32> to vector<1x4x128xf32>
    %190 = vector.broadcast %187 : vector<2x1x128xf32> to vector<2x4x128xf32>
    %191 = vector.broadcast %189 : vector<1x4x128xf32> to vector<2x4x128xf32>
    %192 = arith.mulf %190, %191 : vector<2x4x128xf32>
    %193 = arith.subf %182, %186 : vector<2x4x128xf32>
    %194 = arith.subf %192, %182 : vector<2x4x128xf32>
    %195 = arith.subf %194, %186 : vector<2x4x128xf32>
    %196 = arith.addf %171, %193 : vector<2x4x128xf32>
    %197 = arith.addf %172, %195 : vector<2x4x128xf32>
    %c0_88 = arith.constant 0 : index
    %c8 = arith.constant 8 : index
    %c0_89 = arith.constant 0 : index
    %198 = vector.load %arg1[%c0_88, %c8, %c0_89] : memref<2x32x128xf32, #tpu.memory_space<vmem>>, vector<2x1x128xf32>
    %c0_90 = arith.constant 0 : index
    %c8_91 = arith.constant 8 : index
    %c0_92 = arith.constant 0 : index
    %199 = vector.load %arg2[%c0_90, %c8_91, %c0_92] : memref<2x32x128xf32, #tpu.memory_space<vmem>>, vector<2x1x128xf32>
    %c8_93 = arith.constant 8 : index
    %c0_94 = arith.constant 0 : index
    %c0_95 = arith.constant 0 : index
    %200 = vector.load %arg3[%c8_93, %c0_94, %c0_95] : memref<32x4x128xf32, #tpu.memory_space<vmem>>, vector<1x4x128xf32>
    %201 = vector.shape_cast %200 : vector<1x4x128xf32> to vector<4x128xf32>
    %c8_96 = arith.constant 8 : index
    %c0_97 = arith.constant 0 : index
    %c0_98 = arith.constant 0 : index
    %202 = vector.load %arg4[%c8_96, %c0_97, %c0_98] : memref<32x4x128xf32, #tpu.memory_space<vmem>>, vector<1x4x128xf32>
    %203 = vector.shape_cast %202 : vector<1x4x128xf32> to vector<4x128xf32>
    %204 = vector.shape_cast %201 : vector<4x128xf32> to vector<1x4x128xf32>
    %205 = vector.broadcast %198 : vector<2x1x128xf32> to vector<2x4x128xf32>
    %206 = vector.broadcast %204 : vector<1x4x128xf32> to vector<2x4x128xf32>
    %207 = arith.mulf %205, %206 : vector<2x4x128xf32>
    %208 = vector.shape_cast %203 : vector<4x128xf32> to vector<1x4x128xf32>
    %209 = vector.broadcast %199 : vector<2x1x128xf32> to vector<2x4x128xf32>
    %210 = vector.broadcast %208 : vector<1x4x128xf32> to vector<2x4x128xf32>
    %211 = arith.mulf %209, %210 : vector<2x4x128xf32>
    %212 = arith.addf %198, %199 : vector<2x1x128xf32>
    %213 = arith.addf %201, %203 : vector<4x128xf32>
    %214 = vector.shape_cast %213 : vector<4x128xf32> to vector<1x4x128xf32>
    %215 = vector.broadcast %212 : vector<2x1x128xf32> to vector<2x4x128xf32>
    %216 = vector.broadcast %214 : vector<1x4x128xf32> to vector<2x4x128xf32>
    %217 = arith.mulf %215, %216 : vector<2x4x128xf32>
    %218 = arith.subf %207, %211 : vector<2x4x128xf32>
    %219 = arith.subf %217, %207 : vector<2x4x128xf32>
    %220 = arith.subf %219, %211 : vector<2x4x128xf32>
    %221 = arith.addf %196, %218 : vector<2x4x128xf32>
    %222 = arith.addf %197, %220 : vector<2x4x128xf32>
    %c0_99 = arith.constant 0 : index
    %c9 = arith.constant 9 : index
    %c0_100 = arith.constant 0 : index
    %223 = vector.load %arg1[%c0_99, %c9, %c0_100] : memref<2x32x128xf32, #tpu.memory_space<vmem>>, vector<2x1x128xf32>
    %c0_101 = arith.constant 0 : index
    %c9_102 = arith.constant 9 : index
    %c0_103 = arith.constant 0 : index
    %224 = vector.load %arg2[%c0_101, %c9_102, %c0_103] : memref<2x32x128xf32, #tpu.memory_space<vmem>>, vector<2x1x128xf32>
    %c9_104 = arith.constant 9 : index
    %c0_105 = arith.constant 0 : index
    %c0_106 = arith.constant 0 : index
    %225 = vector.load %arg3[%c9_104, %c0_105, %c0_106] : memref<32x4x128xf32, #tpu.memory_space<vmem>>, vector<1x4x128xf32>
    %226 = vector.shape_cast %225 : vector<1x4x128xf32> to vector<4x128xf32>
    %c9_107 = arith.constant 9 : index
    %c0_108 = arith.constant 0 : index
    %c0_109 = arith.constant 0 : index
    %227 = vector.load %arg4[%c9_107, %c0_108, %c0_109] : memref<32x4x128xf32, #tpu.memory_space<vmem>>, vector<1x4x128xf32>
    %228 = vector.shape_cast %227 : vector<1x4x128xf32> to vector<4x128xf32>
    %229 = vector.shape_cast %226 : vector<4x128xf32> to vector<1x4x128xf32>
    %230 = vector.broadcast %223 : vector<2x1x128xf32> to vector<2x4x128xf32>
    %231 = vector.broadcast %229 : vector<1x4x128xf32> to vector<2x4x128xf32>
    %232 = arith.mulf %230, %231 : vector<2x4x128xf32>
    %233 = vector.shape_cast %228 : vector<4x128xf32> to vector<1x4x128xf32>
    %234 = vector.broadcast %224 : vector<2x1x128xf32> to vector<2x4x128xf32>
    %235 = vector.broadcast %233 : vector<1x4x128xf32> to vector<2x4x128xf32>
    %236 = arith.mulf %234, %235 : vector<2x4x128xf32>
    %237 = arith.addf %223, %224 : vector<2x1x128xf32>
    %238 = arith.addf %226, %228 : vector<4x128xf32>
    %239 = vector.shape_cast %238 : vector<4x128xf32> to vector<1x4x128xf32>
    %240 = vector.broadcast %237 : vector<2x1x128xf32> to vector<2x4x128xf32>
    %241 = vector.broadcast %239 : vector<1x4x128xf32> to vector<2x4x128xf32>
    %242 = arith.mulf %240, %241 : vector<2x4x128xf32>
    %243 = arith.subf %232, %236 : vector<2x4x128xf32>
    %244 = arith.subf %242, %232 : vector<2x4x128xf32>
    %245 = arith.subf %244, %236 : vector<2x4x128xf32>
    %246 = arith.addf %221, %243 : vector<2x4x128xf32>
    %247 = arith.addf %222, %245 : vector<2x4x128xf32>
    %c0_110 = arith.constant 0 : index
    %c10 = arith.constant 10 : index
    %c0_111 = arith.constant 0 : index
    %248 = vector.load %arg1[%c0_110, %c10, %c0_111] : memref<2x32x128xf32, #tpu.memory_space<vmem>>, vector<2x1x128xf32>
    %c0_112 = arith.constant 0 : index
    %c10_113 = arith.constant 10 : index
    %c0_114 = arith.constant 0 : index
    %249 = vector.load %arg2[%c0_112, %c10_113, %c0_114] : memref<2x32x128xf32, #tpu.memory_space<vmem>>, vector<2x1x128xf32>
    %c10_115 = arith.constant 10 : index
    %c0_116 = arith.constant 0 : index
    %c0_117 = arith.constant 0 : index
    %250 = vector.load %arg3[%c10_115, %c0_116, %c0_117] : memref<32x4x128xf32, #tpu.memory_space<vmem>>, vector<1x4x128xf32>
    %251 = vector.shape_cast %250 : vector<1x4x128xf32> to vector<4x128xf32>
    %c10_118 = arith.constant 10 : index
    %c0_119 = arith.constant 0 : index
    %c0_120 = arith.constant 0 : index
    %252 = vector.load %arg4[%c10_118, %c0_119, %c0_120] : memref<32x4x128xf32, #tpu.memory_space<vmem>>, vector<1x4x128xf32>
    %253 = vector.shape_cast %252 : vector<1x4x128xf32> to vector<4x128xf32>
    %254 = vector.shape_cast %251 : vector<4x128xf32> to vector<1x4x128xf32>
    %255 = vector.broadcast %248 : vector<2x1x128xf32> to vector<2x4x128xf32>
    %256 = vector.broadcast %254 : vector<1x4x128xf32> to vector<2x4x128xf32>
    %257 = arith.mulf %255, %256 : vector<2x4x128xf32>
    %258 = vector.shape_cast %253 : vector<4x128xf32> to vector<1x4x128xf32>
    %259 = vector.broadcast %249 : vector<2x1x128xf32> to vector<2x4x128xf32>
    %260 = vector.broadcast %258 : vector<1x4x128xf32> to vector<2x4x128xf32>
    %261 = arith.mulf %259, %260 : vector<2x4x128xf32>
    %262 = arith.addf %248, %249 : vector<2x1x128xf32>
    %263 = arith.addf %251, %253 : vector<4x128xf32>
    %264 = vector.shape_cast %263 : vector<4x128xf32> to vector<1x4x128xf32>
    %265 = vector.broadcast %262 : vector<2x1x128xf32> to vector<2x4x128xf32>
    %266 = vector.broadcast %264 : vector<1x4x128xf32> to vector<2x4x128xf32>
    %267 = arith.mulf %265, %266 : vector<2x4x128xf32>
    %268 = arith.subf %257, %261 : vector<2x4x128xf32>
    %269 = arith.subf %267, %257 : vector<2x4x128xf32>
    %270 = arith.subf %269, %261 : vector<2x4x128xf32>
    %271 = arith.addf %246, %268 : vector<2x4x128xf32>
    %272 = arith.addf %247, %270 : vector<2x4x128xf32>
    %c0_121 = arith.constant 0 : index
    %c11 = arith.constant 11 : index
    %c0_122 = arith.constant 0 : index
    %273 = vector.load %arg1[%c0_121, %c11, %c0_122] : memref<2x32x128xf32, #tpu.memory_space<vmem>>, vector<2x1x128xf32>
    %c0_123 = arith.constant 0 : index
    %c11_124 = arith.constant 11 : index
    %c0_125 = arith.constant 0 : index
    %274 = vector.load %arg2[%c0_123, %c11_124, %c0_125] : memref<2x32x128xf32, #tpu.memory_space<vmem>>, vector<2x1x128xf32>
    %c11_126 = arith.constant 11 : index
    %c0_127 = arith.constant 0 : index
    %c0_128 = arith.constant 0 : index
    %275 = vector.load %arg3[%c11_126, %c0_127, %c0_128] : memref<32x4x128xf32, #tpu.memory_space<vmem>>, vector<1x4x128xf32>
    %276 = vector.shape_cast %275 : vector<1x4x128xf32> to vector<4x128xf32>
    %c11_129 = arith.constant 11 : index
    %c0_130 = arith.constant 0 : index
    %c0_131 = arith.constant 0 : index
    %277 = vector.load %arg4[%c11_129, %c0_130, %c0_131] : memref<32x4x128xf32, #tpu.memory_space<vmem>>, vector<1x4x128xf32>
    %278 = vector.shape_cast %277 : vector<1x4x128xf32> to vector<4x128xf32>
    %279 = vector.shape_cast %276 : vector<4x128xf32> to vector<1x4x128xf32>
    %280 = vector.broadcast %273 : vector<2x1x128xf32> to vector<2x4x128xf32>
    %281 = vector.broadcast %279 : vector<1x4x128xf32> to vector<2x4x128xf32>
    %282 = arith.mulf %280, %281 : vector<2x4x128xf32>
    %283 = vector.shape_cast %278 : vector<4x128xf32> to vector<1x4x128xf32>
    %284 = vector.broadcast %274 : vector<2x1x128xf32> to vector<2x4x128xf32>
    %285 = vector.broadcast %283 : vector<1x4x128xf32> to vector<2x4x128xf32>
    %286 = arith.mulf %284, %285 : vector<2x4x128xf32>
    %287 = arith.addf %273, %274 : vector<2x1x128xf32>
    %288 = arith.addf %276, %278 : vector<4x128xf32>
    %289 = vector.shape_cast %288 : vector<4x128xf32> to vector<1x4x128xf32>
    %290 = vector.broadcast %287 : vector<2x1x128xf32> to vector<2x4x128xf32>
    %291 = vector.broadcast %289 : vector<1x4x128xf32> to vector<2x4x128xf32>
    %292 = arith.mulf %290, %291 : vector<2x4x128xf32>
    %293 = arith.subf %282, %286 : vector<2x4x128xf32>
    %294 = arith.subf %292, %282 : vector<2x4x128xf32>
    %295 = arith.subf %294, %286 : vector<2x4x128xf32>
    %296 = arith.addf %271, %293 : vector<2x4x128xf32>
    %297 = arith.addf %272, %295 : vector<2x4x128xf32>
    %c0_132 = arith.constant 0 : index
    %c12 = arith.constant 12 : index
    %c0_133 = arith.constant 0 : index
    %298 = vector.load %arg1[%c0_132, %c12, %c0_133] : memref<2x32x128xf32, #tpu.memory_space<vmem>>, vector<2x1x128xf32>
    %c0_134 = arith.constant 0 : index
    %c12_135 = arith.constant 12 : index
    %c0_136 = arith.constant 0 : index
    %299 = vector.load %arg2[%c0_134, %c12_135, %c0_136] : memref<2x32x128xf32, #tpu.memory_space<vmem>>, vector<2x1x128xf32>
    %c12_137 = arith.constant 12 : index
    %c0_138 = arith.constant 0 : index
    %c0_139 = arith.constant 0 : index
    %300 = vector.load %arg3[%c12_137, %c0_138, %c0_139] : memref<32x4x128xf32, #tpu.memory_space<vmem>>, vector<1x4x128xf32>
    %301 = vector.shape_cast %300 : vector<1x4x128xf32> to vector<4x128xf32>
    %c12_140 = arith.constant 12 : index
    %c0_141 = arith.constant 0 : index
    %c0_142 = arith.constant 0 : index
    %302 = vector.load %arg4[%c12_140, %c0_141, %c0_142] : memref<32x4x128xf32, #tpu.memory_space<vmem>>, vector<1x4x128xf32>
    %303 = vector.shape_cast %302 : vector<1x4x128xf32> to vector<4x128xf32>
    %304 = vector.shape_cast %301 : vector<4x128xf32> to vector<1x4x128xf32>
    %305 = vector.broadcast %298 : vector<2x1x128xf32> to vector<2x4x128xf32>
    %306 = vector.broadcast %304 : vector<1x4x128xf32> to vector<2x4x128xf32>
    %307 = arith.mulf %305, %306 : vector<2x4x128xf32>
    %308 = vector.shape_cast %303 : vector<4x128xf32> to vector<1x4x128xf32>
    %309 = vector.broadcast %299 : vector<2x1x128xf32> to vector<2x4x128xf32>
    %310 = vector.broadcast %308 : vector<1x4x128xf32> to vector<2x4x128xf32>
    %311 = arith.mulf %309, %310 : vector<2x4x128xf32>
    %312 = arith.addf %298, %299 : vector<2x1x128xf32>
    %313 = arith.addf %301, %303 : vector<4x128xf32>
    %314 = vector.shape_cast %313 : vector<4x128xf32> to vector<1x4x128xf32>
    %315 = vector.broadcast %312 : vector<2x1x128xf32> to vector<2x4x128xf32>
    %316 = vector.broadcast %314 : vector<1x4x128xf32> to vector<2x4x128xf32>
    %317 = arith.mulf %315, %316 : vector<2x4x128xf32>
    %318 = arith.subf %307, %311 : vector<2x4x128xf32>
    %319 = arith.subf %317, %307 : vector<2x4x128xf32>
    %320 = arith.subf %319, %311 : vector<2x4x128xf32>
    %321 = arith.addf %296, %318 : vector<2x4x128xf32>
    %322 = arith.addf %297, %320 : vector<2x4x128xf32>
    %c0_143 = arith.constant 0 : index
    %c13 = arith.constant 13 : index
    %c0_144 = arith.constant 0 : index
    %323 = vector.load %arg1[%c0_143, %c13, %c0_144] : memref<2x32x128xf32, #tpu.memory_space<vmem>>, vector<2x1x128xf32>
    %c0_145 = arith.constant 0 : index
    %c13_146 = arith.constant 13 : index
    %c0_147 = arith.constant 0 : index
    %324 = vector.load %arg2[%c0_145, %c13_146, %c0_147] : memref<2x32x128xf32, #tpu.memory_space<vmem>>, vector<2x1x128xf32>
    %c13_148 = arith.constant 13 : index
    %c0_149 = arith.constant 0 : index
    %c0_150 = arith.constant 0 : index
    %325 = vector.load %arg3[%c13_148, %c0_149, %c0_150] : memref<32x4x128xf32, #tpu.memory_space<vmem>>, vector<1x4x128xf32>
    %326 = vector.shape_cast %325 : vector<1x4x128xf32> to vector<4x128xf32>
    %c13_151 = arith.constant 13 : index
    %c0_152 = arith.constant 0 : index
    %c0_153 = arith.constant 0 : index
    %327 = vector.load %arg4[%c13_151, %c0_152, %c0_153] : memref<32x4x128xf32, #tpu.memory_space<vmem>>, vector<1x4x128xf32>
    %328 = vector.shape_cast %327 : vector<1x4x128xf32> to vector<4x128xf32>
    %329 = vector.shape_cast %326 : vector<4x128xf32> to vector<1x4x128xf32>
    %330 = vector.broadcast %323 : vector<2x1x128xf32> to vector<2x4x128xf32>
    %331 = vector.broadcast %329 : vector<1x4x128xf32> to vector<2x4x128xf32>
    %332 = arith.mulf %330, %331 : vector<2x4x128xf32>
    %333 = vector.shape_cast %328 : vector<4x128xf32> to vector<1x4x128xf32>
    %334 = vector.broadcast %324 : vector<2x1x128xf32> to vector<2x4x128xf32>
    %335 = vector.broadcast %333 : vector<1x4x128xf32> to vector<2x4x128xf32>
    %336 = arith.mulf %334, %335 : vector<2x4x128xf32>
    %337 = arith.addf %323, %324 : vector<2x1x128xf32>
    %338 = arith.addf %326, %328 : vector<4x128xf32>
    %339 = vector.shape_cast %338 : vector<4x128xf32> to vector<1x4x128xf32>
    %340 = vector.broadcast %337 : vector<2x1x128xf32> to vector<2x4x128xf32>
    %341 = vector.broadcast %339 : vector<1x4x128xf32> to vector<2x4x128xf32>
    %342 = arith.mulf %340, %341 : vector<2x4x128xf32>
    %343 = arith.subf %332, %336 : vector<2x4x128xf32>
    %344 = arith.subf %342, %332 : vector<2x4x128xf32>
    %345 = arith.subf %344, %336 : vector<2x4x128xf32>
    %346 = arith.addf %321, %343 : vector<2x4x128xf32>
    %347 = arith.addf %322, %345 : vector<2x4x128xf32>
    %c0_154 = arith.constant 0 : index
    %c14 = arith.constant 14 : index
    %c0_155 = arith.constant 0 : index
    %348 = vector.load %arg1[%c0_154, %c14, %c0_155] : memref<2x32x128xf32, #tpu.memory_space<vmem>>, vector<2x1x128xf32>
    %c0_156 = arith.constant 0 : index
    %c14_157 = arith.constant 14 : index
    %c0_158 = arith.constant 0 : index
    %349 = vector.load %arg2[%c0_156, %c14_157, %c0_158] : memref<2x32x128xf32, #tpu.memory_space<vmem>>, vector<2x1x128xf32>
    %c14_159 = arith.constant 14 : index
    %c0_160 = arith.constant 0 : index
    %c0_161 = arith.constant 0 : index
    %350 = vector.load %arg3[%c14_159, %c0_160, %c0_161] : memref<32x4x128xf32, #tpu.memory_space<vmem>>, vector<1x4x128xf32>
    %351 = vector.shape_cast %350 : vector<1x4x128xf32> to vector<4x128xf32>
    %c14_162 = arith.constant 14 : index
    %c0_163 = arith.constant 0 : index
    %c0_164 = arith.constant 0 : index
    %352 = vector.load %arg4[%c14_162, %c0_163, %c0_164] : memref<32x4x128xf32, #tpu.memory_space<vmem>>, vector<1x4x128xf32>
    %353 = vector.shape_cast %352 : vector<1x4x128xf32> to vector<4x128xf32>
    %354 = vector.shape_cast %351 : vector<4x128xf32> to vector<1x4x128xf32>
    %355 = vector.broadcast %348 : vector<2x1x128xf32> to vector<2x4x128xf32>
    %356 = vector.broadcast %354 : vector<1x4x128xf32> to vector<2x4x128xf32>
    %357 = arith.mulf %355, %356 : vector<2x4x128xf32>
    %358 = vector.shape_cast %353 : vector<4x128xf32> to vector<1x4x128xf32>
    %359 = vector.broadcast %349 : vector<2x1x128xf32> to vector<2x4x128xf32>
    %360 = vector.broadcast %358 : vector<1x4x128xf32> to vector<2x4x128xf32>
    %361 = arith.mulf %359, %360 : vector<2x4x128xf32>
    %362 = arith.addf %348, %349 : vector<2x1x128xf32>
    %363 = arith.addf %351, %353 : vector<4x128xf32>
    %364 = vector.shape_cast %363 : vector<4x128xf32> to vector<1x4x128xf32>
    %365 = vector.broadcast %362 : vector<2x1x128xf32> to vector<2x4x128xf32>
    %366 = vector.broadcast %364 : vector<1x4x128xf32> to vector<2x4x128xf32>
    %367 = arith.mulf %365, %366 : vector<2x4x128xf32>
    %368 = arith.subf %357, %361 : vector<2x4x128xf32>
    %369 = arith.subf %367, %357 : vector<2x4x128xf32>
    %370 = arith.subf %369, %361 : vector<2x4x128xf32>
    %371 = arith.addf %346, %368 : vector<2x4x128xf32>
    %372 = arith.addf %347, %370 : vector<2x4x128xf32>
    %c0_165 = arith.constant 0 : index
    %c15 = arith.constant 15 : index
    %c0_166 = arith.constant 0 : index
    %373 = vector.load %arg1[%c0_165, %c15, %c0_166] : memref<2x32x128xf32, #tpu.memory_space<vmem>>, vector<2x1x128xf32>
    %c0_167 = arith.constant 0 : index
    %c15_168 = arith.constant 15 : index
    %c0_169 = arith.constant 0 : index
    %374 = vector.load %arg2[%c0_167, %c15_168, %c0_169] : memref<2x32x128xf32, #tpu.memory_space<vmem>>, vector<2x1x128xf32>
    %c15_170 = arith.constant 15 : index
    %c0_171 = arith.constant 0 : index
    %c0_172 = arith.constant 0 : index
    %375 = vector.load %arg3[%c15_170, %c0_171, %c0_172] : memref<32x4x128xf32, #tpu.memory_space<vmem>>, vector<1x4x128xf32>
    %376 = vector.shape_cast %375 : vector<1x4x128xf32> to vector<4x128xf32>
    %c15_173 = arith.constant 15 : index
    %c0_174 = arith.constant 0 : index
    %c0_175 = arith.constant 0 : index
    %377 = vector.load %arg4[%c15_173, %c0_174, %c0_175] : memref<32x4x128xf32, #tpu.memory_space<vmem>>, vector<1x4x128xf32>
    %378 = vector.shape_cast %377 : vector<1x4x128xf32> to vector<4x128xf32>
    %379 = vector.shape_cast %376 : vector<4x128xf32> to vector<1x4x128xf32>
    %380 = vector.broadcast %373 : vector<2x1x128xf32> to vector<2x4x128xf32>
    %381 = vector.broadcast %379 : vector<1x4x128xf32> to vector<2x4x128xf32>
    %382 = arith.mulf %380, %381 : vector<2x4x128xf32>
    %383 = vector.shape_cast %378 : vector<4x128xf32> to vector<1x4x128xf32>
    %384 = vector.broadcast %374 : vector<2x1x128xf32> to vector<2x4x128xf32>
    %385 = vector.broadcast %383 : vector<1x4x128xf32> to vector<2x4x128xf32>
    %386 = arith.mulf %384, %385 : vector<2x4x128xf32>
    %387 = arith.addf %373, %374 : vector<2x1x128xf32>
    %388 = arith.addf %376, %378 : vector<4x128xf32>
    %389 = vector.shape_cast %388 : vector<4x128xf32> to vector<1x4x128xf32>
    %390 = vector.broadcast %387 : vector<2x1x128xf32> to vector<2x4x128xf32>
    %391 = vector.broadcast %389 : vector<1x4x128xf32> to vector<2x4x128xf32>
    %392 = arith.mulf %390, %391 : vector<2x4x128xf32>
    %393 = arith.subf %382, %386 : vector<2x4x128xf32>
    %394 = arith.subf %392, %382 : vector<2x4x128xf32>
    %395 = arith.subf %394, %386 : vector<2x4x128xf32>
    %396 = arith.addf %371, %393 : vector<2x4x128xf32>
    %397 = arith.addf %372, %395 : vector<2x4x128xf32>
    %c0_176 = arith.constant 0 : index
    %c16 = arith.constant 16 : index
    %c0_177 = arith.constant 0 : index
    %398 = vector.load %arg1[%c0_176, %c16, %c0_177] : memref<2x32x128xf32, #tpu.memory_space<vmem>>, vector<2x1x128xf32>
    %c0_178 = arith.constant 0 : index
    %c16_179 = arith.constant 16 : index
    %c0_180 = arith.constant 0 : index
    %399 = vector.load %arg2[%c0_178, %c16_179, %c0_180] : memref<2x32x128xf32, #tpu.memory_space<vmem>>, vector<2x1x128xf32>
    %c16_181 = arith.constant 16 : index
    %c0_182 = arith.constant 0 : index
    %c0_183 = arith.constant 0 : index
    %400 = vector.load %arg3[%c16_181, %c0_182, %c0_183] : memref<32x4x128xf32, #tpu.memory_space<vmem>>, vector<1x4x128xf32>
    %401 = vector.shape_cast %400 : vector<1x4x128xf32> to vector<4x128xf32>
    %c16_184 = arith.constant 16 : index
    %c0_185 = arith.constant 0 : index
    %c0_186 = arith.constant 0 : index
    %402 = vector.load %arg4[%c16_184, %c0_185, %c0_186] : memref<32x4x128xf32, #tpu.memory_space<vmem>>, vector<1x4x128xf32>
    %403 = vector.shape_cast %402 : vector<1x4x128xf32> to vector<4x128xf32>
    %404 = vector.shape_cast %401 : vector<4x128xf32> to vector<1x4x128xf32>
    %405 = vector.broadcast %398 : vector<2x1x128xf32> to vector<2x4x128xf32>
    %406 = vector.broadcast %404 : vector<1x4x128xf32> to vector<2x4x128xf32>
    %407 = arith.mulf %405, %406 : vector<2x4x128xf32>
    %408 = vector.shape_cast %403 : vector<4x128xf32> to vector<1x4x128xf32>
    %409 = vector.broadcast %399 : vector<2x1x128xf32> to vector<2x4x128xf32>
    %410 = vector.broadcast %408 : vector<1x4x128xf32> to vector<2x4x128xf32>
    %411 = arith.mulf %409, %410 : vector<2x4x128xf32>
    %412 = arith.addf %398, %399 : vector<2x1x128xf32>
    %413 = arith.addf %401, %403 : vector<4x128xf32>
    %414 = vector.shape_cast %413 : vector<4x128xf32> to vector<1x4x128xf32>
    %415 = vector.broadcast %412 : vector<2x1x128xf32> to vector<2x4x128xf32>
    %416 = vector.broadcast %414 : vector<1x4x128xf32> to vector<2x4x128xf32>
    %417 = arith.mulf %415, %416 : vector<2x4x128xf32>
    %418 = arith.subf %407, %411 : vector<2x4x128xf32>
    %419 = arith.subf %417, %407 : vector<2x4x128xf32>
    %420 = arith.subf %419, %411 : vector<2x4x128xf32>
    %421 = arith.addf %396, %418 : vector<2x4x128xf32>
    %422 = arith.addf %397, %420 : vector<2x4x128xf32>
    %c0_187 = arith.constant 0 : index
    %c17 = arith.constant 17 : index
    %c0_188 = arith.constant 0 : index
    %423 = vector.load %arg1[%c0_187, %c17, %c0_188] : memref<2x32x128xf32, #tpu.memory_space<vmem>>, vector<2x1x128xf32>
    %c0_189 = arith.constant 0 : index
    %c17_190 = arith.constant 17 : index
    %c0_191 = arith.constant 0 : index
    %424 = vector.load %arg2[%c0_189, %c17_190, %c0_191] : memref<2x32x128xf32, #tpu.memory_space<vmem>>, vector<2x1x128xf32>
    %c17_192 = arith.constant 17 : index
    %c0_193 = arith.constant 0 : index
    %c0_194 = arith.constant 0 : index
    %425 = vector.load %arg3[%c17_192, %c0_193, %c0_194] : memref<32x4x128xf32, #tpu.memory_space<vmem>>, vector<1x4x128xf32>
    %426 = vector.shape_cast %425 : vector<1x4x128xf32> to vector<4x128xf32>
    %c17_195 = arith.constant 17 : index
    %c0_196 = arith.constant 0 : index
    %c0_197 = arith.constant 0 : index
    %427 = vector.load %arg4[%c17_195, %c0_196, %c0_197] : memref<32x4x128xf32, #tpu.memory_space<vmem>>, vector<1x4x128xf32>
    %428 = vector.shape_cast %427 : vector<1x4x128xf32> to vector<4x128xf32>
    %429 = vector.shape_cast %426 : vector<4x128xf32> to vector<1x4x128xf32>
    %430 = vector.broadcast %423 : vector<2x1x128xf32> to vector<2x4x128xf32>
    %431 = vector.broadcast %429 : vector<1x4x128xf32> to vector<2x4x128xf32>
    %432 = arith.mulf %430, %431 : vector<2x4x128xf32>
    %433 = vector.shape_cast %428 : vector<4x128xf32> to vector<1x4x128xf32>
    %434 = vector.broadcast %424 : vector<2x1x128xf32> to vector<2x4x128xf32>
    %435 = vector.broadcast %433 : vector<1x4x128xf32> to vector<2x4x128xf32>
    %436 = arith.mulf %434, %435 : vector<2x4x128xf32>
    %437 = arith.addf %423, %424 : vector<2x1x128xf32>
    %438 = arith.addf %426, %428 : vector<4x128xf32>
    %439 = vector.shape_cast %438 : vector<4x128xf32> to vector<1x4x128xf32>
    %440 = vector.broadcast %437 : vector<2x1x128xf32> to vector<2x4x128xf32>
    %441 = vector.broadcast %439 : vector<1x4x128xf32> to vector<2x4x128xf32>
    %442 = arith.mulf %440, %441 : vector<2x4x128xf32>
    %443 = arith.subf %432, %436 : vector<2x4x128xf32>
    %444 = arith.subf %442, %432 : vector<2x4x128xf32>
    %445 = arith.subf %444, %436 : vector<2x4x128xf32>
    %446 = arith.addf %421, %443 : vector<2x4x128xf32>
    %447 = arith.addf %422, %445 : vector<2x4x128xf32>
    %c0_198 = arith.constant 0 : index
    %c18 = arith.constant 18 : index
    %c0_199 = arith.constant 0 : index
    %448 = vector.load %arg1[%c0_198, %c18, %c0_199] : memref<2x32x128xf32, #tpu.memory_space<vmem>>, vector<2x1x128xf32>
    %c0_200 = arith.constant 0 : index
    %c18_201 = arith.constant 18 : index
    %c0_202 = arith.constant 0 : index
    %449 = vector.load %arg2[%c0_200, %c18_201, %c0_202] : memref<2x32x128xf32, #tpu.memory_space<vmem>>, vector<2x1x128xf32>
    %c18_203 = arith.constant 18 : index
    %c0_204 = arith.constant 0 : index
    %c0_205 = arith.constant 0 : index
    %450 = vector.load %arg3[%c18_203, %c0_204, %c0_205] : memref<32x4x128xf32, #tpu.memory_space<vmem>>, vector<1x4x128xf32>
    %451 = vector.shape_cast %450 : vector<1x4x128xf32> to vector<4x128xf32>
    %c18_206 = arith.constant 18 : index
    %c0_207 = arith.constant 0 : index
    %c0_208 = arith.constant 0 : index
    %452 = vector.load %arg4[%c18_206, %c0_207, %c0_208] : memref<32x4x128xf32, #tpu.memory_space<vmem>>, vector<1x4x128xf32>
    %453 = vector.shape_cast %452 : vector<1x4x128xf32> to vector<4x128xf32>
    %454 = vector.shape_cast %451 : vector<4x128xf32> to vector<1x4x128xf32>
    %455 = vector.broadcast %448 : vector<2x1x128xf32> to vector<2x4x128xf32>
    %456 = vector.broadcast %454 : vector<1x4x128xf32> to vector<2x4x128xf32>
    %457 = arith.mulf %455, %456 : vector<2x4x128xf32>
    %458 = vector.shape_cast %453 : vector<4x128xf32> to vector<1x4x128xf32>
    %459 = vector.broadcast %449 : vector<2x1x128xf32> to vector<2x4x128xf32>
    %460 = vector.broadcast %458 : vector<1x4x128xf32> to vector<2x4x128xf32>
    %461 = arith.mulf %459, %460 : vector<2x4x128xf32>
    %462 = arith.addf %448, %449 : vector<2x1x128xf32>
    %463 = arith.addf %451, %453 : vector<4x128xf32>
    %464 = vector.shape_cast %463 : vector<4x128xf32> to vector<1x4x128xf32>
    %465 = vector.broadcast %462 : vector<2x1x128xf32> to vector<2x4x128xf32>
    %466 = vector.broadcast %464 : vector<1x4x128xf32> to vector<2x4x128xf32>
    %467 = arith.mulf %465, %466 : vector<2x4x128xf32>
    %468 = arith.subf %457, %461 : vector<2x4x128xf32>
    %469 = arith.subf %467, %457 : vector<2x4x128xf32>
    %470 = arith.subf %469, %461 : vector<2x4x128xf32>
    %471 = arith.addf %446, %468 : vector<2x4x128xf32>
    %472 = arith.addf %447, %470 : vector<2x4x128xf32>
    %c0_209 = arith.constant 0 : index
    %c19 = arith.constant 19 : index
    %c0_210 = arith.constant 0 : index
    %473 = vector.load %arg1[%c0_209, %c19, %c0_210] : memref<2x32x128xf32, #tpu.memory_space<vmem>>, vector<2x1x128xf32>
    %c0_211 = arith.constant 0 : index
    %c19_212 = arith.constant 19 : index
    %c0_213 = arith.constant 0 : index
    %474 = vector.load %arg2[%c0_211, %c19_212, %c0_213] : memref<2x32x128xf32, #tpu.memory_space<vmem>>, vector<2x1x128xf32>
    %c19_214 = arith.constant 19 : index
    %c0_215 = arith.constant 0 : index
    %c0_216 = arith.constant 0 : index
    %475 = vector.load %arg3[%c19_214, %c0_215, %c0_216] : memref<32x4x128xf32, #tpu.memory_space<vmem>>, vector<1x4x128xf32>
    %476 = vector.shape_cast %475 : vector<1x4x128xf32> to vector<4x128xf32>
    %c19_217 = arith.constant 19 : index
    %c0_218 = arith.constant 0 : index
    %c0_219 = arith.constant 0 : index
    %477 = vector.load %arg4[%c19_217, %c0_218, %c0_219] : memref<32x4x128xf32, #tpu.memory_space<vmem>>, vector<1x4x128xf32>
    %478 = vector.shape_cast %477 : vector<1x4x128xf32> to vector<4x128xf32>
    %479 = vector.shape_cast %476 : vector<4x128xf32> to vector<1x4x128xf32>
    %480 = vector.broadcast %473 : vector<2x1x128xf32> to vector<2x4x128xf32>
    %481 = vector.broadcast %479 : vector<1x4x128xf32> to vector<2x4x128xf32>
    %482 = arith.mulf %480, %481 : vector<2x4x128xf32>
    %483 = vector.shape_cast %478 : vector<4x128xf32> to vector<1x4x128xf32>
    %484 = vector.broadcast %474 : vector<2x1x128xf32> to vector<2x4x128xf32>
    %485 = vector.broadcast %483 : vector<1x4x128xf32> to vector<2x4x128xf32>
    %486 = arith.mulf %484, %485 : vector<2x4x128xf32>
    %487 = arith.addf %473, %474 : vector<2x1x128xf32>
    %488 = arith.addf %476, %478 : vector<4x128xf32>
    %489 = vector.shape_cast %488 : vector<4x128xf32> to vector<1x4x128xf32>
    %490 = vector.broadcast %487 : vector<2x1x128xf32> to vector<2x4x128xf32>
    %491 = vector.broadcast %489 : vector<1x4x128xf32> to vector<2x4x128xf32>
    %492 = arith.mulf %490, %491 : vector<2x4x128xf32>
    %493 = arith.subf %482, %486 : vector<2x4x128xf32>
    %494 = arith.subf %492, %482 : vector<2x4x128xf32>
    %495 = arith.subf %494, %486 : vector<2x4x128xf32>
    %496 = arith.addf %471, %493 : vector<2x4x128xf32>
    %497 = arith.addf %472, %495 : vector<2x4x128xf32>
    %c0_220 = arith.constant 0 : index
    %c20 = arith.constant 20 : index
    %c0_221 = arith.constant 0 : index
    %498 = vector.load %arg1[%c0_220, %c20, %c0_221] : memref<2x32x128xf32, #tpu.memory_space<vmem>>, vector<2x1x128xf32>
    %c0_222 = arith.constant 0 : index
    %c20_223 = arith.constant 20 : index
    %c0_224 = arith.constant 0 : index
    %499 = vector.load %arg2[%c0_222, %c20_223, %c0_224] : memref<2x32x128xf32, #tpu.memory_space<vmem>>, vector<2x1x128xf32>
    %c20_225 = arith.constant 20 : index
    %c0_226 = arith.constant 0 : index
    %c0_227 = arith.constant 0 : index
    %500 = vector.load %arg3[%c20_225, %c0_226, %c0_227] : memref<32x4x128xf32, #tpu.memory_space<vmem>>, vector<1x4x128xf32>
    %501 = vector.shape_cast %500 : vector<1x4x128xf32> to vector<4x128xf32>
    %c20_228 = arith.constant 20 : index
    %c0_229 = arith.constant 0 : index
    %c0_230 = arith.constant 0 : index
    %502 = vector.load %arg4[%c20_228, %c0_229, %c0_230] : memref<32x4x128xf32, #tpu.memory_space<vmem>>, vector<1x4x128xf32>
    %503 = vector.shape_cast %502 : vector<1x4x128xf32> to vector<4x128xf32>
    %504 = vector.shape_cast %501 : vector<4x128xf32> to vector<1x4x128xf32>
    %505 = vector.broadcast %498 : vector<2x1x128xf32> to vector<2x4x128xf32>
    %506 = vector.broadcast %504 : vector<1x4x128xf32> to vector<2x4x128xf32>
    %507 = arith.mulf %505, %506 : vector<2x4x128xf32>
    %508 = vector.shape_cast %503 : vector<4x128xf32> to vector<1x4x128xf32>
    %509 = vector.broadcast %499 : vector<2x1x128xf32> to vector<2x4x128xf32>
    %510 = vector.broadcast %508 : vector<1x4x128xf32> to vector<2x4x128xf32>
    %511 = arith.mulf %509, %510 : vector<2x4x128xf32>
    %512 = arith.addf %498, %499 : vector<2x1x128xf32>
    %513 = arith.addf %501, %503 : vector<4x128xf32>
    %514 = vector.shape_cast %513 : vector<4x128xf32> to vector<1x4x128xf32>
    %515 = vector.broadcast %512 : vector<2x1x128xf32> to vector<2x4x128xf32>
    %516 = vector.broadcast %514 : vector<1x4x128xf32> to vector<2x4x128xf32>
    %517 = arith.mulf %515, %516 : vector<2x4x128xf32>
    %518 = arith.subf %507, %511 : vector<2x4x128xf32>
    %519 = arith.subf %517, %507 : vector<2x4x128xf32>
    %520 = arith.subf %519, %511 : vector<2x4x128xf32>
    %521 = arith.addf %496, %518 : vector<2x4x128xf32>
    %522 = arith.addf %497, %520 : vector<2x4x128xf32>
    %c0_231 = arith.constant 0 : index
    %c21 = arith.constant 21 : index
    %c0_232 = arith.constant 0 : index
    %523 = vector.load %arg1[%c0_231, %c21, %c0_232] : memref<2x32x128xf32, #tpu.memory_space<vmem>>, vector<2x1x128xf32>
    %c0_233 = arith.constant 0 : index
    %c21_234 = arith.constant 21 : index
    %c0_235 = arith.constant 0 : index
    %524 = vector.load %arg2[%c0_233, %c21_234, %c0_235] : memref<2x32x128xf32, #tpu.memory_space<vmem>>, vector<2x1x128xf32>
    %c21_236 = arith.constant 21 : index
    %c0_237 = arith.constant 0 : index
    %c0_238 = arith.constant 0 : index
    %525 = vector.load %arg3[%c21_236, %c0_237, %c0_238] : memref<32x4x128xf32, #tpu.memory_space<vmem>>, vector<1x4x128xf32>
    %526 = vector.shape_cast %525 : vector<1x4x128xf32> to vector<4x128xf32>
    %c21_239 = arith.constant 21 : index
    %c0_240 = arith.constant 0 : index
    %c0_241 = arith.constant 0 : index
    %527 = vector.load %arg4[%c21_239, %c0_240, %c0_241] : memref<32x4x128xf32, #tpu.memory_space<vmem>>, vector<1x4x128xf32>
    %528 = vector.shape_cast %527 : vector<1x4x128xf32> to vector<4x128xf32>
    %529 = vector.shape_cast %526 : vector<4x128xf32> to vector<1x4x128xf32>
    %530 = vector.broadcast %523 : vector<2x1x128xf32> to vector<2x4x128xf32>
    %531 = vector.broadcast %529 : vector<1x4x128xf32> to vector<2x4x128xf32>
    %532 = arith.mulf %530, %531 : vector<2x4x128xf32>
    %533 = vector.shape_cast %528 : vector<4x128xf32> to vector<1x4x128xf32>
    %534 = vector.broadcast %524 : vector<2x1x128xf32> to vector<2x4x128xf32>
    %535 = vector.broadcast %533 : vector<1x4x128xf32> to vector<2x4x128xf32>
    %536 = arith.mulf %534, %535 : vector<2x4x128xf32>
    %537 = arith.addf %523, %524 : vector<2x1x128xf32>
    %538 = arith.addf %526, %528 : vector<4x128xf32>
    %539 = vector.shape_cast %538 : vector<4x128xf32> to vector<1x4x128xf32>
    %540 = vector.broadcast %537 : vector<2x1x128xf32> to vector<2x4x128xf32>
    %541 = vector.broadcast %539 : vector<1x4x128xf32> to vector<2x4x128xf32>
    %542 = arith.mulf %540, %541 : vector<2x4x128xf32>
    %543 = arith.subf %532, %536 : vector<2x4x128xf32>
    %544 = arith.subf %542, %532 : vector<2x4x128xf32>
    %545 = arith.subf %544, %536 : vector<2x4x128xf32>
    %546 = arith.addf %521, %543 : vector<2x4x128xf32>
    %547 = arith.addf %522, %545 : vector<2x4x128xf32>
    %c0_242 = arith.constant 0 : index
    %c22 = arith.constant 22 : index
    %c0_243 = arith.constant 0 : index
    %548 = vector.load %arg1[%c0_242, %c22, %c0_243] : memref<2x32x128xf32, #tpu.memory_space<vmem>>, vector<2x1x128xf32>
    %c0_244 = arith.constant 0 : index
    %c22_245 = arith.constant 22 : index
    %c0_246 = arith.constant 0 : index
    %549 = vector.load %arg2[%c0_244, %c22_245, %c0_246] : memref<2x32x128xf32, #tpu.memory_space<vmem>>, vector<2x1x128xf32>
    %c22_247 = arith.constant 22 : index
    %c0_248 = arith.constant 0 : index
    %c0_249 = arith.constant 0 : index
    %550 = vector.load %arg3[%c22_247, %c0_248, %c0_249] : memref<32x4x128xf32, #tpu.memory_space<vmem>>, vector<1x4x128xf32>
    %551 = vector.shape_cast %550 : vector<1x4x128xf32> to vector<4x128xf32>
    %c22_250 = arith.constant 22 : index
    %c0_251 = arith.constant 0 : index
    %c0_252 = arith.constant 0 : index
    %552 = vector.load %arg4[%c22_250, %c0_251, %c0_252] : memref<32x4x128xf32, #tpu.memory_space<vmem>>, vector<1x4x128xf32>
    %553 = vector.shape_cast %552 : vector<1x4x128xf32> to vector<4x128xf32>
    %554 = vector.shape_cast %551 : vector<4x128xf32> to vector<1x4x128xf32>
    %555 = vector.broadcast %548 : vector<2x1x128xf32> to vector<2x4x128xf32>
    %556 = vector.broadcast %554 : vector<1x4x128xf32> to vector<2x4x128xf32>
    %557 = arith.mulf %555, %556 : vector<2x4x128xf32>
    %558 = vector.shape_cast %553 : vector<4x128xf32> to vector<1x4x128xf32>
    %559 = vector.broadcast %549 : vector<2x1x128xf32> to vector<2x4x128xf32>
    %560 = vector.broadcast %558 : vector<1x4x128xf32> to vector<2x4x128xf32>
    %561 = arith.mulf %559, %560 : vector<2x4x128xf32>
    %562 = arith.addf %548, %549 : vector<2x1x128xf32>
    %563 = arith.addf %551, %553 : vector<4x128xf32>
    %564 = vector.shape_cast %563 : vector<4x128xf32> to vector<1x4x128xf32>
    %565 = vector.broadcast %562 : vector<2x1x128xf32> to vector<2x4x128xf32>
    %566 = vector.broadcast %564 : vector<1x4x128xf32> to vector<2x4x128xf32>
    %567 = arith.mulf %565, %566 : vector<2x4x128xf32>
    %568 = arith.subf %557, %561 : vector<2x4x128xf32>
    %569 = arith.subf %567, %557 : vector<2x4x128xf32>
    %570 = arith.subf %569, %561 : vector<2x4x128xf32>
    %571 = arith.addf %546, %568 : vector<2x4x128xf32>
    %572 = arith.addf %547, %570 : vector<2x4x128xf32>
    %c0_253 = arith.constant 0 : index
    %c23 = arith.constant 23 : index
    %c0_254 = arith.constant 0 : index
    %573 = vector.load %arg1[%c0_253, %c23, %c0_254] : memref<2x32x128xf32, #tpu.memory_space<vmem>>, vector<2x1x128xf32>
    %c0_255 = arith.constant 0 : index
    %c23_256 = arith.constant 23 : index
    %c0_257 = arith.constant 0 : index
    %574 = vector.load %arg2[%c0_255, %c23_256, %c0_257] : memref<2x32x128xf32, #tpu.memory_space<vmem>>, vector<2x1x128xf32>
    %c23_258 = arith.constant 23 : index
    %c0_259 = arith.constant 0 : index
    %c0_260 = arith.constant 0 : index
    %575 = vector.load %arg3[%c23_258, %c0_259, %c0_260] : memref<32x4x128xf32, #tpu.memory_space<vmem>>, vector<1x4x128xf32>
    %576 = vector.shape_cast %575 : vector<1x4x128xf32> to vector<4x128xf32>
    %c23_261 = arith.constant 23 : index
    %c0_262 = arith.constant 0 : index
    %c0_263 = arith.constant 0 : index
    %577 = vector.load %arg4[%c23_261, %c0_262, %c0_263] : memref<32x4x128xf32, #tpu.memory_space<vmem>>, vector<1x4x128xf32>
    %578 = vector.shape_cast %577 : vector<1x4x128xf32> to vector<4x128xf32>
    %579 = vector.shape_cast %576 : vector<4x128xf32> to vector<1x4x128xf32>
    %580 = vector.broadcast %573 : vector<2x1x128xf32> to vector<2x4x128xf32>
    %581 = vector.broadcast %579 : vector<1x4x128xf32> to vector<2x4x128xf32>
    %582 = arith.mulf %580, %581 : vector<2x4x128xf32>
    %583 = vector.shape_cast %578 : vector<4x128xf32> to vector<1x4x128xf32>
    %584 = vector.broadcast %574 : vector<2x1x128xf32> to vector<2x4x128xf32>
    %585 = vector.broadcast %583 : vector<1x4x128xf32> to vector<2x4x128xf32>
    %586 = arith.mulf %584, %585 : vector<2x4x128xf32>
    %587 = arith.addf %573, %574 : vector<2x1x128xf32>
    %588 = arith.addf %576, %578 : vector<4x128xf32>
    %589 = vector.shape_cast %588 : vector<4x128xf32> to vector<1x4x128xf32>
    %590 = vector.broadcast %587 : vector<2x1x128xf32> to vector<2x4x128xf32>
    %591 = vector.broadcast %589 : vector<1x4x128xf32> to vector<2x4x128xf32>
    %592 = arith.mulf %590, %591 : vector<2x4x128xf32>
    %593 = arith.subf %582, %586 : vector<2x4x128xf32>
    %594 = arith.subf %592, %582 : vector<2x4x128xf32>
    %595 = arith.subf %594, %586 : vector<2x4x128xf32>
    %596 = arith.addf %571, %593 : vector<2x4x128xf32>
    %597 = arith.addf %572, %595 : vector<2x4x128xf32>
    %c0_264 = arith.constant 0 : index
    %c24 = arith.constant 24 : index
    %c0_265 = arith.constant 0 : index
    %598 = vector.load %arg1[%c0_264, %c24, %c0_265] : memref<2x32x128xf32, #tpu.memory_space<vmem>>, vector<2x1x128xf32>
    %c0_266 = arith.constant 0 : index
    %c24_267 = arith.constant 24 : index
    %c0_268 = arith.constant 0 : index
    %599 = vector.load %arg2[%c0_266, %c24_267, %c0_268] : memref<2x32x128xf32, #tpu.memory_space<vmem>>, vector<2x1x128xf32>
    %c24_269 = arith.constant 24 : index
    %c0_270 = arith.constant 0 : index
    %c0_271 = arith.constant 0 : index
    %600 = vector.load %arg3[%c24_269, %c0_270, %c0_271] : memref<32x4x128xf32, #tpu.memory_space<vmem>>, vector<1x4x128xf32>
    %601 = vector.shape_cast %600 : vector<1x4x128xf32> to vector<4x128xf32>
    %c24_272 = arith.constant 24 : index
    %c0_273 = arith.constant 0 : index
    %c0_274 = arith.constant 0 : index
    %602 = vector.load %arg4[%c24_272, %c0_273, %c0_274] : memref<32x4x128xf32, #tpu.memory_space<vmem>>, vector<1x4x128xf32>
    %603 = vector.shape_cast %602 : vector<1x4x128xf32> to vector<4x128xf32>
    %604 = vector.shape_cast %601 : vector<4x128xf32> to vector<1x4x128xf32>
    %605 = vector.broadcast %598 : vector<2x1x128xf32> to vector<2x4x128xf32>
    %606 = vector.broadcast %604 : vector<1x4x128xf32> to vector<2x4x128xf32>
    %607 = arith.mulf %605, %606 : vector<2x4x128xf32>
    %608 = vector.shape_cast %603 : vector<4x128xf32> to vector<1x4x128xf32>
    %609 = vector.broadcast %599 : vector<2x1x128xf32> to vector<2x4x128xf32>
    %610 = vector.broadcast %608 : vector<1x4x128xf32> to vector<2x4x128xf32>
    %611 = arith.mulf %609, %610 : vector<2x4x128xf32>
    %612 = arith.addf %598, %599 : vector<2x1x128xf32>
    %613 = arith.addf %601, %603 : vector<4x128xf32>
    %614 = vector.shape_cast %613 : vector<4x128xf32> to vector<1x4x128xf32>
    %615 = vector.broadcast %612 : vector<2x1x128xf32> to vector<2x4x128xf32>
    %616 = vector.broadcast %614 : vector<1x4x128xf32> to vector<2x4x128xf32>
    %617 = arith.mulf %615, %616 : vector<2x4x128xf32>
    %618 = arith.subf %607, %611 : vector<2x4x128xf32>
    %619 = arith.subf %617, %607 : vector<2x4x128xf32>
    %620 = arith.subf %619, %611 : vector<2x4x128xf32>
    %621 = arith.addf %596, %618 : vector<2x4x128xf32>
    %622 = arith.addf %597, %620 : vector<2x4x128xf32>
    %c0_275 = arith.constant 0 : index
    %c25 = arith.constant 25 : index
    %c0_276 = arith.constant 0 : index
    %623 = vector.load %arg1[%c0_275, %c25, %c0_276] : memref<2x32x128xf32, #tpu.memory_space<vmem>>, vector<2x1x128xf32>
    %c0_277 = arith.constant 0 : index
    %c25_278 = arith.constant 25 : index
    %c0_279 = arith.constant 0 : index
    %624 = vector.load %arg2[%c0_277, %c25_278, %c0_279] : memref<2x32x128xf32, #tpu.memory_space<vmem>>, vector<2x1x128xf32>
    %c25_280 = arith.constant 25 : index
    %c0_281 = arith.constant 0 : index
    %c0_282 = arith.constant 0 : index
    %625 = vector.load %arg3[%c25_280, %c0_281, %c0_282] : memref<32x4x128xf32, #tpu.memory_space<vmem>>, vector<1x4x128xf32>
    %626 = vector.shape_cast %625 : vector<1x4x128xf32> to vector<4x128xf32>
    %c25_283 = arith.constant 25 : index
    %c0_284 = arith.constant 0 : index
    %c0_285 = arith.constant 0 : index
    %627 = vector.load %arg4[%c25_283, %c0_284, %c0_285] : memref<32x4x128xf32, #tpu.memory_space<vmem>>, vector<1x4x128xf32>
    %628 = vector.shape_cast %627 : vector<1x4x128xf32> to vector<4x128xf32>
    %629 = vector.shape_cast %626 : vector<4x128xf32> to vector<1x4x128xf32>
    %630 = vector.broadcast %623 : vector<2x1x128xf32> to vector<2x4x128xf32>
    %631 = vector.broadcast %629 : vector<1x4x128xf32> to vector<2x4x128xf32>
    %632 = arith.mulf %630, %631 : vector<2x4x128xf32>
    %633 = vector.shape_cast %628 : vector<4x128xf32> to vector<1x4x128xf32>
    %634 = vector.broadcast %624 : vector<2x1x128xf32> to vector<2x4x128xf32>
    %635 = vector.broadcast %633 : vector<1x4x128xf32> to vector<2x4x128xf32>
    %636 = arith.mulf %634, %635 : vector<2x4x128xf32>
    %637 = arith.addf %623, %624 : vector<2x1x128xf32>
    %638 = arith.addf %626, %628 : vector<4x128xf32>
    %639 = vector.shape_cast %638 : vector<4x128xf32> to vector<1x4x128xf32>
    %640 = vector.broadcast %637 : vector<2x1x128xf32> to vector<2x4x128xf32>
    %641 = vector.broadcast %639 : vector<1x4x128xf32> to vector<2x4x128xf32>
    %642 = arith.mulf %640, %641 : vector<2x4x128xf32>
    %643 = arith.subf %632, %636 : vector<2x4x128xf32>
    %644 = arith.subf %642, %632 : vector<2x4x128xf32>
    %645 = arith.subf %644, %636 : vector<2x4x128xf32>
    %646 = arith.addf %621, %643 : vector<2x4x128xf32>
    %647 = arith.addf %622, %645 : vector<2x4x128xf32>
    %c0_286 = arith.constant 0 : index
    %c26 = arith.constant 26 : index
    %c0_287 = arith.constant 0 : index
    %648 = vector.load %arg1[%c0_286, %c26, %c0_287] : memref<2x32x128xf32, #tpu.memory_space<vmem>>, vector<2x1x128xf32>
    %c0_288 = arith.constant 0 : index
    %c26_289 = arith.constant 26 : index
    %c0_290 = arith.constant 0 : index
    %649 = vector.load %arg2[%c0_288, %c26_289, %c0_290] : memref<2x32x128xf32, #tpu.memory_space<vmem>>, vector<2x1x128xf32>
    %c26_291 = arith.constant 26 : index
    %c0_292 = arith.constant 0 : index
    %c0_293 = arith.constant 0 : index
    %650 = vector.load %arg3[%c26_291, %c0_292, %c0_293] : memref<32x4x128xf32, #tpu.memory_space<vmem>>, vector<1x4x128xf32>
    %651 = vector.shape_cast %650 : vector<1x4x128xf32> to vector<4x128xf32>
    %c26_294 = arith.constant 26 : index
    %c0_295 = arith.constant 0 : index
    %c0_296 = arith.constant 0 : index
    %652 = vector.load %arg4[%c26_294, %c0_295, %c0_296] : memref<32x4x128xf32, #tpu.memory_space<vmem>>, vector<1x4x128xf32>
    %653 = vector.shape_cast %652 : vector<1x4x128xf32> to vector<4x128xf32>
    %654 = vector.shape_cast %651 : vector<4x128xf32> to vector<1x4x128xf32>
    %655 = vector.broadcast %648 : vector<2x1x128xf32> to vector<2x4x128xf32>
    %656 = vector.broadcast %654 : vector<1x4x128xf32> to vector<2x4x128xf32>
    %657 = arith.mulf %655, %656 : vector<2x4x128xf32>
    %658 = vector.shape_cast %653 : vector<4x128xf32> to vector<1x4x128xf32>
    %659 = vector.broadcast %649 : vector<2x1x128xf32> to vector<2x4x128xf32>
    %660 = vector.broadcast %658 : vector<1x4x128xf32> to vector<2x4x128xf32>
    %661 = arith.mulf %659, %660 : vector<2x4x128xf32>
    %662 = arith.addf %648, %649 : vector<2x1x128xf32>
    %663 = arith.addf %651, %653 : vector<4x128xf32>
    %664 = vector.shape_cast %663 : vector<4x128xf32> to vector<1x4x128xf32>
    %665 = vector.broadcast %662 : vector<2x1x128xf32> to vector<2x4x128xf32>
    %666 = vector.broadcast %664 : vector<1x4x128xf32> to vector<2x4x128xf32>
    %667 = arith.mulf %665, %666 : vector<2x4x128xf32>
    %668 = arith.subf %657, %661 : vector<2x4x128xf32>
    %669 = arith.subf %667, %657 : vector<2x4x128xf32>
    %670 = arith.subf %669, %661 : vector<2x4x128xf32>
    %671 = arith.addf %646, %668 : vector<2x4x128xf32>
    %672 = arith.addf %647, %670 : vector<2x4x128xf32>
    %c0_297 = arith.constant 0 : index
    %c27 = arith.constant 27 : index
    %c0_298 = arith.constant 0 : index
    %673 = vector.load %arg1[%c0_297, %c27, %c0_298] : memref<2x32x128xf32, #tpu.memory_space<vmem>>, vector<2x1x128xf32>
    %c0_299 = arith.constant 0 : index
    %c27_300 = arith.constant 27 : index
    %c0_301 = arith.constant 0 : index
    %674 = vector.load %arg2[%c0_299, %c27_300, %c0_301] : memref<2x32x128xf32, #tpu.memory_space<vmem>>, vector<2x1x128xf32>
    %c27_302 = arith.constant 27 : index
    %c0_303 = arith.constant 0 : index
    %c0_304 = arith.constant 0 : index
    %675 = vector.load %arg3[%c27_302, %c0_303, %c0_304] : memref<32x4x128xf32, #tpu.memory_space<vmem>>, vector<1x4x128xf32>
    %676 = vector.shape_cast %675 : vector<1x4x128xf32> to vector<4x128xf32>
    %c27_305 = arith.constant 27 : index
    %c0_306 = arith.constant 0 : index
    %c0_307 = arith.constant 0 : index
    %677 = vector.load %arg4[%c27_305, %c0_306, %c0_307] : memref<32x4x128xf32, #tpu.memory_space<vmem>>, vector<1x4x128xf32>
    %678 = vector.shape_cast %677 : vector<1x4x128xf32> to vector<4x128xf32>
    %679 = vector.shape_cast %676 : vector<4x128xf32> to vector<1x4x128xf32>
    %680 = vector.broadcast %673 : vector<2x1x128xf32> to vector<2x4x128xf32>
    %681 = vector.broadcast %679 : vector<1x4x128xf32> to vector<2x4x128xf32>
    %682 = arith.mulf %680, %681 : vector<2x4x128xf32>
    %683 = vector.shape_cast %678 : vector<4x128xf32> to vector<1x4x128xf32>
    %684 = vector.broadcast %674 : vector<2x1x128xf32> to vector<2x4x128xf32>
    %685 = vector.broadcast %683 : vector<1x4x128xf32> to vector<2x4x128xf32>
    %686 = arith.mulf %684, %685 : vector<2x4x128xf32>
    %687 = arith.addf %673, %674 : vector<2x1x128xf32>
    %688 = arith.addf %676, %678 : vector<4x128xf32>
    %689 = vector.shape_cast %688 : vector<4x128xf32> to vector<1x4x128xf32>
    %690 = vector.broadcast %687 : vector<2x1x128xf32> to vector<2x4x128xf32>
    %691 = vector.broadcast %689 : vector<1x4x128xf32> to vector<2x4x128xf32>
    %692 = arith.mulf %690, %691 : vector<2x4x128xf32>
    %693 = arith.subf %682, %686 : vector<2x4x128xf32>
    %694 = arith.subf %692, %682 : vector<2x4x128xf32>
    %695 = arith.subf %694, %686 : vector<2x4x128xf32>
    %696 = arith.addf %671, %693 : vector<2x4x128xf32>
    %697 = arith.addf %672, %695 : vector<2x4x128xf32>
    %c0_308 = arith.constant 0 : index
    %c28 = arith.constant 28 : index
    %c0_309 = arith.constant 0 : index
    %698 = vector.load %arg1[%c0_308, %c28, %c0_309] : memref<2x32x128xf32, #tpu.memory_space<vmem>>, vector<2x1x128xf32>
    %c0_310 = arith.constant 0 : index
    %c28_311 = arith.constant 28 : index
    %c0_312 = arith.constant 0 : index
    %699 = vector.load %arg2[%c0_310, %c28_311, %c0_312] : memref<2x32x128xf32, #tpu.memory_space<vmem>>, vector<2x1x128xf32>
    %c28_313 = arith.constant 28 : index
    %c0_314 = arith.constant 0 : index
    %c0_315 = arith.constant 0 : index
    %700 = vector.load %arg3[%c28_313, %c0_314, %c0_315] : memref<32x4x128xf32, #tpu.memory_space<vmem>>, vector<1x4x128xf32>
    %701 = vector.shape_cast %700 : vector<1x4x128xf32> to vector<4x128xf32>
    %c28_316 = arith.constant 28 : index
    %c0_317 = arith.constant 0 : index
    %c0_318 = arith.constant 0 : index
    %702 = vector.load %arg4[%c28_316, %c0_317, %c0_318] : memref<32x4x128xf32, #tpu.memory_space<vmem>>, vector<1x4x128xf32>
    %703 = vector.shape_cast %702 : vector<1x4x128xf32> to vector<4x128xf32>
    %704 = vector.shape_cast %701 : vector<4x128xf32> to vector<1x4x128xf32>
    %705 = vector.broadcast %698 : vector<2x1x128xf32> to vector<2x4x128xf32>
    %706 = vector.broadcast %704 : vector<1x4x128xf32> to vector<2x4x128xf32>
    %707 = arith.mulf %705, %706 : vector<2x4x128xf32>
    %708 = vector.shape_cast %703 : vector<4x128xf32> to vector<1x4x128xf32>
    %709 = vector.broadcast %699 : vector<2x1x128xf32> to vector<2x4x128xf32>
    %710 = vector.broadcast %708 : vector<1x4x128xf32> to vector<2x4x128xf32>
    %711 = arith.mulf %709, %710 : vector<2x4x128xf32>
    %712 = arith.addf %698, %699 : vector<2x1x128xf32>
    %713 = arith.addf %701, %703 : vector<4x128xf32>
    %714 = vector.shape_cast %713 : vector<4x128xf32> to vector<1x4x128xf32>
    %715 = vector.broadcast %712 : vector<2x1x128xf32> to vector<2x4x128xf32>
    %716 = vector.broadcast %714 : vector<1x4x128xf32> to vector<2x4x128xf32>
    %717 = arith.mulf %715, %716 : vector<2x4x128xf32>
    %718 = arith.subf %707, %711 : vector<2x4x128xf32>
    %719 = arith.subf %717, %707 : vector<2x4x128xf32>
    %720 = arith.subf %719, %711 : vector<2x4x128xf32>
    %721 = arith.addf %696, %718 : vector<2x4x128xf32>
    %722 = arith.addf %697, %720 : vector<2x4x128xf32>
    %c0_319 = arith.constant 0 : index
    %c29 = arith.constant 29 : index
    %c0_320 = arith.constant 0 : index
    %723 = vector.load %arg1[%c0_319, %c29, %c0_320] : memref<2x32x128xf32, #tpu.memory_space<vmem>>, vector<2x1x128xf32>
    %c0_321 = arith.constant 0 : index
    %c29_322 = arith.constant 29 : index
    %c0_323 = arith.constant 0 : index
    %724 = vector.load %arg2[%c0_321, %c29_322, %c0_323] : memref<2x32x128xf32, #tpu.memory_space<vmem>>, vector<2x1x128xf32>
    %c29_324 = arith.constant 29 : index
    %c0_325 = arith.constant 0 : index
    %c0_326 = arith.constant 0 : index
    %725 = vector.load %arg3[%c29_324, %c0_325, %c0_326] : memref<32x4x128xf32, #tpu.memory_space<vmem>>, vector<1x4x128xf32>
    %726 = vector.shape_cast %725 : vector<1x4x128xf32> to vector<4x128xf32>
    %c29_327 = arith.constant 29 : index
    %c0_328 = arith.constant 0 : index
    %c0_329 = arith.constant 0 : index
    %727 = vector.load %arg4[%c29_327, %c0_328, %c0_329] : memref<32x4x128xf32, #tpu.memory_space<vmem>>, vector<1x4x128xf32>
    %728 = vector.shape_cast %727 : vector<1x4x128xf32> to vector<4x128xf32>
    %729 = vector.shape_cast %726 : vector<4x128xf32> to vector<1x4x128xf32>
    %730 = vector.broadcast %723 : vector<2x1x128xf32> to vector<2x4x128xf32>
    %731 = vector.broadcast %729 : vector<1x4x128xf32> to vector<2x4x128xf32>
    %732 = arith.mulf %730, %731 : vector<2x4x128xf32>
    %733 = vector.shape_cast %728 : vector<4x128xf32> to vector<1x4x128xf32>
    %734 = vector.broadcast %724 : vector<2x1x128xf32> to vector<2x4x128xf32>
    %735 = vector.broadcast %733 : vector<1x4x128xf32> to vector<2x4x128xf32>
    %736 = arith.mulf %734, %735 : vector<2x4x128xf32>
    %737 = arith.addf %723, %724 : vector<2x1x128xf32>
    %738 = arith.addf %726, %728 : vector<4x128xf32>
    %739 = vector.shape_cast %738 : vector<4x128xf32> to vector<1x4x128xf32>
    %740 = vector.broadcast %737 : vector<2x1x128xf32> to vector<2x4x128xf32>
    %741 = vector.broadcast %739 : vector<1x4x128xf32> to vector<2x4x128xf32>
    %742 = arith.mulf %740, %741 : vector<2x4x128xf32>
    %743 = arith.subf %732, %736 : vector<2x4x128xf32>
    %744 = arith.subf %742, %732 : vector<2x4x128xf32>
    %745 = arith.subf %744, %736 : vector<2x4x128xf32>
    %746 = arith.addf %721, %743 : vector<2x4x128xf32>
    %747 = arith.addf %722, %745 : vector<2x4x128xf32>
    %c0_330 = arith.constant 0 : index
    %c30 = arith.constant 30 : index
    %c0_331 = arith.constant 0 : index
    %748 = vector.load %arg1[%c0_330, %c30, %c0_331] : memref<2x32x128xf32, #tpu.memory_space<vmem>>, vector<2x1x128xf32>
    %c0_332 = arith.constant 0 : index
    %c30_333 = arith.constant 30 : index
    %c0_334 = arith.constant 0 : index
    %749 = vector.load %arg2[%c0_332, %c30_333, %c0_334] : memref<2x32x128xf32, #tpu.memory_space<vmem>>, vector<2x1x128xf32>
    %c30_335 = arith.constant 30 : index
    %c0_336 = arith.constant 0 : index
    %c0_337 = arith.constant 0 : index
    %750 = vector.load %arg3[%c30_335, %c0_336, %c0_337] : memref<32x4x128xf32, #tpu.memory_space<vmem>>, vector<1x4x128xf32>
    %751 = vector.shape_cast %750 : vector<1x4x128xf32> to vector<4x128xf32>
    %c30_338 = arith.constant 30 : index
    %c0_339 = arith.constant 0 : index
    %c0_340 = arith.constant 0 : index
    %752 = vector.load %arg4[%c30_338, %c0_339, %c0_340] : memref<32x4x128xf32, #tpu.memory_space<vmem>>, vector<1x4x128xf32>
    %753 = vector.shape_cast %752 : vector<1x4x128xf32> to vector<4x128xf32>
    %754 = vector.shape_cast %751 : vector<4x128xf32> to vector<1x4x128xf32>
    %755 = vector.broadcast %748 : vector<2x1x128xf32> to vector<2x4x128xf32>
    %756 = vector.broadcast %754 : vector<1x4x128xf32> to vector<2x4x128xf32>
    %757 = arith.mulf %755, %756 : vector<2x4x128xf32>
    %758 = vector.shape_cast %753 : vector<4x128xf32> to vector<1x4x128xf32>
    %759 = vector.broadcast %749 : vector<2x1x128xf32> to vector<2x4x128xf32>
    %760 = vector.broadcast %758 : vector<1x4x128xf32> to vector<2x4x128xf32>
    %761 = arith.mulf %759, %760 : vector<2x4x128xf32>
    %762 = arith.addf %748, %749 : vector<2x1x128xf32>
    %763 = arith.addf %751, %753 : vector<4x128xf32>
    %764 = vector.shape_cast %763 : vector<4x128xf32> to vector<1x4x128xf32>
    %765 = vector.broadcast %762 : vector<2x1x128xf32> to vector<2x4x128xf32>
    %766 = vector.broadcast %764 : vector<1x4x128xf32> to vector<2x4x128xf32>
    %767 = arith.mulf %765, %766 : vector<2x4x128xf32>
    %768 = arith.subf %757, %761 : vector<2x4x128xf32>
    %769 = arith.subf %767, %757 : vector<2x4x128xf32>
    %770 = arith.subf %769, %761 : vector<2x4x128xf32>
    %771 = arith.addf %746, %768 : vector<2x4x128xf32>
    %772 = arith.addf %747, %770 : vector<2x4x128xf32>
    %c0_341 = arith.constant 0 : index
    %c31 = arith.constant 31 : index
    %c0_342 = arith.constant 0 : index
    %773 = vector.load %arg1[%c0_341, %c31, %c0_342] : memref<2x32x128xf32, #tpu.memory_space<vmem>>, vector<2x1x128xf32>
    %c0_343 = arith.constant 0 : index
    %c31_344 = arith.constant 31 : index
    %c0_345 = arith.constant 0 : index
    %774 = vector.load %arg2[%c0_343, %c31_344, %c0_345] : memref<2x32x128xf32, #tpu.memory_space<vmem>>, vector<2x1x128xf32>
    %c31_346 = arith.constant 31 : index
    %c0_347 = arith.constant 0 : index
    %c0_348 = arith.constant 0 : index
    %775 = vector.load %arg3[%c31_346, %c0_347, %c0_348] : memref<32x4x128xf32, #tpu.memory_space<vmem>>, vector<1x4x128xf32>
    %776 = vector.shape_cast %775 : vector<1x4x128xf32> to vector<4x128xf32>
    %c31_349 = arith.constant 31 : index
    %c0_350 = arith.constant 0 : index
    %c0_351 = arith.constant 0 : index
    %777 = vector.load %arg4[%c31_349, %c0_350, %c0_351] : memref<32x4x128xf32, #tpu.memory_space<vmem>>, vector<1x4x128xf32>
    %778 = vector.shape_cast %777 : vector<1x4x128xf32> to vector<4x128xf32>
    %779 = vector.shape_cast %776 : vector<4x128xf32> to vector<1x4x128xf32>
    %780 = vector.broadcast %773 : vector<2x1x128xf32> to vector<2x4x128xf32>
    %781 = vector.broadcast %779 : vector<1x4x128xf32> to vector<2x4x128xf32>
    %782 = arith.mulf %780, %781 : vector<2x4x128xf32>
    %783 = vector.shape_cast %778 : vector<4x128xf32> to vector<1x4x128xf32>
    %784 = vector.broadcast %774 : vector<2x1x128xf32> to vector<2x4x128xf32>
    %785 = vector.broadcast %783 : vector<1x4x128xf32> to vector<2x4x128xf32>
    %786 = arith.mulf %784, %785 : vector<2x4x128xf32>
    %787 = arith.addf %773, %774 : vector<2x1x128xf32>
    %788 = arith.addf %776, %778 : vector<4x128xf32>
    %789 = vector.shape_cast %788 : vector<4x128xf32> to vector<1x4x128xf32>
    %790 = vector.broadcast %787 : vector<2x1x128xf32> to vector<2x4x128xf32>
    %791 = vector.broadcast %789 : vector<1x4x128xf32> to vector<2x4x128xf32>
    %792 = arith.mulf %790, %791 : vector<2x4x128xf32>
    %793 = arith.subf %782, %786 : vector<2x4x128xf32>
    %794 = arith.subf %792, %782 : vector<2x4x128xf32>
    %795 = arith.subf %794, %786 : vector<2x4x128xf32>
    %796 = arith.addf %771, %793 : vector<2x4x128xf32>
    %797 = arith.addf %772, %795 : vector<2x4x128xf32>
    %c0_352 = arith.constant 0 : index
    %c0_353 = arith.constant 0 : index
    %c0_354 = arith.constant 0 : index
    %798 = vector.load %arg5[%c0_352, %c0_353, %c0_354] : memref<2x4x128xf32, #tpu.memory_space<vmem>>, vector<2x4x128xf32>
    tpu.vector_store %arg5[%c0_352, %c0_353, %c0_354], %796 {strides = array<i32>} : memref<2x4x128xf32, #tpu.memory_space<vmem>>, vector<2x4x128xf32>,
    %c0_355 = arith.constant 0 : index
    %c0_356 = arith.constant 0 : index
    %c0_357 = arith.constant 0 : index
    %799 = vector.load %arg6[%c0_355, %c0_356, %c0_357] : memref<2x4x128xf32, #tpu.memory_space<vmem>>, vector<2x4x128xf32>
    tpu.vector_store %arg6[%c0_355, %c0_356, %c0_357], %797 {strides = array<i32>} : memref<2x4x128xf32, #tpu.memory_space<vmem>>, vector<2x4x128xf32>,
    return
  }
  func.func @transform_0(%arg0: i32) -> (i32, i32, i32) {
    %c0_i32 = arith.constant 0 : i32
    %c0_i32_0 = arith.constant 0 : i32
    %c0_i32_1 = arith.constant 0 : i32
    return %c0_i32, %c0_i32_0, %arg0 : i32, i32, i32
  }
  func.func @transform_1(%arg0: i32) -> (i32, i32, i32) {
    %c0_i32 = arith.constant 0 : i32
    %c0_i32_0 = arith.constant 0 : i32
    %c0_i32_1 = arith.constant 0 : i32
    return %c0_i32, %c0_i32_0, %arg0 : i32, i32, i32
  }
  func.func @transform_2(%arg0: i32) -> (i32, i32, i32) {
    %c0_i32 = arith.constant 0 : i32
    %c0_i32_0 = arith.constant 0 : i32
    %c0_i32_1 = arith.constant 0 : i32
    return %c0_i32, %c0_i32_0, %arg0 : i32, i32, i32
  }
  func.func @transform_3(%arg0: i32) -> (i32, i32, i32) {
    %c0_i32 = arith.constant 0 : i32
    %c0_i32_0 = arith.constant 0 : i32
    %c0_i32_1 = arith.constant 0 : i32
    return %c0_i32, %c0_i32_0, %arg0 : i32, i32, i32
  }
  func.func @transform_4(%arg0: i32) -> (i32, i32, i32) {
    %c0_i32 = arith.constant 0 : i32
    %c0_i32_0 = arith.constant 0 : i32
    %c0_i32_1 = arith.constant 0 : i32
    return %c0_i32, %c0_i32_0, %arg0 : i32, i32, i32
  }
  func.func @transform_5(%arg0: i32) -> (i32, i32, i32) {
    %c0_i32 = arith.constant 0 : i32
    %c0_i32_0 = arith.constant 0 : i32
    %c0_i32_1 = arith.constant 0 : i32
    return %c0_i32, %c0_i32_0, %arg0 : i32, i32, i32
  }
}

</mosaic_0001>

<llo_original>
// kernel: spatial_extension_forward.3
$region0: #{spatial_extension_forward.3}
  #allocation0 [shape = 'u32[]', space=smem, size = 0x4, offset = 0x4, fixed_abs, tag = 'smem constant byte address 0x4 - core index']
  #allocation1 [shape = 'u32[144,128]{1,0:T(1,128)}', space=vmem, size = 0x12000, scoped, tag = 'internal scratch']
  %s0 = inlined_call_operand.vmem [shape: f32[2,4,128], index: 0, kind: input, shape index: {}]
  %s1 = inlined_call_operand.vmem [shape: f32[2,4,128], index: 1, kind: input, shape index: {}]
  %s2 = inlined_call_operand.vmem [shape: f32[4,32,128], index: 2, kind: input, shape index: {}]
  %s3 = inlined_call_operand.vmem [shape: f32[4,32,128], index: 3, kind: input, shape index: {}]
  %s4 = inlined_call_operand.vmem [shape: f32[2,32,128], index: 4, kind: output, shape index: {0}]
  %s5 = inlined_call_operand.vmem [shape: f32[2,32,128], index: 5, kind: output, shape index: {1}]
  %6 = xla_tuple %s4, %s5
  %s7 = sld [smem:[#allocation0]]
  $region34: #{spatial_extension_forward.3} parent=0
    _
  %s9 = ssub.s32 1, %s7
  %s10 = scalar_select 0, %s9, %s7
  // Predicated region
  $region2: #{spatial_extension_forward.3} parent=0 // pred_check
    _
  $region3: #{spatial_extension_forward.3} parent=0 // pred_check_branch
    %12 = sbr.rel (0) target = $region5
  $region4: #{spatial_extension_forward.3} parent=0 // pred_region
    _
  $region5: #{spatial_extension_forward.3} parent=0 // pred_fallthru
    _
  // Predicated region
  $region6: #{spatial_extension_forward.3} parent=0 // pred_check
    _
  $region7: #{spatial_extension_forward.3} parent=0 // pred_check_branch
    %14 = sbr.rel (0) target = $region9
  $region8: #{spatial_extension_forward.3} parent=0 // pred_region
    _
  $region9: #{spatial_extension_forward.3} parent=0 // pred_fallthru
    _
  // Predicated region
  $region10: #{spatial_extension_forward.3} parent=0 // pred_check
    _
  $region11: #{spatial_extension_forward.3} parent=0 // pred_check_branch
    %16 = sbr.rel (0) target = $region13
  $region12: #{spatial_extension_forward.3} parent=0 // pred_region
    _
  $region13: #{spatial_extension_forward.3} parent=0 // pred_fallthru
    _
  // Predicated region
  $region14: #{spatial_extension_forward.3} parent=0 // pred_check
    _
  $region15: #{spatial_extension_forward.3} parent=0 // pred_check_branch
    %18 = sbr.rel (0) target = $region17
  $region16: #{spatial_extension_forward.3} parent=0 // pred_region
    _
  $region17: #{spatial_extension_forward.3} parent=0 // pred_fallthru
    _
  %v19 = vld [vmem:[%s0] sm:$0x1]
  %v20 = vld [vmem:[%s0 + $0x4] sm:$0x1]
  %v21 = vld [vmem:[%s1] sm:$0x1]
  %v22 = vld [vmem:[%s1 + $0x4] sm:$0x1]
  %v23 = vld [vmem:[%s2] sm:$0xff]
  %v24 = vld [vmem:[%s2 + $0x8] sm:$0xff]
  %v25 = vld [vmem:[%s2 + $0x10] sm:$0xff]
  %v26 = vld [vmem:[%s2 + $0x18] sm:$0xff]
  %v27 = vld [vmem:[%s3] sm:$0xff]
  %v28 = vld [vmem:[%s3 + $0x8] sm:$0xff]
  %v29 = vld [vmem:[%s3 + $0x10] sm:$0xff]
  %v30 = vld [vmem:[%s3 + $0x18] sm:$0xff]
  %v31 = vlaneseq
  %v32 = vshrl.u32 %v31, 7
  %v33 = vsub.s32 0, %v32
  %v34 = vrot.slane %v19, %v33
  %v35 = vlaneseq
  %v36 = vshrl.u32 %v35, 7
  %v37 = vsub.s32 0, %v36
  %v38 = vrot.slane %v20, %v37
  %v39 = vmul.f32 %v34, %v23
  %v40 = vmul.f32 %v34, %v24
  %v41 = vmul.f32 %v34, %v25
  %v42 = vmul.f32 %v34, %v26
  %v43 = vmul.f32 %v38, %v23
  %v44 = vmul.f32 %v38, %v24
  %v45 = vmul.f32 %v38, %v25
  %v46 = vmul.f32 %v38, %v26
  %v47 = vlaneseq
  %v48 = vshrl.u32 %v47, 7
  %v49 = vsub.s32 0, %v48
  %v50 = vrot.slane %v21, %v49
  %v51 = vlaneseq
  %v52 = vshrl.u32 %v51, 7
  %v53 = vsub.s32 0, %v52
  %v54 = vrot.slane %v22, %v53
  %v55 = vmul.f32 %v50, %v27
  %v56 = vmul.f32 %v50, %v28
  %v57 = vmul.f32 %v50, %v29
  %v58 = vmul.f32 %v50, %v30
  %v59 = vmul.f32 %v54, %v27
  %v60 = vmul.f32 %v54, %v28
  %v61 = vmul.f32 %v54, %v29
  %v62 = vmul.f32 %v54, %v30
  %v63 = vadd.f32 %v19, %v21
  %v64 = vadd.f32 %v20, %v22
  %v65 = vadd.f32 %v23, %v27
  %v66 = vadd.f32 %v24, %v28
  %v67 = vadd.f32 %v25, %v29
  %v68 = vadd.f32 %v26, %v30
  %v69 = vlaneseq
  %v70 = vshrl.u32 %v69, 7
  %v71 = vsub.s32 0, %v70
  %v72 = vrot.slane %v63, %v71
  %v73 = vlaneseq
  %v74 = vshrl.u32 %v73, 7
  %v75 = vsub.s32 0, %v74
  %v76 = vrot.slane %v64, %v75
  %v77 = vmul.f32 %v72, %v65
  %v78 = vmul.f32 %v72, %v66
  %v79 = vmul.f32 %v72, %v67
  %v80 = vmul.f32 %v72, %v68
  %v81 = vmul.f32 %v76, %v65
  %v82 = vmul.f32 %v76, %v66
  %v83 = vmul.f32 %v76, %v67
  %v84 = vmul.f32 %v76, %v68
  %v85 = vsub.f32 %v39, %v55
  %v86 = vsub.f32 %v40, %v56
  %v87 = vsub.f32 %v41, %v57
  %v88 = vsub.f32 %v42, %v58
  %v89 = vsub.f32 %v43, %v59
  %v90 = vsub.f32 %v44, %v60
  %v91 = vsub.f32 %v45, %v61
  %v92 = vsub.f32 %v46, %v62
  %v93 = vsub.f32 %v77, %v39
  %v94 = vsub.f32 %v78, %v40
  %v95 = vsub.f32 %v79, %v41
  %v96 = vsub.f32 %v80, %v42
  %v97 = vsub.f32 %v81, %v43
  %v98 = vsub.f32 %v82, %v44
  %v99 = vsub.f32 %v83, %v45
  %v100 = vsub.f32 %v84, %v46
  %v101 = vsub.f32 %v93, %v55
  %v102 = vsub.f32 %v94, %v56
  %v103 = vsub.f32 %v95, %v57
  %v104 = vsub.f32 %v96, %v58
  %v105 = vsub.f32 %v97, %v59
  %v106 = vsub.f32 %v98, %v60
  %v107 = vsub.f32 %v99, %v61
  %v108 = vsub.f32 %v100, %v62
  %v109 = vld [vmem:[%s0 + $0x1] sm:$0x1]
  %v110 = vld [vmem:[%s0 + $0x5] sm:$0x1]
  %v111 = vld [vmem:[%s1 + $0x1] sm:$0x1]
  %v112 = vld [vmem:[%s1 + $0x5] sm:$0x1]
  %s113 = scalar_lea.vmem %s2, 32
  %v114 = vld [vmem:[%s113] sm:$0xff]
  %v115 = vld [vmem:[%s113 + $0x8] sm:$0xff]
  %v116 = vld [vmem:[%s113 + $0x10] sm:$0xff]
  %v117 = vld [vmem:[%s113 + $0x18] sm:$0xff]
  %s118 = scalar_lea.vmem %s3, 32
  %v119 = vld [vmem:[%s118] sm:$0xff]
  %v120 = vld [vmem:[%s118 + $0x8] sm:$0xff]
  %v121 = vld [vmem:[%s118 + $0x10] sm:$0xff]
  %v122 = vld [vmem:[%s118 + $0x18] sm:$0xff]
  %v123 = vlaneseq
  %v124 = vshrl.u32 %v123, 7
  %v125 = vsub.s32 0, %v124
  %v126 = vrot.slane %v109, %v125
  %v127 = vlaneseq
  %v128 = vshrl.u32 %v127, 7
  %v129 = vsub.s32 0, %v128
  %v130 = vrot.slane %v110, %v129
  %v131 = vmul.f32 %v126, %v114
  %v132 = vmul.f32 %v126, %v115
  %v133 = vmul.f32 %v126, %v116
  %v134 = vmul.f32 %v126, %v117
  %v135 = vmul.f32 %v130, %v114
  %v136 = vmul.f32 %v130, %v115
  %v137 = vmul.f32 %v130, %v116
  %v138 = vmul.f32 %v130, %v117
  %v139 = vlaneseq
  %v140 = vshrl.u32 %v139, 7
  %v141 = vsub.s32 0, %v140
  %v142 = vrot.slane %v111, %v141
  %v143 = vlaneseq
  %v144 = vshrl.u32 %v143, 7
  %v145 = vsub.s32 0, %v144
  %v146 = vrot.slane %v112, %v145
  %v147 = vmul.f32 %v142, %v119
  %v148 = vmul.f32 %v142, %v120
  %v149 = vmul.f32 %v142, %v121
  %v150 = vmul.f32 %v142, %v122
  %v151 = vmul.f32 %v146, %v119
  %v152 = vmul.f32 %v146, %v120
  %v153 = vmul.f32 %v146, %v121
  %v154 = vmul.f32 %v146, %v122
  %v155 = vadd.f32 %v109, %v111
  %v156 = vadd.f32 %v110, %v112
  %v157 = vadd.f32 %v114, %v119
  %v158 = vadd.f32 %v115, %v120
  %v159 = vadd.f32 %v116, %v121
  %v160 = vadd.f32 %v117, %v122
  %v161 = vlaneseq
  %v162 = vshrl.u32 %v161, 7
  %v163 = vsub.s32 0, %v162
  %v164 = vrot.slane %v155, %v163
  %v165 = vlaneseq
  %v166 = vshrl.u32 %v165, 7
  %v167 = vsub.s32 0, %v166
  %v168 = vrot.slane %v156, %v167
  %v169 = vmul.f32 %v164, %v157
  %v170 = vmul.f32 %v164, %v158
  %v171 = vmul.f32 %v164, %v159
  %v172 = vmul.f32 %v164, %v160
  %v173 = vmul.f32 %v168, %v157
  %v174 = vmul.f32 %v168, %v158
  %v175 = vmul.f32 %v168, %v159
  %v176 = vmul.f32 %v168, %v160
  %v177 = vsub.f32 %v131, %v147
  %v178 = vsub.f32 %v132, %v148
  %v179 = vsub.f32 %v133, %v149
  %v180 = vsub.f32 %v134, %v150
  %v181 = vsub.f32 %v135, %v151
  %v182 = vsub.f32 %v136, %v152
  %v183 = vsub.f32 %v137, %v153
  %v184 = vsub.f32 %v138, %v154
  %v185 = vsub.f32 %v169, %v131
  %v186 = vsub.f32 %v170, %v132
  %v187 = vsub.f32 %v171, %v133
  %v188 = vsub.f32 %v172, %v134
  %v189 = vsub.f32 %v173, %v135
  %v190 = vsub.f32 %v174, %v136
  %v191 = vsub.f32 %v175, %v137
  %v192 = vsub.f32 %v176, %v138
  %v193 = vsub.f32 %v185, %v147
  %v194 = vsub.f32 %v186, %v148
  %v195 = vsub.f32 %v187, %v149
  %v196 = vsub.f32 %v188, %v150
  %v197 = vsub.f32 %v189, %v151
  %v198 = vsub.f32 %v190, %v152
  %v199 = vsub.f32 %v191, %v153
  %v200 = vsub.f32 %v192, %v154
  %v201 = vadd.f32 %v85, %v177
  %v202 = vadd.f32 %v86, %v178
  %v203 = vadd.f32 %v87, %v179
  %v204 = vadd.f32 %v88, %v180
  %v205 = vadd.f32 %v89, %v181
  %v206 = vadd.f32 %v90, %v182
  %v207 = vadd.f32 %v91, %v183
  %v208 = vadd.f32 %v92, %v184
  %v209 = vadd.f32 %v101, %v193
  %v210 = vadd.f32 %v102, %v194
  %v211 = vadd.f32 %v103, %v195
  %v212 = vadd.f32 %v104, %v196
  %v213 = vadd.f32 %v105, %v197
  %v214 = vadd.f32 %v106, %v198
  %v215 = vadd.f32 %v107, %v199
  %v216 = vadd.f32 %v108, %v200
  %v217 = vld [vmem:[%s0 + $0x2] sm:$0x1]
  %v218 = vld [vmem:[%s0 + $0x6] sm:$0x1]
  %v219 = vld [vmem:[%s1 + $0x2] sm:$0x1]
  %v220 = vld [vmem:[%s1 + $0x6] sm:$0x1]
  %s221 = scalar_lea.vmem %s2, 64
  %v222 = vld [vmem:[%s221] sm:$0xff]
  %v223 = vld [vmem:[%s221 + $0x8] sm:$0xff]
  %v224 = vld [vmem:[%s221 + $0x10] sm:$0xff]
  %v225 = vld [vmem:[%s221 + $0x18] sm:$0xff]
  %s226 = scalar_lea.vmem %s3, 64
  %v227 = vld [vmem:[%s226] sm:$0xff]
  %v228 = vld [vmem:[%s226 + $0x8] sm:$0xff]
  %v229 = vld [vmem:[%s226 + $0x10] sm:$0xff]
  %v230 = vld [vmem:[%s226 + $0x18] sm:$0xff]
  %v231 = vlaneseq
  %v232 = vshrl.u32 %v231, 7
  %v233 = vsub.s32 0, %v232
  %v234 = vrot.slane %v217, %v233
  %v235 = vlaneseq
  %v236 = vshrl.u32 %v235, 7
  %v237 = vsub.s32 0, %v236
  %v238 = vrot.slane %v218, %v237
  %v239 = vmul.f32 %v234, %v222
  %v240 = vmul.f32 %v234, %v223
  %v241 = vmul.f32 %v234, %v224
  %v242 = vmul.f32 %v234, %v225
  %v243 = vmul.f32 %v238, %v222
  %v244 = vmul.f32 %v238, %v223
  %v245 = vmul.f32 %v238, %v224
  %v246 = vmul.f32 %v238, %v225
  %v247 = vlaneseq
  %v248 = vshrl.u32 %v247, 7
  %v249 = vsub.s32 0, %v248
  %v250 = vrot.slane %v219, %v249
  %v251 = vlaneseq
  %v252 = vshrl.u32 %v251, 7
  %v253 = vsub.s32 0, %v252
  %v254 = vrot.slane %v220, %v253
  %v255 = vmul.f32 %v250, %v227
  %v256 = vmul.f32 %v250, %v228
  %v257 = vmul.f32 %v250, %v229
  %v258 = vmul.f32 %v250, %v230
  %v259 = vmul.f32 %v254, %v227
  %v260 = vmul.f32 %v254, %v228
  %v261 = vmul.f32 %v254, %v229
  %v262 = vmul.f32 %v254, %v230
  %v263 = vadd.f32 %v217, %v219
  %v264 = vadd.f32 %v218, %v220
  %v265 = vadd.f32 %v222, %v227
  %v266 = vadd.f32 %v223, %v228
  %v267 = vadd.f32 %v224, %v229
  %v268 = vadd.f32 %v225, %v230
  %v269 = vlaneseq
  %v270 = vshrl.u32 %v269, 7
  %v271 = vsub.s32 0, %v270
  %v272 = vrot.slane %v263, %v271
  %v273 = vlaneseq
  %v274 = vshrl.u32 %v273, 7
  %v275 = vsub.s32 0, %v274
  %v276 = vrot.slane %v264, %v275
  %v277 = vmul.f32 %v272, %v265
  %v278 = vmul.f32 %v272, %v266
  %v279 = vmul.f32 %v272, %v267
  %v280 = vmul.f32 %v272, %v268
  %v281 = vmul.f32 %v276, %v265
  %v282 = vmul.f32 %v276, %v266
  %v283 = vmul.f32 %v276, %v267
  %v284 = vmul.f32 %v276, %v268
  %v285 = vsub.f32 %v239, %v255
  %v286 = vsub.f32 %v240, %v256
  %v287 = vsub.f32 %v241, %v257
  %v288 = vsub.f32 %v242, %v258
  %v289 = vsub.f32 %v243, %v259
  %v290 = vsub.f32 %v244, %v260
  %v291 = vsub.f32 %v245, %v261
  %v292 = vsub.f32 %v246, %v262
  %v293 = vsub.f32 %v277, %v239
  %v294 = vsub.f32 %v278, %v240
  %v295 = vsub.f32 %v279, %v241
  %v296 = vsub.f32 %v280, %v242
  %v297 = vsub.f32 %v281, %v243
  %v298 = vsub.f32 %v282, %v244
  %v299 = vsub.f32 %v283, %v245
  %v300 = vsub.f32 %v284, %v246
  %v301 = vsub.f32 %v293, %v255
  %v302 = vsub.f32 %v294, %v256
  %v303 = vsub.f32 %v295, %v257
  %v304 = vsub.f32 %v296, %v258
  %v305 = vsub.f32 %v297, %v259
  %v306 = vsub.f32 %v298, %v260
  %v307 = vsub.f32 %v299, %v261
  %v308 = vsub.f32 %v300, %v262
  %v309 = vadd.f32 %v201, %v285
  %v310 = vadd.f32 %v202, %v286
  %v311 = vadd.f32 %v203, %v287
  %v312 = vadd.f32 %v204, %v288
  %v313 = vadd.f32 %v205, %v289
  %v314 = vadd.f32 %v206, %v290
  %v315 = vadd.f32 %v207, %v291
  %v316 = vadd.f32 %v208, %v292
  %v317 = vadd.f32 %v209, %v301
  %v318 = vadd.f32 %v210, %v302
  %v319 = vadd.f32 %v211, %v303
  %v320 = vadd.f32 %v212, %v304
  %v321 = vadd.f32 %v213, %v305
  %v322 = vadd.f32 %v214, %v306
  %v323 = vadd.f32 %v215, %v307
  %v324 = vadd.f32 %v216, %v308
  %v325 = vld [vmem:[%s0 + $0x3] sm:$0x1]
  %v326 = vld [vmem:[%s0 + $0x7] sm:$0x1]
  %v327 = vld [vmem:[%s1 + $0x3] sm:$0x1]
  %v328 = vld [vmem:[%s1 + $0x7] sm:$0x1]
  %s329 = scalar_lea.vmem %s2, 96
  %v330 = vld [vmem:[%s329] sm:$0xff]
  %v331 = vld [vmem:[%s329 + $0x8] sm:$0xff]
  %v332 = vld [vmem:[%s329 + $0x10] sm:$0xff]
  %v333 = vld [vmem:[%s329 + $0x18] sm:$0xff]
  %s334 = scalar_lea.vmem %s3, 96
  %v335 = vld [vmem:[%s334] sm:$0xff]
  %v336 = vld [vmem:[%s334 + $0x8] sm:$0xff]
  %v337 = vld [vmem:[%s334 + $0x10] sm:$0xff]
  %v338 = vld [vmem:[%s334 + $0x18] sm:$0xff]
  %v339 = vlaneseq
  %v340 = vshrl.u32 %v339, 7
  %v341 = vsub.s32 0, %v340
  %v342 = vrot.slane %v325, %v341
  %v343 = vlaneseq
  %v344 = vshrl.u32 %v343, 7
  %v345 = vsub.s32 0, %v344
  %v346 = vrot.slane %v326, %v345
  %v347 = vmul.f32 %v342, %v330
  %v348 = vmul.f32 %v342, %v331
  %v349 = vmul.f32 %v342, %v332
  %v350 = vmul.f32 %v342, %v333
  %v351 = vmul.f32 %v346, %v330
  %v352 = vmul.f32 %v346, %v331
  %v353 = vmul.f32 %v346, %v332
  %v354 = vmul.f32 %v346, %v333
  %v355 = vlaneseq
  %v356 = vshrl.u32 %v355, 7
  %v357 = vsub.s32 0, %v356
  %v358 = vrot.slane %v327, %v357
  %v359 = vlaneseq
  %v360 = vshrl.u32 %v359, 7
  %v361 = vsub.s32 0, %v360
  %v362 = vrot.slane %v328, %v361
  %v363 = vmul.f32 %v358, %v335
  %v364 = vmul.f32 %v358, %v336
  %v365 = vmul.f32 %v358, %v337
  %v366 = vmul.f32 %v358, %v338
  %v367 = vmul.f32 %v362, %v335
  %v368 = vmul.f32 %v362, %v336
  %v369 = vmul.f32 %v362, %v337
  %v370 = vmul.f32 %v362, %v338
  %v371 = vadd.f32 %v325, %v327
  %v372 = vadd.f32 %v326, %v328
  %v373 = vadd.f32 %v330, %v335
  %v374 = vadd.f32 %v331, %v336
  %v375 = vadd.f32 %v332, %v337
  %v376 = vadd.f32 %v333, %v338
  %v377 = vlaneseq
  %v378 = vshrl.u32 %v377, 7
  %v379 = vsub.s32 0, %v378
  %v380 = vrot.slane %v371, %v379
  %v381 = vlaneseq
  %v382 = vshrl.u32 %v381, 7
  %v383 = vsub.s32 0, %v382
  %v384 = vrot.slane %v372, %v383
  %v385 = vmul.f32 %v380, %v373
  %v386 = vmul.f32 %v380, %v374
  %v387 = vmul.f32 %v380, %v375
  %v388 = vmul.f32 %v380, %v376
  %v389 = vmul.f32 %v384, %v373
  %v390 = vmul.f32 %v384, %v374
  %v391 = vmul.f32 %v384, %v375
  %v392 = vmul.f32 %v384, %v376
  %v393 = vsub.f32 %v347, %v363
  %v394 = vsub.f32 %v348, %v364
  %v395 = vsub.f32 %v349, %v365
  %v396 = vsub.f32 %v350, %v366
  %v397 = vsub.f32 %v351, %v367
  %v398 = vsub.f32 %v352, %v368
  %v399 = vsub.f32 %v353, %v369
  %v400 = vsub.f32 %v354, %v370
  %v401 = vsub.f32 %v385, %v347
  %v402 = vsub.f32 %v386, %v348
  %v403 = vsub.f32 %v387, %v349
  %v404 = vsub.f32 %v388, %v350
  %v405 = vsub.f32 %v389, %v351
  %v406 = vsub.f32 %v390, %v352
  %v407 = vsub.f32 %v391, %v353
  %v408 = vsub.f32 %v392, %v354
  %v409 = vsub.f32 %v401, %v363
  %v410 = vsub.f32 %v402, %v364
  %v411 = vsub.f32 %v403, %v365
  %v412 = vsub.f32 %v404, %v366
  %v413 = vsub.f32 %v405, %v367
  %v414 = vsub.f32 %v406, %v368
  %v415 = vsub.f32 %v407, %v369
  %v416 = vsub.f32 %v408, %v370
  %v417 = vadd.f32 %v309, %v393
  %v418 = vadd.f32 %v310, %v394
  %v419 = vadd.f32 %v311, %v395
  %v420 = vadd.f32 %v312, %v396
  %v421 = vadd.f32 %v313, %v397
  %v422 = vadd.f32 %v314, %v398
  %v423 = vadd.f32 %v315, %v399
  %v424 = vadd.f32 %v316, %v400
  %v425 = vadd.f32 %v317, %v409
  %v426 = vadd.f32 %v318, %v410
  %v427 = vadd.f32 %v319, %v411
  %v428 = vadd.f32 %v320, %v412
  %v429 = vadd.f32 %v321, %v413
  %v430 = vadd.f32 %v322, %v414
  %v431 = vadd.f32 %v323, %v415
  %v432 = vadd.f32 %v324, %v416
  %433 = vst [vmem:[%s4] sm:$0xff] %v417
  %434 = vst [vmem:[%s4 + $0x8] sm:$0xff] %v418
  %435 = vst [vmem:[%s4 + $0x10] sm:$0xff] %v419
  %436 = vst [vmem:[%s4 + $0x18] sm:$0xff] %v420
  %437 = vst [vmem:[%s4 + $0x20] sm:$0xff] %v421
  %438 = vst [vmem:[%s4 + $0x28] sm:$0xff] %v422
  %439 = vst [vmem:[%s4 + $0x30] sm:$0xff] %v423
  %440 = vst [vmem:[%s4 + $0x38] sm:$0xff] %v424
  %441 = vst [vmem:[%s5] sm:$0xff] %v425
  %442 = vst [vmem:[%s5 + $0x8] sm:$0xff] %v426
  %443 = vst [vmem:[%s5 + $0x10] sm:$0xff] %v427
  %444 = vst [vmem:[%s5 + $0x18] sm:$0xff] %v428
  %445 = vst [vmem:[%s5 + $0x20] sm:$0xff] %v429
  %446 = vst [vmem:[%s5 + $0x28] sm:$0xff] %v430
  %447 = vst [vmem:[%s5 + $0x30] sm:$0xff] %v431
  %448 = vst [vmem:[%s5 + $0x38] sm:$0xff] %v432
  // Predicated region
  $region18: #{spatial_extension_forward.3} parent=0 // pred_check
    _
  $region19: #{spatial_extension_forward.3} parent=0 // pred_check_branch
    %450 = sbr.rel (0) target = $region21
  $region20: #{spatial_extension_forward.3} parent=0 // pred_region
    _
  $region21: #{spatial_extension_forward.3} parent=0 // pred_fallthru
    _
  // Predicated region
  $region22: #{spatial_extension_forward.3} parent=0 // pred_check
    _
  $region23: #{spatial_extension_forward.3} parent=0 // pred_check_branch
    %452 = sbr.rel (0) target = $region25
  $region24: #{spatial_extension_forward.3} parent=0 // pred_region
    _
  $region25: #{spatial_extension_forward.3} parent=0 // pred_fallthru
    _
  // Predicated region
  $region26: #{spatial_extension_forward.3} parent=0 // pred_check
    _
  $region27: #{spatial_extension_forward.3} parent=0 // pred_check_branch
    %454 = sbr.rel (0) target = $region29
  $region28: #{spatial_extension_forward.3} parent=0 // pred_region
    _
  $region29: #{spatial_extension_forward.3} parent=0 // pred_fallthru
    _
  // Predicated region
  $region30: #{spatial_extension_forward.3} parent=0 // pred_check
    _
  $region31: #{spatial_extension_forward.3} parent=0 // pred_check_branch
    %456 = sbr.rel (0) target = $region33
  $region32: #{spatial_extension_forward.3} parent=0 // pred_region
    _
  $region33: #{spatial_extension_forward.3} parent=0 // pred_fallthru
    _

// kernel: reverse.2
$region0: #{reverse.2}
  #allocation0 [shape = 's32[1]{0}', space=sflag, size = 0x4, scoped, tag = 'scoped memory for reverse.2']
  %s0 = inlined_call_operand.vmem [shape: f32[2,32,16,7], index: 0, kind: input, shape index: {}]
  %s1 = inlined_call_operand.vmem [shape: f32[2,32,16,7], index: 1, kind: output, shape index: {}]
  %s2 = scalar_lea.vmem %s0, 96
  %v3 = vld [vmem:[%s2] sm:$0xff]
  %4 = vst [vmem:[%s1] sm:$0xff] %v3
  %s5 = scalar_lea.vmem %s0, 208
  %v6 = vld [vmem:[%s5] sm:$0xff]
  %s7 = scalar_lea.vmem %s1, 112
  %8 = vst [vmem:[%s7] sm:$0xff] %v6
  %s9 = scalar_lea.vmem %s0, 80
  %v10 = vld [vmem:[%s9] sm:$0xff]
  %s11 = scalar_lea.vmem %s1, 16
  %12 = vst [vmem:[%s11] sm:$0xff] %v10
  %s13 = scalar_lea.vmem %s0, 192
  %v14 = vld [vmem:[%s13] sm:$0xff]
  %s15 = scalar_lea.vmem %s1, 128
  %16 = vst [vmem:[%s15] sm:$0xff] %v14
  %s17 = scalar_lea.vmem %s0, 64
  %v18 = vld [vmem:[%s17] sm:$0xff]
  %s19 = scalar_lea.vmem %s1, 32
  %20 = vst [vmem:[%s19] sm:$0xff] %v18
  %s21 = scalar_lea.vmem %s0, 176
  %v22 = vld [vmem:[%s21] sm:$0xff]
  %s23 = scalar_lea.vmem %s1, 144
  %24 = vst [vmem:[%s23] sm:$0xff] %v22
  %s25 = scalar_lea.vmem %s0, 48
  %v26 = vld [vmem:[%s25] sm:$0xff]
  %s27 = scalar_lea.vmem %s1, 48
  %28 = vst [vmem:[%s27] sm:$0xff] %v26
  %s29 = scalar_lea.vmem %s0, 160
  %v30 = vld [vmem:[%s29] sm:$0xff]
  %s31 = scalar_lea.vmem %s1, 160
  %32 = vst [vmem:[%s31] sm:$0xff] %v30
  %s33 = scalar_lea.vmem %s0, 32
  %v34 = vld [vmem:[%s33] sm:$0xff]
  %s35 = scalar_lea.vmem %s1, 64
  %36 = vst [vmem:[%s35] sm:$0xff] %v34
  %s37 = scalar_lea.vmem %s0, 144
  %v38 = vld [vmem:[%s37] sm:$0xff]
  %s39 = scalar_lea.vmem %s1, 176
  %40 = vst [vmem:[%s39] sm:$0xff] %v38
  %s41 = scalar_lea.vmem %s0, 16
  %v42 = vld [vmem:[%s41] sm:$0xff]
  %s43 = scalar_lea.vmem %s1, 80
  %44 = vst [vmem:[%s43] sm:$0xff] %v42
  %s45 = scalar_lea.vmem %s0, 128
  %v46 = vld [vmem:[%s45] sm:$0xff]
  %s47 = scalar_lea.vmem %s1, 192
  %48 = vst [vmem:[%s47] sm:$0xff] %v46
  %v49 = vld [vmem:[%s0] sm:$0xff]
  %s50 = scalar_lea.vmem %s1, 96
  %51 = vst [vmem:[%s50] sm:$0xff] %v49
  %s52 = scalar_lea.vmem %s0, 112
  %v53 = vld [vmem:[%s52] sm:$0xff]
  %s54 = scalar_lea.vmem %s1, 208
  %55 = vst [vmem:[%s54] sm:$0xff] %v53
  %s56 = scalar_lea.vmem %s0, 104
  %v57 = vld [vmem:[%s56] sm:$0xff]
  %s58 = scalar_lea.vmem %s1, 8
  %59 = vst [vmem:[%s58] sm:$0xff] %v57
  %s60 = scalar_lea.vmem %s0, 216
  %v61 = vld [vmem:[%s60] sm:$0xff]
  %s62 = scalar_lea.vmem %s1, 120
  %63 = vst [vmem:[%s62] sm:$0xff] %v61
  %s64 = scalar_lea.vmem %s0, 88
  %v65 = vld [vmem:[%s64] sm:$0xff]
  %s66 = scalar_lea.vmem %s1, 24
  %67 = vst [vmem:[%s66] sm:$0xff] %v65
  %s68 = scalar_lea.vmem %s0, 200
  %v69 = vld [vmem:[%s68] sm:$0xff]
  %s70 = scalar_lea.vmem %s1, 136
  %71 = vst [vmem:[%s70] sm:$0xff] %v69
  %s72 = scalar_lea.vmem %s0, 72
  %v73 = vld [vmem:[%s72] sm:$0xff]
  %s74 = scalar_lea.vmem %s1, 40
  %75 = vst [vmem:[%s74] sm:$0xff] %v73
  %s76 = scalar_lea.vmem %s0, 184
  %v77 = vld [vmem:[%s76] sm:$0xff]
  %s78 = scalar_lea.vmem %s1, 152
  %79 = vst [vmem:[%s78] sm:$0xff] %v77
  %s80 = scalar_lea.vmem %s0, 56
  %v81 = vld [vmem:[%s80] sm:$0xff]
  %s82 = scalar_lea.vmem %s1, 56
  %83 = vst [vmem:[%s82] sm:$0xff] %v81
  %s84 = scalar_lea.vmem %s0, 168
  %v85 = vld [vmem:[%s84] sm:$0xff]
  %s86 = scalar_lea.vmem %s1, 168
  %87 = vst [vmem:[%s86] sm:$0xff] %v85
  %s88 = scalar_lea.vmem %s0, 40
  %v89 = vld [vmem:[%s88] sm:$0xff]
  %s90 = scalar_lea.vmem %s1, 72
  %91 = vst [vmem:[%s90] sm:$0xff] %v89
  %s92 = scalar_lea.vmem %s0, 152
  %v93 = vld [vmem:[%s92] sm:$0xff]
  %s94 = scalar_lea.vmem %s1, 184
  %95 = vst [vmem:[%s94] sm:$0xff] %v93
  %s96 = scalar_lea.vmem %s0, 24
  %v97 = vld [vmem:[%s96] sm:$0xff]
  %s98 = scalar_lea.vmem %s1, 88
  %99 = vst [vmem:[%s98] sm:$0xff] %v97
  %s100 = scalar_lea.vmem %s0, 136
  %v101 = vld [vmem:[%s100] sm:$0xff]
  %s102 = scalar_lea.vmem %s1, 200
  %103 = vst [vmem:[%s102] sm:$0xff] %v101
  %s104 = scalar_lea.vmem %s0, 8
  %v105 = vld [vmem:[%s104] sm:$0xff]
  %s106 = scalar_lea.vmem %s1, 104
  %107 = vst [vmem:[%s106] sm:$0xff] %v105
  %s108 = scalar_lea.vmem %s0, 120
  %v109 = vld [vmem:[%s108] sm:$0xff]
  %s110 = scalar_lea.vmem %s1, 216
  %111 = vst [vmem:[%s110] sm:$0xff] %v109

// kernel: spatial_extension_forward.4
$region0: #{spatial_extension_forward.4}
  #allocation0 [shape = 'u32[]', space=smem, size = 0x4, offset = 0x4, fixed_abs, tag = 'smem constant byte address 0x4 - core index']
  #allocation1 [shape = 'u32[144,128]{1,0:T(1,128)}', space=vmem, size = 0x12000, scoped, tag = 'internal scratch']
  %s0 = inlined_call_operand.vmem [shape: f32[64,256], index: 0, kind: input, shape index: {}]
  %s1 = inlined_call_operand.vmem [shape: f32[64,256], index: 1, kind: output, shape index: {}]
  %s2 = sld [smem:[#allocation0]]
  $region14: #{spatial_extension_forward.4} parent=0
    _
  %s4 = ssub.s32 1, %s2
  %s5 = scalar_select 0, %s4, %s2
  // Predicated region
  $region2: #{spatial_extension_forward.4} parent=0 // pred_check
    _
  $region3: #{spatial_extension_forward.4} parent=0 // pred_check_branch
    %7 = sbr.rel (0) target = $region5
  $region4: #{spatial_extension_forward.4} parent=0 // pred_region
    _
  $region5: #{spatial_extension_forward.4} parent=0 // pred_fallthru
    _
  %v8 = vld [vmem:[%s0] sm:$0xff]
  %v9 = vld [vmem:[%s0 + $0x8] sm:$0xff]
  %v10 = vld [vmem:[%s0 + $0x10] sm:$0xff]
  %v11 = vld [vmem:[%s0 + $0x18] sm:$0xff]
  %v12 = vld [vmem:[%s0 + $0x20] sm:$0xff]
  %v13 = vld [vmem:[%s0 + $0x28] sm:$0xff]
  %v14 = vld [vmem:[%s0 + $0x30] sm:$0xff]
  %v15 = vld [vmem:[%s0 + $0x38] sm:$0xff]
  %v16 = vld [vmem:[%s0 + $0x40] sm:$0xff]
  %v17 = vld [vmem:[%s0 + $0x48] sm:$0xff]
  %v18 = vld [vmem:[%s0 + $0x50] sm:$0xff]
  %v19 = vld [vmem:[%s0 + $0x58] sm:$0xff]
  %v20 = vld [vmem:[%s0 + $0x60] sm:$0xff]
  %v21 = vld [vmem:[%s0 + $0x68] sm:$0xff]
  %v22 = vld [vmem:[%s0 + $0x70] sm:$0xff]
  %v23 = vld [vmem:[%s0 + $0x78] sm:$0xff]
  %v24 = vmul.f32 %v8, 0.5
  %v25 = vmul.f32 %v9, 0.5
  %v26 = vmul.f32 %v10, 0.5
  %v27 = vmul.f32 %v11, 0.5
  %v28 = vmul.f32 %v12, 0.5
  %v29 = vmul.f32 %v13, 0.5
  %v30 = vmul.f32 %v14, 0.5
  %v31 = vmul.f32 %v15, 0.5
  %v32 = vmul.f32 %v16, 0.5
  %v33 = vmul.f32 %v17, 0.5
  %v34 = vmul.f32 %v18, 0.5
  %v35 = vmul.f32 %v19, 0.5
  %v36 = vmul.f32 %v20, 0.5
  %v37 = vmul.f32 %v21, 0.5
  %v38 = vmul.f32 %v22, 0.5
  %v39 = vmul.f32 %v23, 0.5
  %v40 = vmul.f32 %v8, 0.70710677
  %v41 = vmul.f32 %v9, 0.70710677
  %v42 = vmul.f32 %v10, 0.70710677
  %v43 = vmul.f32 %v11, 0.70710677
  %v44 = vmul.f32 %v12, 0.70710677
  %v45 = vmul.f32 %v13, 0.70710677
  %v46 = vmul.f32 %v14, 0.70710677
  %v47 = vmul.f32 %v15, 0.70710677
  %v48 = vmul.f32 %v16, 0.70710677
  %v49 = vmul.f32 %v17, 0.70710677
  %v50 = vmul.f32 %v18, 0.70710677
  %v51 = vmul.f32 %v19, 0.70710677
  %v52 = vmul.f32 %v20, 0.70710677
  %v53 = vmul.f32 %v21, 0.70710677
  %v54 = vmul.f32 %v22, 0.70710677
  %v55 = vmul.f32 %v23, 0.70710677
  %v56 = verf.f32.pop %v40
  %v57 = verf.f32.pop %v41
  %v58 = verf.f32.pop %v42
  %v59 = verf.f32.pop %v43
  %v60 = verf.f32.pop %v44
  %v61 = verf.f32.pop %v45
  %v62 = verf.f32.pop %v46
  %v63 = verf.f32.pop %v47
  %v64 = verf.f32.pop %v48
  %v65 = verf.f32.pop %v49
  %v66 = verf.f32.pop %v50
  %v67 = verf.f32.pop %v51
  %v68 = verf.f32.pop %v52
  %v69 = verf.f32.pop %v53
  %v70 = verf.f32.pop %v54
  %v71 = verf.f32.pop %v55
  %v72 = vadd.f32 %v56, 1.0
  %v73 = vadd.f32 %v57, 1.0
  %v74 = vadd.f32 %v58, 1.0
  %v75 = vadd.f32 %v59, 1.0
  %v76 = vadd.f32 %v60, 1.0
  %v77 = vadd.f32 %v61, 1.0
  %v78 = vadd.f32 %v62, 1.0
  %v79 = vadd.f32 %v63, 1.0
  %v80 = vadd.f32 %v64, 1.0
  %v81 = vadd.f32 %v65, 1.0
  %v82 = vadd.f32 %v66, 1.0
  %v83 = vadd.f32 %v67, 1.0
  %v84 = vadd.f32 %v68, 1.0
  %v85 = vadd.f32 %v69, 1.0
  %v86 = vadd.f32 %v70, 1.0
  %v87 = vadd.f32 %v71, 1.0
  %v88 = vmul.f32 %v24, %v72
  %v89 = vmul.f32 %v25, %v73
  %v90 = vmul.f32 %v26, %v74
  %v91 = vmul.f32 %v27, %v75
  %v92 = vmul.f32 %v28, %v76
  %v93 = vmul.f32 %v29, %v77
  %v94 = vmul.f32 %v30, %v78
  %v95 = vmul.f32 %v31, %v79
  %v96 = vmul.f32 %v32, %v80
  %v97 = vmul.f32 %v33, %v81
  %v98 = vmul.f32 %v34, %v82
  %v99 = vmul.f32 %v35, %v83
  %v100 = vmul.f32 %v36, %v84
  %v101 = vmul.f32 %v37, %v85
  %v102 = vmul.f32 %v38, %v86
  %v103 = vmul.f32 %v39, %v87
  %104 = vst [vmem:[%s1] sm:$0xff] %v88
  %105 = vst [vmem:[%s1 + $0x8] sm:$0xff] %v89
  %106 = vst [vmem:[%s1 + $0x10] sm:$0xff] %v90
  %107 = vst [vmem:[%s1 + $0x18] sm:$0xff] %v91
  %108 = vst [vmem:[%s1 + $0x20] sm:$0xff] %v92
  %109 = vst [vmem:[%s1 + $0x28] sm:$0xff] %v93
  %110 = vst [vmem:[%s1 + $0x30] sm:$0xff] %v94
  %111 = vst [vmem:[%s1 + $0x38] sm:$0xff] %v95
  %112 = vst [vmem:[%s1 + $0x40] sm:$0xff] %v96
  %113 = vst [vmem:[%s1 + $0x48] sm:$0xff] %v97
  %114 = vst [vmem:[%s1 + $0x50] sm:$0xff] %v98
  %115 = vst [vmem:[%s1 + $0x58] sm:$0xff] %v99
  %116 = vst [vmem:[%s1 + $0x60] sm:$0xff] %v100
  %117 = vst [vmem:[%s1 + $0x68] sm:$0xff] %v101
  %118 = vst [vmem:[%s1 + $0x70] sm:$0xff] %v102
  %119 = vst [vmem:[%s1 + $0x78] sm:$0xff] %v103
  // Predicated region
  $region6: #{spatial_extension_forward.4} parent=0 // pred_check
    _
  $region7: #{spatial_extension_forward.4} parent=0 // pred_check_branch
    %121 = sbr.rel (0) target = $region9
  $region8: #{spatial_extension_forward.4} parent=0 // pred_region
    _
  $region9: #{spatial_extension_forward.4} parent=0 // pred_fallthru
    _
  // Predicated region
  $region10: #{spatial_extension_forward.4} parent=0 // pred_check
    _
  $region11: #{spatial_extension_forward.4} parent=0 // pred_check_branch
    %123 = sbr.rel (0) target = $region13
  $region12: #{spatial_extension_forward.4} parent=0 // pred_region
    _
  $region13: #{spatial_extension_forward.4} parent=0 // pred_fallthru
    _

// kernel: reverse.3
$region0: #{reverse.3}
  %s0 = inlined_call_operand.vmem [shape: f32[2,4,16,7], index: 0, kind: input, shape index: {}]
  %s1 = inlined_call_operand.vmem [shape: f32[2,4,16,7], index: 1, kind: output, shape index: {}]
  $region1: #{reverse.3} parent=0
    #allocation0 [shape = 'u8[65536]{0}', space=vmem, size = 0x10000, scoped, tag = 'operand span for operand 0']
    #allocation1 [shape = 'u8[32768]{0}', space=vmem, size = 0x8000, scoped, tag = 'operand span for operand 1']
    %s2 = scalar_lea.vmem [#allocation0], 8
    // Predicated region
    $region2: #{reverse.3} parent=1 // pred_check
      _
    $region3: #{reverse.3} parent=1 // pred_check_branch
      %4 = sbr.rel (0) target = $region5
    $region4: #{reverse.3} parent=1 // pred_region
      // Predicated region
      $region6: #{reverse.3} parent=4 // pred_check
        _
      $region7: #{reverse.3} parent=4 // pred_check_branch
        %6 = sbr.rel (0) target = $region9
      $region8: #{reverse.3} parent=4 // pred_region
        // Predicated region
        $region21: #{reverse.3} parent=8 // pred_check
          _
        $region22: #{reverse.3} parent=8 // pred_check_branch
          %35 = sbr.rel (0) target = $region24
        $region23: #{reverse.3} parent=8 // pred_region
          loop: start=0, step=1, limit=1
          $region25: #{reverse.3} parent=23 // loop_pre_header
            _
          $region26: #{reverse.3} parent=23 // loop_header
            %s37 = sphi 0, %s41
            %p38 = scmp.ge.s32.totalorder %s37, 1
            %s42 = sphi %s0, %s0
            %s43 = sphi %s2, %s2
          $region27: #{reverse.3} parent=23 // loop_header_branch
            %40 = sbr.rel (%p38) target = $region31
          $region28: #{reverse.3} parent=23 // loop_body
            %v44 = vld [vmem:[%s42] sm:$0xff]
            %45 = vst [vmem:[%s43] sm:$0xff] %v44
            %v46 = vld [vmem:[%s42 + $0x8] sm:$0xff]
            %47 = vst [vmem:[%s43 + $0x10] sm:$0xff] %v46
            %v48 = vld [vmem:[%s42 + $0x10] sm:$0xff]
            %49 = vst [vmem:[%s43 + $0x20] sm:$0xff] %v48
            %v50 = vld [vmem:[%s42 + $0x18] sm:$0xff]
            %51 = vst [vmem:[%s43 + $0x30] sm:$0xff] %v50
            %v52 = vld [vmem:[%s42 + $0x20] sm:$0xff]
            %53 = vst [vmem:[%s43 + $0x40] sm:$0xff] %v52
            %v54 = vld [vmem:[%s42 + $0x28] sm:$0xff]
            %55 = vst [vmem:[%s43 + $0x50] sm:$0xff] %v54
            %v56 = vld [vmem:[%s42 + $0x30] sm:$0xff]
            %57 = vst [vmem:[%s43 + $0x60] sm:$0xff] %v56
            %v58 = vld [vmem:[%s42 + $0x38] sm:$0xff]
            %59 = vst [vmem:[%s43 + $0x70] sm:$0xff] %v58
          $region29: #{reverse.3} parent=23 // loop_footer
            %s41 = sadd.s32 1, %s37
          $region30: #{reverse.3} parent=23 // loop_footer_branch
            %36 = sbr.rel target = $region26
          $region31: #{reverse.3} parent=23 // loop_exit
            _
        $region24: #{reverse.3} parent=8 // pred_fallthru
          _
        // Predicated region
        $region32: #{reverse.3} parent=8 // pred_check
          _
        $region33: #{reverse.3} parent=8 // pred_check_branch
          %61 = sbr.rel target = $region35
        $region34: #{reverse.3} parent=8 // pred_region
          _
        $region35: #{reverse.3} parent=8 // pred_fallthru
          _
      $region9: #{reverse.3} parent=4 // pred_fallthru
        _
      // Predicated region
      $region10: #{reverse.3} parent=4 // pred_check
        _
      $region11: #{reverse.3} parent=4 // pred_check_branch
        %8 = sbr.rel target = $region13
      $region12: #{reverse.3} parent=4 // pred_region
        loop: start=0, step=1, limit=1
        $region14: #{reverse.3} parent=12 // loop_pre_header
          _
        $region15: #{reverse.3} parent=12 // loop_header
          %s11 = sphi 0, %s15
          %p12 = scmp.ge.s32.totalorder %s11, 1
          %s16 = sphi %s0, %s0
          %s17 = sphi %s2, %s2
        $region16: #{reverse.3} parent=12 // loop_header_branch
          %14 = sbr.rel (%p12) target = $region20
        $region17: #{reverse.3} parent=12 // loop_body
          %v18 = vld [vmem:[%s16] sm:$0xff]
          %19 = vst [vmem:[%s17] sm:$0xff] %v18
          %v20 = vld [vmem:[%s16 + $0x8] sm:$0xff]
          %21 = vst [vmem:[%s17 + $0x10] sm:$0xff] %v20
          %v22 = vld [vmem:[%s16 + $0x10] sm:$0xff]
          %23 = vst [vmem:[%s17 + $0x20] sm:$0xff] %v22
          %v24 = vld [vmem:[%s16 + $0x18] sm:$0xff]
          %25 = vst [vmem:[%s17 + $0x30] sm:$0xff] %v24
          %v26 = vld [vmem:[%s16 + $0x20] sm:$0xff]
          %27 = vst [vmem:[%s17 + $0x40] sm:$0xff] %v26
          %v28 = vld [vmem:[%s16 + $0x28] sm:$0xff]
          %29 = vst [vmem:[%s17 + $0x50] sm:$0xff] %v28
          %v30 = vld [vmem:[%s16 + $0x30] sm:$0xff]
          %31 = vst [vmem:[%s17 + $0x60] sm:$0xff] %v30
          %v32 = vld [vmem:[%s16 + $0x38] sm:$0xff]
          %33 = vst [vmem:[%s17 + $0x70] sm:$0xff] %v32
        $region18: #{reverse.3} parent=12 // loop_footer
          %s15 = sadd.s32 1, %s11
        $region19: #{reverse.3} parent=12 // loop_footer_branch
          %10 = sbr.rel target = $region15
        $region20: #{reverse.3} parent=12 // loop_exit
          _
      $region13: #{reverse.3} parent=4 // pred_fallthru
        _
    $region5: #{reverse.3} parent=1 // pred_fallthru
      _
    %62 = vnop
    %s63 = scalar_lea.vmem [#allocation0], 7
    %v64 = vld [vmem:[%s63] ss:$-1 sm:$0xff]
    %v65 = vrot.slane %v64, 1
    %66 = vst [vmem:[#allocation1] sm:$0xff] %v65
    %s67 = scalar_lea.vmem [#allocation0], 8
    %s68 = scalar_lea.vmem %s67, 7 [#allocation0]
    %v69 = vld [vmem:[%s68] ss:$-1 sm:$0xff]
    %v70 = vrot.slane %v69, 1
    %v71 = vlaneseq
    %v72 = vshrl.u32 %v71, 7
    %vm73 = vcmp.lt.s32.totalorder %v72, 7
    %74 = vst.msk [vmem:[#allocation1] sm:$0xff] %vm73, %v70
    %s75 = scalar_lea.vmem [#allocation1], 8
    %s76 = scalar_lea.vmem [#allocation0], 16
    %s77 = scalar_lea.vmem %s76, 7 [#allocation0]
    %v78 = vld [vmem:[%s77] ss:$-1 sm:$0xff]
    %v79 = vrot.slane %v78, 1
    %80 = vst [vmem:[%s75] sm:$0xff] %v79
    %s81 = scalar_lea.vmem %s76, 8 [#allocation0]
    %s82 = scalar_lea.vmem %s81, 7 [#allocation0]
    %v83 = vld [vmem:[%s82] ss:$-1 sm:$0xff]
    %v84 = vrot.slane %v83, 1
    %v85 = vlaneseq
    %v86 = vshrl.u32 %v85, 7
    %vm87 = vcmp.lt.s32.totalorder %v86, 7
    %88 = vst.msk [vmem:[%s75] sm:$0xff] %vm87, %v84
    %s89 = scalar_lea.vmem [#allocation1], 16
    %s90 = scalar_lea.vmem [#allocation0], 32
    %s91 = scalar_lea.vmem %s90, 7 [#allocation0]
    %v92 = vld [vmem:[%s91] ss:$-1 sm:$0xff]
    %v93 = vrot.slane %v92, 1
    %94 = vst [vmem:[%s89] sm:$0xff] %v93
    %s95 = scalar_lea.vmem %s90, 8 [#allocation0]
    %s96 = scalar_lea.vmem %s95, 7 [#allocation0]
    %v97 = vld [vmem:[%s96] ss:$-1 sm:$0xff]
    %v98 = vrot.slane %v97, 1
    %v99 = vlaneseq
    %v100 = vshrl.u32 %v99, 7
    %vm101 = vcmp.lt.s32.totalorder %v100, 7
    %102 = vst.msk [vmem:[%s89] sm:$0xff] %vm101, %v98
    %s103 = scalar_lea.vmem [#allocation1], 24
    %s104 = scalar_lea.vmem [#allocation0], 48
    %s105 = scalar_lea.vmem %s104, 7 [#allocation0]
    %v106 = vld [vmem:[%s105] ss:$-1 sm:$0xff]
    %v107 = vrot.slane %v106, 1
    %108 = vst [vmem:[%s103] sm:$0xff] %v107
    %s109 = scalar_lea.vmem %s104, 8 [#allocation0]
    %s110 = scalar_lea.vmem %s109, 7 [#allocation0]
    %v111 = vld [vmem:[%s110] ss:$-1 sm:$0xff]
    %v112 = vrot.slane %v111, 1
    %v113 = vlaneseq
    %v114 = vshrl.u32 %v113, 7
    %vm115 = vcmp.lt.s32.totalorder %v114, 7
    %116 = vst.msk [vmem:[%s103] sm:$0xff] %vm115, %v112
    %s117 = scalar_lea.vmem [#allocation1], 32
    %s118 = scalar_lea.vmem [#allocation0], 64
    %s119 = scalar_lea.vmem %s118, 7 [#allocation0]
    %v120 = vld [vmem:[%s119] ss:$-1 sm:$0xff]
    %v121 = vrot.slane %v120, 1
    %122 = vst [vmem:[%s117] sm:$0xff] %v121
    %s123 = scalar_lea.vmem %s118, 8 [#allocation0]
    %s124 = scalar_lea.vmem %s123, 7 [#allocation0]
    %v125 = vld [vmem:[%s124] ss:$-1 sm:$0xff]
    %v126 = vrot.slane %v125, 1
    %v127 = vlaneseq
    %v128 = vshrl.u32 %v127, 7
    %vm129 = vcmp.lt.s32.totalorder %v128, 7
    %130 = vst.msk [vmem:[%s117] sm:$0xff] %vm129, %v126
    %s131 = scalar_lea.vmem [#allocation1], 40
    %s132 = scalar_lea.vmem [#allocation0], 80
    %s133 = scalar_lea.vmem %s132, 7 [#allocation0]
    %v134 = vld [vmem:[%s133] ss:$-1 sm:$0xff]
    %v135 = vrot.slane %v134, 1
    %136 = vst [vmem:[%s131] sm:$0xff] %v135
    %s137 = scalar_lea.vmem %s132, 8 [#allocation0]
    %s138 = scalar_lea.vmem %s137, 7 [#allocation0]
    %v139 = vld [vmem:[%s138] ss:$-1 sm:$0xff]
    %v140 = vrot.slane %v139, 1
    %v141 = vlaneseq
    %v142 = vshrl.u32 %v141, 7
    %vm143 = vcmp.lt.s32.totalorder %v142, 7
    %144 = vst.msk [vmem:[%s131] sm:$0xff] %vm143, %v140
    %s145 = scalar_lea.vmem [#allocation1], 48
    %s146 = scalar_lea.vmem [#allocation0], 96
    %s147 = scalar_lea.vmem %s146, 7 [#allocation0]
    %v148 = vld [vmem:[%s147] ss:$-1 sm:$0xff]
    %v149 = vrot.slane %v148, 1
    %150 = vst [vmem:[%s145] sm:$0xff] %v149
    %s151 = scalar_lea.vmem %s146, 8 [#allocation0]
    %s152 = scalar_lea.vmem %s151, 7 [#allocation0]
    %v153 = vld [vmem:[%s152] ss:$-1 sm:$0xff]
    %v154 = vrot.slane %v153, 1
    %v155 = vlaneseq
    %v156 = vshrl.u32 %v155, 7
    %vm157 = vcmp.lt.s32.totalorder %v156, 7
    %158 = vst.msk [vmem:[%s145] sm:$0xff] %vm157, %v154
    %s159 = scalar_lea.vmem [#allocation1], 56
    %s160 = scalar_lea.vmem [#allocation0], 112
    %s161 = scalar_lea.vmem %s160, 7 [#allocation0]
    %v162 = vld [vmem:[%s161] ss:$-1 sm:$0xff]
    %v163 = vrot.slane %v162, 1
    %164 = vst [vmem:[%s159] sm:$0xff] %v163
    %s165 = scalar_lea.vmem %s160, 8 [#allocation0]
    %s166 = scalar_lea.vmem %s165, 7 [#allocation0]
    %v167 = vld [vmem:[%s166] ss:$-1 sm:$0xff]
    %v168 = vrot.slane %v167, 1
    %v169 = vlaneseq
    %v170 = vshrl.u32 %v169, 7
    %vm171 = vcmp.lt.s32.totalorder %v170, 7
    %172 = vst.msk [vmem:[%s159] sm:$0xff] %vm171, %v168
    // Predicated region
    $region36: #{reverse.3} parent=1 // pred_check
      _
    $region37: #{reverse.3} parent=1 // pred_check_branch
      %174 = sbr.rel (0) target = $region39
    $region38: #{reverse.3} parent=1 // pred_region
      // Predicated region
      $region40: #{reverse.3} parent=38 // pred_check
        _
      $region41: #{reverse.3} parent=38 // pred_check_branch
        %176 = sbr.rel (0) target = $region43
      $region42: #{reverse.3} parent=38 // pred_region
        // Predicated region
        $region55: #{reverse.3} parent=42 // pred_check
          _
        $region56: #{reverse.3} parent=42 // pred_check_branch
          %205 = sbr.rel (0) target = $region58
        $region57: #{reverse.3} parent=42 // pred_region
          loop: start=0, step=1, limit=1
          $region59: #{reverse.3} parent=57 // loop_pre_header
            _
          $region60: #{reverse.3} parent=57 // loop_header
            %s207 = sphi 0, %s211
            %p208 = scmp.ge.s32.totalorder %s207, 1
            %s212 = sphi [#allocation1], [#allocation1]
            %s213 = sphi %s1, %s1
          $region61: #{reverse.3} parent=57 // loop_header_branch
            %210 = sbr.rel (%p208) target = $region65
          $region62: #{reverse.3} parent=57 // loop_body
            %v214 = vld [vmem:[%s212] sm:$0xff]
            %215 = vst [vmem:[%s213] sm:$0xff] %v214
            %v216 = vld [vmem:[%s212 + $0x8] sm:$0xff]
            %217 = vst [vmem:[%s213 + $0x8] sm:$0xff] %v216
            %v218 = vld [vmem:[%s212 + $0x10] sm:$0xff]
            %219 = vst [vmem:[%s213 + $0x10] sm:$0xff] %v218
            %v220 = vld [vmem:[%s212 + $0x18] sm:$0xff]
            %221 = vst [vmem:[%s213 + $0x18] sm:$0xff] %v220
            %v222 = vld [vmem:[%s212 + $0x20] sm:$0xff]
            %223 = vst [vmem:[%s213 + $0x20] sm:$0xff] %v222
            %v224 = vld [vmem:[%s212 + $0x28] sm:$0xff]
            %225 = vst [vmem:[%s213 + $0x28] sm:$0xff] %v224
            %v226 = vld [vmem:[%s212 + $0x30] sm:$0xff]
            %227 = vst [vmem:[%s213 + $0x30] sm:$0xff] %v226
            %v228 = vld [vmem:[%s212 + $0x38] sm:$0xff]
            %229 = vst [vmem:[%s213 + $0x38] sm:$0xff] %v228
          $region63: #{reverse.3} parent=57 // loop_footer
            %s211 = sadd.s32 1, %s207
          $region64: #{reverse.3} parent=57 // loop_footer_branch
            %206 = sbr.rel target = $region60
          $region65: #{reverse.3} parent=57 // loop_exit
            _
        $region58: #{reverse.3} parent=42 // pred_fallthru
          _
        // Predicated region
        $region66: #{reverse.3} parent=42 // pred_check
          _
        $region67: #{reverse.3} parent=42 // pred_check_branch
          %231 = sbr.rel target = $region69
        $region68: #{reverse.3} parent=42 // pred_region
          _
        $region69: #{reverse.3} parent=42 // pred_fallthru
          _
      $region43: #{reverse.3} parent=38 // pred_fallthru
        _
      // Predicated region
      $region44: #{reverse.3} parent=38 // pred_check
        _
      $region45: #{reverse.3} parent=38 // pred_check_branch
        %178 = sbr.rel target = $region47
      $region46: #{reverse.3} parent=38 // pred_region
        loop: start=0, step=1, limit=1
        $region48: #{reverse.3} parent=46 // loop_pre_header
          _
        $region49: #{reverse.3} parent=46 // loop_header
          %s181 = sphi 0, %s185
          %p182 = scmp.ge.s32.totalorder %s181, 1
          %s186 = sphi [#allocation1], [#allocation1]
          %s187 = sphi %s1, %s1
        $region50: #{reverse.3} parent=46 // loop_header_branch
          %184 = sbr.rel (%p182) target = $region54
        $region51: #{reverse.3} parent=46 // loop_body
          %v188 = vld [vmem:[%s186] sm:$0xff]
          %189 = vst [vmem:[%s187] sm:$0xff] %v188
          %v190 = vld [vmem:[%s186 + $0x8] sm:$0xff]
          %191 = vst [vmem:[%s187 + $0x8] sm:$0xff] %v190
          %v192 = vld [vmem:[%s186 + $0x10] sm:$0xff]
          %193 = vst [vmem:[%s187 + $0x10] sm:$0xff] %v192
          %v194 = vld [vmem:[%s186 + $0x18] sm:$0xff]
          %195 = vst [vmem:[%s187 + $0x18] sm:$0xff] %v194
          %v196 = vld [vmem:[%s186 + $0x20] sm:$0xff]
          %197 = vst [vmem:[%s187 + $0x20] sm:$0xff] %v196
          %v198 = vld [vmem:[%s186 + $0x28] sm:$0xff]
          %199 = vst [vmem:[%s187 + $0x28] sm:$0xff] %v198
          %v200 = vld [vmem:[%s186 + $0x30] sm:$0xff]
          %201 = vst [vmem:[%s187 + $0x30] sm:$0xff] %v200
          %v202 = vld [vmem:[%s186 + $0x38] sm:$0xff]
          %203 = vst [vmem:[%s187 + $0x38] sm:$0xff] %v202
        $region52: #{reverse.3} parent=46 // loop_footer
          %s185 = sadd.s32 1, %s181
        $region53: #{reverse.3} parent=46 // loop_footer_branch
          %180 = sbr.rel target = $region49
        $region54: #{reverse.3} parent=46 // loop_exit
          _
      $region47: #{reverse.3} parent=38 // pred_fallthru
        _
    $region39: #{reverse.3} parent=1 // pred_fallthru
      _
    %232 = vnop

// kernel: spatial_extension_forward.5
$region0: #{spatial_extension_forward.5}
  #allocation0 [shape = 'u32[]', space=smem, size = 0x4, offset = 0x4, fixed_abs, tag = 'smem constant byte address 0x4 - core index']
  #allocation1 [shape = 'u32[144,128]{1,0:T(1,128)}', space=vmem, size = 0x12000, scoped, tag = 'internal scratch']
  %s0 = inlined_call_operand.vmem [shape: f32[2,32,128], index: 0, kind: input, shape index: {}]
  %s1 = inlined_call_operand.vmem [shape: f32[2,32,128], index: 1, kind: input, shape index: {}]
  %s2 = inlined_call_operand.vmem [shape: f32[32,4,128], index: 2, kind: input, shape index: {}]
  %s3 = inlined_call_operand.vmem [shape: f32[32,4,128], index: 3, kind: input, shape index: {}]
  %s4 = inlined_call_operand.vmem [shape: f32[2,4,128], index: 4, kind: output, shape index: {0}]
  %s5 = inlined_call_operand.vmem [shape: f32[2,4,128], index: 5, kind: output, shape index: {1}]
  %6 = xla_tuple %s4, %s5
  %s7 = sld [smem:[#allocation0]]
  $region34: #{spatial_extension_forward.5} parent=0
    _
  %s9 = ssub.s32 1, %s7
  %s10 = scalar_select 0, %s9, %s7
  // Predicated region
  $region2: #{spatial_extension_forward.5} parent=0 // pred_check
    _
  $region3: #{spatial_extension_forward.5} parent=0 // pred_check_branch
    %12 = sbr.rel (0) target = $region5
  $region4: #{spatial_extension_forward.5} parent=0 // pred_region
    _
  $region5: #{spatial_extension_forward.5} parent=0 // pred_fallthru
    _
  // Predicated region
  $region6: #{spatial_extension_forward.5} parent=0 // pred_check
    _
  $region7: #{spatial_extension_forward.5} parent=0 // pred_check_branch
    %14 = sbr.rel (0) target = $region9
  $region8: #{spatial_extension_forward.5} parent=0 // pred_region
    _
  $region9: #{spatial_extension_forward.5} parent=0 // pred_fallthru
    _
  // Predicated region
  $region10: #{spatial_extension_forward.5} parent=0 // pred_check
    _
  $region11: #{spatial_extension_forward.5} parent=0 // pred_check_branch
    %16 = sbr.rel (0) target = $region13
  $region12: #{spatial_extension_forward.5} parent=0 // pred_region
    _
  $region13: #{spatial_extension_forward.5} parent=0 // pred_fallthru
    _
  // Predicated region
  $region14: #{spatial_extension_forward.5} parent=0 // pred_check
    _
  $region15: #{spatial_extension_forward.5} parent=0 // pred_check_branch
    %18 = sbr.rel (0) target = $region17
  $region16: #{spatial_extension_forward.5} parent=0 // pred_region
    _
  $region17: #{spatial_extension_forward.5} parent=0 // pred_fallthru
    _
  %v19 = vld [vmem:[%s0] sm:$0x1]
  %v20 = vld [vmem:[%s0 + $0x20] sm:$0x1]
  %v21 = vld [vmem:[%s1] sm:$0x1]
  %v22 = vld [vmem:[%s1 + $0x20] sm:$0x1]
  %v23 = vld [vmem:[%s2] sm:$0xf]
  %v24 = vld [vmem:[%s3] sm:$0xf]
  %v25 = vlaneseq
  %v26 = vshrl.u32 %v25, 7
  %v27 = vsub.s32 0, %v26
  %v28 = vrot.slane %v19, %v27
  %v29 = vlaneseq
  %v30 = vshrl.u32 %v29, 7
  %v31 = vsub.s32 0, %v30
  %v32 = vrot.slane %v20, %v31
  %v33 = vmul.f32 %v28, %v23
  %v34 = vmul.f32 %v32, %v23
  %v35 = vlaneseq
  %v36 = vshrl.u32 %v35, 7
  %v37 = vsub.s32 0, %v36
  %v38 = vrot.slane %v21, %v37
  %v39 = vlaneseq
  %v40 = vshrl.u32 %v39, 7
  %v41 = vsub.s32 0, %v40
  %v42 = vrot.slane %v22, %v41
  %v43 = vmul.f32 %v38, %v24
  %v44 = vmul.f32 %v42, %v24
  %v45 = vadd.f32 %v19, %v21
  %v46 = vadd.f32 %v20, %v22
  %v47 = vadd.f32 %v23, %v24
  %v48 = vlaneseq
  %v49 = vshrl.u32 %v48, 7
  %v50 = vsub.s32 0, %v49
  %v51 = vrot.slane %v45, %v50
  %v52 = vlaneseq
  %v53 = vshrl.u32 %v52, 7
  %v54 = vsub.s32 0, %v53
  %v55 = vrot.slane %v46, %v54
  %v56 = vmul.f32 %v51, %v47
  %v57 = vmul.f32 %v55, %v47
  %v58 = vsub.f32 %v33, %v43
  %v59 = vsub.f32 %v34, %v44
  %v60 = vsub.f32 %v56, %v33
  %v61 = vsub.f32 %v57, %v34
  %v62 = vsub.f32 %v60, %v43
  %v63 = vsub.f32 %v61, %v44
  %v64 = vld [vmem:[%s0 + $0x1] sm:$0x1]
  %v65 = vld [vmem:[%s0 + $0x21] sm:$0x1]
  %v66 = vld [vmem:[%s1 + $0x1] sm:$0x1]
  %v67 = vld [vmem:[%s1 + $0x21] sm:$0x1]
  %s68 = scalar_lea.vmem %s2, 4
  %v69 = vld [vmem:[%s68] sm:$0xf]
  %s70 = scalar_lea.vmem %s3, 4
  %v71 = vld [vmem:[%s70] sm:$0xf]
  %v72 = vlaneseq
  %v73 = vshrl.u32 %v72, 7
  %v74 = vsub.s32 0, %v73
  %v75 = vrot.slane %v64, %v74
  %v76 = vlaneseq
  %v77 = vshrl.u32 %v76, 7
  %v78 = vsub.s32 0, %v77
  %v79 = vrot.slane %v65, %v78
  %v80 = vmul.f32 %v75, %v69
  %v81 = vmul.f32 %v79, %v69
  %v82 = vlaneseq
  %v83 = vshrl.u32 %v82, 7
  %v84 = vsub.s32 0, %v83
  %v85 = vrot.slane %v66, %v84
  %v86 = vlaneseq
  %v87 = vshrl.u32 %v86, 7
  %v88 = vsub.s32 0, %v87
  %v89 = vrot.slane %v67, %v88
  %v90 = vmul.f32 %v85, %v71
  %v91 = vmul.f32 %v89, %v71
  %v92 = vadd.f32 %v64, %v66
  %v93 = vadd.f32 %v65, %v67
  %v94 = vadd.f32 %v69, %v71
  %v95 = vlaneseq
  %v96 = vshrl.u32 %v95, 7
  %v97 = vsub.s32 0, %v96
  %v98 = vrot.slane %v92, %v97
  %v99 = vlaneseq
  %v100 = vshrl.u32 %v99, 7
  %v101 = vsub.s32 0, %v100
  %v102 = vrot.slane %v93, %v101
  %v103 = vmul.f32 %v98, %v94
  %v104 = vmul.f32 %v102, %v94
  %v105 = vsub.f32 %v80, %v90
  %v106 = vsub.f32 %v81, %v91
  %v107 = vsub.f32 %v103, %v80
  %v108 = vsub.f32 %v104, %v81
  %v109 = vsub.f32 %v107, %v90
  %v110 = vsub.f32 %v108, %v91
  %v111 = vadd.f32 %v58, %v105
  %v112 = vadd.f32 %v59, %v106
  %v113 = vadd.f32 %v62, %v109
  %v114 = vadd.f32 %v63, %v110
  %v115 = vld [vmem:[%s0 + $0x2] sm:$0x1]
  %v116 = vld [vmem:[%s0 + $0x22] sm:$0x1]
  %v117 = vld [vmem:[%s1 + $0x2] sm:$0x1]
  %v118 = vld [vmem:[%s1 + $0x22] sm:$0x1]
  %s119 = scalar_lea.vmem %s2, 8
  %v120 = vld [vmem:[%s119] sm:$0xf]
  %s121 = scalar_lea.vmem %s3, 8
  %v122 = vld [vmem:[%s121] sm:$0xf]
  %v123 = vlaneseq
  %v124 = vshrl.u32 %v123, 7
  %v125 = vsub.s32 0, %v124
  %v126 = vrot.slane %v115, %v125
  %v127 = vlaneseq
  %v128 = vshrl.u32 %v127, 7
  %v129 = vsub.s32 0, %v128
  %v130 = vrot.slane %v116, %v129
  %v131 = vmul.f32 %v126, %v120
  %v132 = vmul.f32 %v130, %v120
  %v133 = vlaneseq
  %v134 = vshrl.u32 %v133, 7
  %v135 = vsub.s32 0, %v134
  %v136 = vrot.slane %v117, %v135
  %v137 = vlaneseq
  %v138 = vshrl.u32 %v137, 7
  %v139 = vsub.s32 0, %v138
  %v140 = vrot.slane %v118, %v139
  %v141 = vmul.f32 %v136, %v122
  %v142 = vmul.f32 %v140, %v122
  %v143 = vadd.f32 %v115, %v117
  %v144 = vadd.f32 %v116, %v118
  %v145 = vadd.f32 %v120, %v122
  %v146 = vlaneseq
  %v147 = vshrl.u32 %v146, 7
  %v148 = vsub.s32 0, %v147
  %v149 = vrot.slane %v143, %v148
  %v150 = vlaneseq
  %v151 = vshrl.u32 %v150, 7
  %v152 = vsub.s32 0, %v151
  %v153 = vrot.slane %v144, %v152
  %v154 = vmul.f32 %v149, %v145
  %v155 = vmul.f32 %v153, %v145
  %v156 = vsub.f32 %v131, %v141
  %v157 = vsub.f32 %v132, %v142
  %v158 = vsub.f32 %v154, %v131
  %v159 = vsub.f32 %v155, %v132
  %v160 = vsub.f32 %v158, %v141
  %v161 = vsub.f32 %v159, %v142
  %v162 = vadd.f32 %v111, %v156
  %v163 = vadd.f32 %v112, %v157
  %v164 = vadd.f32 %v113, %v160
  %v165 = vadd.f32 %v114, %v161
  %v166 = vld [vmem:[%s0 + $0x3] sm:$0x1]
  %v167 = vld [vmem:[%s0 + $0x23] sm:$0x1]
  %v168 = vld [vmem:[%s1 + $0x3] sm:$0x1]
  %v169 = vld [vmem:[%s1 + $0x23] sm:$0x1]
  %s170 = scalar_lea.vmem %s2, 12
  %v171 = vld [vmem:[%s170] sm:$0xf]
  %s172 = scalar_lea.vmem %s3, 12
  %v173 = vld [vmem:[%s172] sm:$0xf]
  %v174 = vlaneseq
  %v175 = vshrl.u32 %v174, 7
  %v176 = vsub.s32 0, %v175
  %v177 = vrot.slane %v166, %v176
  %v178 = vlaneseq
  %v179 = vshrl.u32 %v178, 7
  %v180 = vsub.s32 0, %v179
  %v181 = vrot.slane %v167, %v180
  %v182 = vmul.f32 %v177, %v171
  %v183 = vmul.f32 %v181, %v171
  %v184 = vlaneseq
  %v185 = vshrl.u32 %v184, 7
  %v186 = vsub.s32 0, %v185
  %v187 = vrot.slane %v168, %v186
  %v188 = vlaneseq
  %v189 = vshrl.u32 %v188, 7
  %v190 = vsub.s32 0, %v189
  %v191 = vrot.slane %v169, %v190
  %v192 = vmul.f32 %v187, %v173
  %v193 = vmul.f32 %v191, %v173
  %v194 = vadd.f32 %v166, %v168
  %v195 = vadd.f32 %v167, %v169
  %v196 = vadd.f32 %v171, %v173
  %v197 = vlaneseq
  %v198 = vshrl.u32 %v197, 7
  %v199 = vsub.s32 0, %v198
  %v200 = vrot.slane %v194, %v199
  %v201 = vlaneseq
  %v202 = vshrl.u32 %v201, 7
  %v203 = vsub.s32 0, %v202
  %v204 = vrot.slane %v195, %v203
  %v205 = vmul.f32 %v200, %v196
  %v206 = vmul.f32 %v204, %v196
  %v207 = vsub.f32 %v182, %v192
  %v208 = vsub.f32 %v183, %v193
  %v209 = vsub.f32 %v205, %v182
  %v210 = vsub.f32 %v206, %v183
  %v211 = vsub.f32 %v209, %v192
  %v212 = vsub.f32 %v210, %v193
  %v213 = vadd.f32 %v162, %v207
  %v214 = vadd.f32 %v163, %v208
  %v215 = vadd.f32 %v164, %v211
  %v216 = vadd.f32 %v165, %v212
  %v217 = vld [vmem:[%s0 + $0x4] sm:$0x1]
  %v218 = vld [vmem:[%s0 + $0x24] sm:$0x1]
  %v219 = vld [vmem:[%s1 + $0x4] sm:$0x1]
  %v220 = vld [vmem:[%s1 + $0x24] sm:$0x1]
  %s221 = scalar_lea.vmem %s2, 16
  %v222 = vld [vmem:[%s221] sm:$0xf]
  %s223 = scalar_lea.vmem %s3, 16
  %v224 = vld [vmem:[%s223] sm:$0xf]
  %v225 = vlaneseq
  %v226 = vshrl.u32 %v225, 7
  %v227 = vsub.s32 0, %v226
  %v228 = vrot.slane %v217, %v227
  %v229 = vlaneseq
  %v230 = vshrl.u32 %v229, 7
  %v231 = vsub.s32 0, %v230
  %v232 = vrot.slane %v218, %v231
  %v233 = vmul.f32 %v228, %v222
  %v234 = vmul.f32 %v232, %v222
  %v235 = vlaneseq
  %v236 = vshrl.u32 %v235, 7
  %v237 = vsub.s32 0, %v236
  %v238 = vrot.slane %v219, %v237
  %v239 = vlaneseq
  %v240 = vshrl.u32 %v239, 7
  %v241 = vsub.s32 0, %v240
  %v242 = vrot.slane %v220, %v241
  %v243 = vmul.f32 %v238, %v224
  %v244 = vmul.f32 %v242, %v224
  %v245 = vadd.f32 %v217, %v219
  %v246 = vadd.f32 %v218, %v220
  %v247 = vadd.f32 %v222, %v224
  %v248 = vlaneseq
  %v249 = vshrl.u32 %v248, 7
  %v250 = vsub.s32 0, %v249
  %v251 = vrot.slane %v245, %v250
  %v252 = vlaneseq
  %v253 = vshrl.u32 %v252, 7
  %v254 = vsub.s32 0, %v253
  %v255 = vrot.slane %v246, %v254
  %v256 = vmul.f32 %v251, %v247
  %v257 = vmul.f32 %v255, %v247
  %v258 = vsub.f32 %v233, %v243
  %v259 = vsub.f32 %v234, %v244
  %v260 = vsub.f32 %v256, %v233
  %v261 = vsub.f32 %v257, %v234
  %v262 = vsub.f32 %v260, %v243
  %v263 = vsub.f32 %v261, %v244
  %v264 = vadd.f32 %v213, %v258
  %v265 = vadd.f32 %v214, %v259
  %v266 = vadd.f32 %v215, %v262
  %v267 = vadd.f32 %v216, %v263
  %v268 = vld [vmem:[%s0 + $0x5] sm:$0x1]
  %v269 = vld [vmem:[%s0 + $0x25] sm:$0x1]
  %v270 = vld [vmem:[%s1 + $0x5] sm:$0x1]
  %v271 = vld [vmem:[%s1 + $0x25] sm:$0x1]
  %s272 = scalar_lea.vmem %s2, 20
  %v273 = vld [vmem:[%s272] sm:$0xf]
  %s274 = scalar_lea.vmem %s3, 20
  %v275 = vld [vmem:[%s274] sm:$0xf]
  %v276 = vlaneseq
  %v277 = vshrl.u32 %v276, 7
  %v278 = vsub.s32 0, %v277
  %v279 = vrot.slane %v268, %v278
  %v280 = vlaneseq
  %v281 = vshrl.u32 %v280, 7
  %v282 = vsub.s32 0, %v281
  %v283 = vrot.slane %v269, %v282
  %v284 = vmul.f32 %v279, %v273
  %v285 = vmul.f32 %v283, %v273
  %v286 = vlaneseq
  %v287 = vshrl.u32 %v286, 7
  %v288 = vsub.s32 0, %v287
  %v289 = vrot.slane %v270, %v288
  %v290 = vlaneseq
  %v291 = vshrl.u32 %v290, 7
  %v292 = vsub.s32 0, %v291
  %v293 = vrot.slane %v271, %v292
  %v294 = vmul.f32 %v289, %v275
  %v295 = vmul.f32 %v293, %v275
  %v296 = vadd.f32 %v268, %v270
  %v297 = vadd.f32 %v269, %v271
  %v298 = vadd.f32 %v273, %v275
  %v299 = vlaneseq
  %v300 = vshrl.u32 %v299, 7
  %v301 = vsub.s32 0, %v300
  %v302 = vrot.slane %v296, %v301
  %v303 = vlaneseq
  %v304 = vshrl.u32 %v303, 7
  %v305 = vsub.s32 0, %v304
  %v306 = vrot.slane %v297, %v305
  %v307 = vmul.f32 %v302, %v298
  %v308 = vmul.f32 %v306, %v298
  %v309 = vsub.f32 %v284, %v294
  %v310 = vsub.f32 %v285, %v295
  %v311 = vsub.f32 %v307, %v284
  %v312 = vsub.f32 %v308, %v285
  %v313 = vsub.f32 %v311, %v294
  %v314 = vsub.f32 %v312, %v295
  %v315 = vadd.f32 %v264, %v309
  %v316 = vadd.f32 %v265, %v310
  %v317 = vadd.f32 %v266, %v313
  %v318 = vadd.f32 %v267, %v314
  %v319 = vld [vmem:[%s0 + $0x6] sm:$0x1]
  %v320 = vld [vmem:[%s0 + $0x26] sm:$0x1]
  %v321 = vld [vmem:[%s1 + $0x6] sm:$0x1]
  %v322 = vld [vmem:[%s1 + $0x26] sm:$0x1]
  %s323 = scalar_lea.vmem %s2, 24
  %v324 = vld [vmem:[%s323] sm:$0xf]
  %s325 = scalar_lea.vmem %s3, 24
  %v326 = vld [vmem:[%s325] sm:$0xf]
  %v327 = vlaneseq
  %v328 = vshrl.u32 %v327, 7
  %v329 = vsub.s32 0, %v328
  %v330 = vrot.slane %v319, %v329
  %v331 = vlaneseq
  %v332 = vshrl.u32 %v331, 7
  %v333 = vsub.s32 0, %v332
  %v334 = vrot.slane %v320, %v333
  %v335 = vmul.f32 %v330, %v324
  %v336 = vmul.f32 %v334, %v324
  %v337 = vlaneseq
  %v338 = vshrl.u32 %v337, 7
  %v339 = vsub.s32 0, %v338
  %v340 = vrot.slane %v321, %v339
  %v341 = vlaneseq
  %v342 = vshrl.u32 %v341, 7
  %v343 = vsub.s32 0, %v342
  %v344 = vrot.slane %v322, %v343
  %v345 = vmul.f32 %v340, %v326
  %v346 = vmul.f32 %v344, %v326
  %v347 = vadd.f32 %v319, %v321
  %v348 = vadd.f32 %v320, %v322
  %v349 = vadd.f32 %v324, %v326
  %v350 = vlaneseq
  %v351 = vshrl.u32 %v350, 7
  %v352 = vsub.s32 0, %v351
  %v353 = vrot.slane %v347, %v352
  %v354 = vlaneseq
  %v355 = vshrl.u32 %v354, 7
  %v356 = vsub.s32 0, %v355
  %v357 = vrot.slane %v348, %v356
  %v358 = vmul.f32 %v353, %v349
  %v359 = vmul.f32 %v357, %v349
  %v360 = vsub.f32 %v335, %v345
  %v361 = vsub.f32 %v336, %v346
  %v362 = vsub.f32 %v358, %v335
  %v363 = vsub.f32 %v359, %v336
  %v364 = vsub.f32 %v362, %v345
  %v365 = vsub.f32 %v363, %v346
  %v366 = vadd.f32 %v315, %v360
  %v367 = vadd.f32 %v316, %v361
  %v368 = vadd.f32 %v317, %v364
  %v369 = vadd.f32 %v318, %v365
  %v370 = vld [vmem:[%s0 + $0x7] sm:$0x1]
  %v371 = vld [vmem:[%s0 + $0x27] sm:$0x1]
  %v372 = vld [vmem:[%s1 + $0x7] sm:$0x1]
  %v373 = vld [vmem:[%s1 + $0x27] sm:$0x1]
  %s374 = scalar_lea.vmem %s2, 28
  %v375 = vld [vmem:[%s374] sm:$0xf]
  %s376 = scalar_lea.vmem %s3, 28
  %v377 = vld [vmem:[%s376] sm:$0xf]
  %v378 = vlaneseq
  %v379 = vshrl.u32 %v378, 7
  %v380 = vsub.s32 0, %v379
  %v381 = vrot.slane %v370, %v380
  %v382 = vlaneseq
  %v383 = vshrl.u32 %v382, 7
  %v384 = vsub.s32 0, %v383
  %v385 = vrot.slane %v371, %v384
  %v386 = vmul.f32 %v381, %v375
  %v387 = vmul.f32 %v385, %v375
  %v388 = vlaneseq
  %v389 = vshrl.u32 %v388, 7
  %v390 = vsub.s32 0, %v389
  %v391 = vrot.slane %v372, %v390
  %v392 = vlaneseq
  %v393 = vshrl.u32 %v392, 7
  %v394 = vsub.s32 0, %v393
  %v395 = vrot.slane %v373, %v394
  %v396 = vmul.f32 %v391, %v377
  %v397 = vmul.f32 %v395, %v377
  %v398 = vadd.f32 %v370, %v372
  %v399 = vadd.f32 %v371, %v373
  %v400 = vadd.f32 %v375, %v377
  %v401 = vlaneseq
  %v402 = vshrl.u32 %v401, 7
  %v403 = vsub.s32 0, %v402
  %v404 = vrot.slane %v398, %v403
  %v405 = vlaneseq
  %v406 = vshrl.u32 %v405, 7
  %v407 = vsub.s32 0, %v406
  %v408 = vrot.slane %v399, %v407
  %v409 = vmul.f32 %v404, %v400
  %v410 = vmul.f32 %v408, %v400
  %v411 = vsub.f32 %v386, %v396
  %v412 = vsub.f32 %v387, %v397
  %v413 = vsub.f32 %v409, %v386
  %v414 = vsub.f32 %v410, %v387
  %v415 = vsub.f32 %v413, %v396
  %v416 = vsub.f32 %v414, %v397
  %v417 = vadd.f32 %v366, %v411
  %v418 = vadd.f32 %v367, %v412
  %v419 = vadd.f32 %v368, %v415
  %v420 = vadd.f32 %v369, %v416
  %v421 = vld [vmem:[%s0 + $0x8] sm:$0x1]
  %v422 = vld [vmem:[%s0 + $0x28] sm:$0x1]
  %v423 = vld [vmem:[%s1 + $0x8] sm:$0x1]
  %v424 = vld [vmem:[%s1 + $0x28] sm:$0x1]
  %s425 = scalar_lea.vmem %s2, 32
  %v426 = vld [vmem:[%s425] sm:$0xf]
  %s427 = scalar_lea.vmem %s3, 32
  %v428 = vld [vmem:[%s427] sm:$0xf]
  %v429 = vlaneseq
  %v430 = vshrl.u32 %v429, 7
  %v431 = vsub.s32 0, %v430
  %v432 = vrot.slane %v421, %v431
  %v433 = vlaneseq
  %v434 = vshrl.u32 %v433, 7
  %v435 = vsub.s32 0, %v434
  %v436 = vrot.slane %v422, %v435
  %v437 = vmul.f32 %v432, %v426
  %v438 = vmul.f32 %v436, %v426
  %v439 = vlaneseq
  %v440 = vshrl.u32 %v439, 7
  %v441 = vsub.s32 0, %v440
  %v442 = vrot.slane %v423, %v441
  %v443 = vlaneseq
  %v444 = vshrl.u32 %v443, 7
  %v445 = vsub.s32 0, %v444
  %v446 = vrot.slane %v424, %v445
  %v447 = vmul.f32 %v442, %v428
  %v448 = vmul.f32 %v446, %v428
  %v449 = vadd.f32 %v421, %v423
  %v450 = vadd.f32 %v422, %v424
  %v451 = vadd.f32 %v426, %v428
  %v452 = vlaneseq
  %v453 = vshrl.u32 %v452, 7
  %v454 = vsub.s32 0, %v453
  %v455 = vrot.slane %v449, %v454
  %v456 = vlaneseq
  %v457 = vshrl.u32 %v456, 7
  %v458 = vsub.s32 0, %v457
  %v459 = vrot.slane %v450, %v458
  %v460 = vmul.f32 %v455, %v451
  %v461 = vmul.f32 %v459, %v451
  %v462 = vsub.f32 %v437, %v447
  %v463 = vsub.f32 %v438, %v448
  %v464 = vsub.f32 %v460, %v437
  %v465 = vsub.f32 %v461, %v438
  %v466 = vsub.f32 %v464, %v447
  %v467 = vsub.f32 %v465, %v448
  %v468 = vadd.f32 %v417, %v462
  %v469 = vadd.f32 %v418, %v463
  %v470 = vadd.f32 %v419, %v466
  %v471 = vadd.f32 %v420, %v467
  %v472 = vld [vmem:[%s0 + $0x9] sm:$0x1]
  %v473 = vld [vmem:[%s0 + $0x29] sm:$0x1]
  %v474 = vld [vmem:[%s1 + $0x9] sm:$0x1]
  %v475 = vld [vmem:[%s1 + $0x29] sm:$0x1]
  %s476 = scalar_lea.vmem %s2, 36
  %v477 = vld [vmem:[%s476] sm:$0xf]
  %s478 = scalar_lea.vmem %s3, 36
  %v479 = vld [vmem:[%s478] sm:$0xf]
  %v480 = vlaneseq
  %v481 = vshrl.u32 %v480, 7
  %v482 = vsub.s32 0, %v481
  %v483 = vrot.slane %v472, %v482
  %v484 = vlaneseq
  %v485 = vshrl.u32 %v484, 7
  %v486 = vsub.s32 0, %v485
  %v487 = vrot.slane %v473, %v486
  %v488 = vmul.f32 %v483, %v477
  %v489 = vmul.f32 %v487, %v477
  %v490 = vlaneseq
  %v491 = vshrl.u32 %v490, 7
  %v492 = vsub.s32 0, %v491
  %v493 = vrot.slane %v474, %v492
  %v494 = vlaneseq
  %v495 = vshrl.u32 %v494, 7
  %v496 = vsub.s32 0, %v495
  %v497 = vrot.slane %v475, %v496
  %v498 = vmul.f32 %v493, %v479
  %v499 = vmul.f32 %v497, %v479
  %v500 = vadd.f32 %v472, %v474
  %v501 = vadd.f32 %v473, %v475
  %v502 = vadd.f32 %v477, %v479
  %v503 = vlaneseq
  %v504 = vshrl.u32 %v503, 7
  %v505 = vsub.s32 0, %v504
  %v506 = vrot.slane %v500, %v505
  %v507 = vlaneseq
  %v508 = vshrl.u32 %v507, 7
  %v509 = vsub.s32 0, %v508
  %v510 = vrot.slane %v501, %v509
  %v511 = vmul.f32 %v506, %v502
  %v512 = vmul.f32 %v510, %v502
  %v513 = vsub.f32 %v488, %v498
  %v514 = vsub.f32 %v489, %v499
  %v515 = vsub.f32 %v511, %v488
  %v516 = vsub.f32 %v512, %v489
  %v517 = vsub.f32 %v515, %v498
  %v518 = vsub.f32 %v516, %v499
  %v519 = vadd.f32 %v468, %v513
  %v520 = vadd.f32 %v469, %v514
  %v521 = vadd.f32 %v470, %v517
  %v522 = vadd.f32 %v471, %v518
  %v523 = vld [vmem:[%s0 + $0xa] sm:$0x1]
  %v524 = vld [vmem:[%s0 + $0x2a] sm:$0x1]
  %v525 = vld [vmem:[%s1 + $0xa] sm:$0x1]
  %v526 = vld [vmem:[%s1 + $0x2a] sm:$0x1]
  %s527 = scalar_lea.vmem %s2, 40
  %v528 = vld [vmem:[%s527] sm:$0xf]
  %s529 = scalar_lea.vmem %s3, 40
  %v530 = vld [vmem:[%s529] sm:$0xf]
  %v531 = vlaneseq
  %v532 = vshrl.u32 %v531, 7
  %v533 = vsub.s32 0, %v532
  %v534 = vrot.slane %v523, %v533
  %v535 = vlaneseq
  %v536 = vshrl.u32 %v535, 7
  %v537 = vsub.s32 0, %v536
  %v538 = vrot.slane %v524, %v537
  %v539 = vmul.f32 %v534, %v528
  %v540 = vmul.f32 %v538, %v528
  %v541 = vlaneseq
  %v542 = vshrl.u32 %v541, 7
  %v543 = vsub.s32 0, %v542
  %v544 = vrot.slane %v525, %v543
  %v545 = vlaneseq
  %v546 = vshrl.u32 %v545, 7
  %v547 = vsub.s32 0, %v546
  %v548 = vrot.slane %v526, %v547
  %v549 = vmul.f32 %v544, %v530
  %v550 = vmul.f32 %v548, %v530
  %v551 = vadd.f32 %v523, %v525
  %v552 = vadd.f32 %v524, %v526
  %v553 = vadd.f32 %v528, %v530
  %v554 = vlaneseq
  %v555 = vshrl.u32 %v554, 7
  %v556 = vsub.s32 0, %v555
  %v557 = vrot.slane %v551, %v556
  %v558 = vlaneseq
  %v559 = vshrl.u32 %v558, 7
  %v560 = vsub.s32 0, %v559
  %v561 = vrot.slane %v552, %v560
  %v562 = vmul.f32 %v557, %v553
  %v563 = vmul.f32 %v561, %v553
  %v564 = vsub.f32 %v539, %v549
  %v565 = vsub.f32 %v540, %v550
  %v566 = vsub.f32 %v562, %v539
  %v567 = vsub.f32 %v563, %v540
  %v568 = vsub.f32 %v566, %v549
  %v569 = vsub.f32 %v567, %v550
  %v570 = vadd.f32 %v519, %v564
  %v571 = vadd.f32 %v520, %v565
  %v572 = vadd.f32 %v521, %v568
  %v573 = vadd.f32 %v522, %v569
  %v574 = vld [vmem:[%s0 + $0xb] sm:$0x1]
  %v575 = vld [vmem:[%s0 + $0x2b] sm:$0x1]
  %v576 = vld [vmem:[%s1 + $0xb] sm:$0x1]
  %v577 = vld [vmem:[%s1 + $0x2b] sm:$0x1]
  %s578 = scalar_lea.vmem %s2, 44
  %v579 = vld [vmem:[%s578] sm:$0xf]
  %s580 = scalar_lea.vmem %s3, 44
  %v581 = vld [vmem:[%s580] sm:$0xf]
  %v582 = vlaneseq
  %v583 = vshrl.u32 %v582, 7
  %v584 = vsub.s32 0, %v583
  %v585 = vrot.slane %v574, %v584
  %v586 = vlaneseq
  %v587 = vshrl.u32 %v586, 7
  %v588 = vsub.s32 0, %v587
  %v589 = vrot.slane %v575, %v588
  %v590 = vmul.f32 %v585, %v579
  %v591 = vmul.f32 %v589, %v579
  %v592 = vlaneseq
  %v593 = vshrl.u32 %v592, 7
  %v594 = vsub.s32 0, %v593
  %v595 = vrot.slane %v576, %v594
  %v596 = vlaneseq
  %v597 = vshrl.u32 %v596, 7
  %v598 = vsub.s32 0, %v597
  %v599 = vrot.slane %v577, %v598
  %v600 = vmul.f32 %v595, %v581
  %v601 = vmul.f32 %v599, %v581
  %v602 = vadd.f32 %v574, %v576
  %v603 = vadd.f32 %v575, %v577
  %v604 = vadd.f32 %v579, %v581
  %v605 = vlaneseq
  %v606 = vshrl.u32 %v605, 7
  %v607 = vsub.s32 0, %v606
  %v608 = vrot.slane %v602, %v607
  %v609 = vlaneseq
  %v610 = vshrl.u32 %v609, 7
  %v611 = vsub.s32 0, %v610
  %v612 = vrot.slane %v603, %v611
  %v613 = vmul.f32 %v608, %v604
  %v614 = vmul.f32 %v612, %v604
  %v615 = vsub.f32 %v590, %v600
  %v616 = vsub.f32 %v591, %v601
  %v617 = vsub.f32 %v613, %v590
  %v618 = vsub.f32 %v614, %v591
  %v619 = vsub.f32 %v617, %v600
  %v620 = vsub.f32 %v618, %v601
  %v621 = vadd.f32 %v570, %v615
  %v622 = vadd.f32 %v571, %v616
  %v623 = vadd.f32 %v572, %v619
  %v624 = vadd.f32 %v573, %v620
  %v625 = vld [vmem:[%s0 + $0xc] sm:$0x1]
  %v626 = vld [vmem:[%s0 + $0x2c] sm:$0x1]
  %v627 = vld [vmem:[%s1 + $0xc] sm:$0x1]
  %v628 = vld [vmem:[%s1 + $0x2c] sm:$0x1]
  %s629 = scalar_lea.vmem %s2, 48
  %v630 = vld [vmem:[%s629] sm:$0xf]
  %s631 = scalar_lea.vmem %s3, 48
  %v632 = vld [vmem:[%s631] sm:$0xf]
  %v633 = vlaneseq
  %v634 = vshrl.u32 %v633, 7
  %v635 = vsub.s32 0, %v634
  %v636 = vrot.slane %v625, %v635
  %v637 = vlaneseq
  %v638 = vshrl.u32 %v637, 7
  %v639 = vsub.s32 0, %v638
  %v640 = vrot.slane %v626, %v639
  %v641 = vmul.f32 %v636, %v630
  %v642 = vmul.f32 %v640, %v630
  %v643 = vlaneseq
  %v644 = vshrl.u32 %v643, 7
  %v645 = vsub.s32 0, %v644
  %v646 = vrot.slane %v627, %v645
  %v647 = vlaneseq
  %v648 = vshrl.u32 %v647, 7
  %v649 = vsub.s32 0, %v648
  %v650 = vrot.slane %v628, %v649
  %v651 = vmul.f32 %v646, %v632
  %v652 = vmul.f32 %v650, %v632
  %v653 = vadd.f32 %v625, %v627
  %v654 = vadd.f32 %v626, %v628
  %v655 = vadd.f32 %v630, %v632
  %v656 = vlaneseq
  %v657 = vshrl.u32 %v656, 7
  %v658 = vsub.s32 0, %v657
  %v659 = vrot.slane %v653, %v658
  %v660 = vlaneseq
  %v661 = vshrl.u32 %v660, 7
  %v662 = vsub.s32 0, %v661
  %v663 = vrot.slane %v654, %v662
  %v664 = vmul.f32 %v659, %v655
  %v665 = vmul.f32 %v663, %v655
  %v666 = vsub.f32 %v641, %v651
  %v667 = vsub.f32 %v642, %v652
  %v668 = vsub.f32 %v664, %v641
  %v669 = vsub.f32 %v665, %v642
  %v670 = vsub.f32 %v668, %v651
  %v671 = vsub.f32 %v669, %v652
  %v672 = vadd.f32 %v621, %v666
  %v673 = vadd.f32 %v622, %v667
  %v674 = vadd.f32 %v623, %v670
  %v675 = vadd.f32 %v624, %v671
  %v676 = vld [vmem:[%s0 + $0xd] sm:$0x1]
  %v677 = vld [vmem:[%s0 + $0x2d] sm:$0x1]
  %v678 = vld [vmem:[%s1 + $0xd] sm:$0x1]
  %v679 = vld [vmem:[%s1 + $0x2d] sm:$0x1]
  %s680 = scalar_lea.vmem %s2, 52
  %v681 = vld [vmem:[%s680] sm:$0xf]
  %s682 = scalar_lea.vmem %s3, 52
  %v683 = vld [vmem:[%s682] sm:$0xf]
  %v684 = vlaneseq
  %v685 = vshrl.u32 %v684, 7
  %v686 = vsub.s32 0, %v685
  %v687 = vrot.slane %v676, %v686
  %v688 = vlaneseq
  %v689 = vshrl.u32 %v688, 7
  %v690 = vsub.s32 0, %v689
  %v691 = vrot.slane %v677, %v690
  %v692 = vmul.f32 %v687, %v681
  %v693 = vmul.f32 %v691, %v681
  %v694 = vlaneseq
  %v695 = vshrl.u32 %v694, 7
  %v696 = vsub.s32 0, %v695
  %v697 = vrot.slane %v678, %v696
  %v698 = vlaneseq
  %v699 = vshrl.u32 %v698, 7
  %v700 = vsub.s32 0, %v699
  %v701 = vrot.slane %v679, %v700
  %v702 = vmul.f32 %v697, %v683
  %v703 = vmul.f32 %v701, %v683
  %v704 = vadd.f32 %v676, %v678
  %v705 = vadd.f32 %v677, %v679
  %v706 = vadd.f32 %v681, %v683
  %v707 = vlaneseq
  %v708 = vshrl.u32 %v707, 7
  %v709 = vsub.s32 0, %v708
  %v710 = vrot.slane %v704, %v709
  %v711 = vlaneseq
  %v712 = vshrl.u32 %v711, 7
  %v713 = vsub.s32 0, %v712
  %v714 = vrot.slane %v705, %v713
  %v715 = vmul.f32 %v710, %v706
  %v716 = vmul.f32 %v714, %v706
  %v717 = vsub.f32 %v692, %v702
  %v718 = vsub.f32 %v693, %v703
  %v719 = vsub.f32 %v715, %v692
  %v720 = vsub.f32 %v716, %v693
  %v721 = vsub.f32 %v719, %v702
  %v722 = vsub.f32 %v720, %v703
  %v723 = vadd.f32 %v672, %v717
  %v724 = vadd.f32 %v673, %v718
  %v725 = vadd.f32 %v674, %v721
  %v726 = vadd.f32 %v675, %v722
  %v727 = vld [vmem:[%s0 + $0xe] sm:$0x1]
  %v728 = vld [vmem:[%s0 + $0x2e] sm:$0x1]
  %v729 = vld [vmem:[%s1 + $0xe] sm:$0x1]
  %v730 = vld [vmem:[%s1 + $0x2e] sm:$0x1]
  %s731 = scalar_lea.vmem %s2, 56
  %v732 = vld [vmem:[%s731] sm:$0xf]
  %s733 = scalar_lea.vmem %s3, 56
  %v734 = vld [vmem:[%s733] sm:$0xf]
  %v735 = vlaneseq
  %v736 = vshrl.u32 %v735, 7
  %v737 = vsub.s32 0, %v736
  %v738 = vrot.slane %v727, %v737
  %v739 = vlaneseq
  %v740 = vshrl.u32 %v739, 7
  %v741 = vsub.s32 0, %v740
  %v742 = vrot.slane %v728, %v741
  %v743 = vmul.f32 %v738, %v732
  %v744 = vmul.f32 %v742, %v732
  %v745 = vlaneseq
  %v746 = vshrl.u32 %v745, 7
  %v747 = vsub.s32 0, %v746
  %v748 = vrot.slane %v729, %v747
  %v749 = vlaneseq
  %v750 = vshrl.u32 %v749, 7
  %v751 = vsub.s32 0, %v750
  %v752 = vrot.slane %v730, %v751
  %v753 = vmul.f32 %v748, %v734
  %v754 = vmul.f32 %v752, %v734
  %v755 = vadd.f32 %v727, %v729
  %v756 = vadd.f32 %v728, %v730
  %v757 = vadd.f32 %v732, %v734
  %v758 = vlaneseq
  %v759 = vshrl.u32 %v758, 7
  %v760 = vsub.s32 0, %v759
  %v761 = vrot.slane %v755, %v760
  %v762 = vlaneseq
  %v763 = vshrl.u32 %v762, 7
  %v764 = vsub.s32 0, %v763
  %v765 = vrot.slane %v756, %v764
  %v766 = vmul.f32 %v761, %v757
  %v767 = vmul.f32 %v765, %v757
  %v768 = vsub.f32 %v743, %v753
  %v769 = vsub.f32 %v744, %v754
  %v770 = vsub.f32 %v766, %v743
  %v771 = vsub.f32 %v767, %v744
  %v772 = vsub.f32 %v770, %v753
  %v773 = vsub.f32 %v771, %v754
  %v774 = vadd.f32 %v723, %v768
  %v775 = vadd.f32 %v724, %v769
  %v776 = vadd.f32 %v725, %v772
  %v777 = vadd.f32 %v726, %v773
  %v778 = vld [vmem:[%s0 + $0xf] sm:$0x1]
  %v779 = vld [vmem:[%s0 + $0x2f] sm:$0x1]
  %v780 = vld [vmem:[%s1 + $0xf] sm:$0x1]
  %v781 = vld [vmem:[%s1 + $0x2f] sm:$0x1]
  %s782 = scalar_lea.vmem %s2, 60
  %v783 = vld [vmem:[%s782] sm:$0xf]
  %s784 = scalar_lea.vmem %s3, 60
  %v785 = vld [vmem:[%s784] sm:$0xf]
  %v786 = vlaneseq
  %v787 = vshrl.u32 %v786, 7
  %v788 = vsub.s32 0, %v787
  %v789 = vrot.slane %v778, %v788
  %v790 = vlaneseq
  %v791 = vshrl.u32 %v790, 7
  %v792 = vsub.s32 0, %v791
  %v793 = vrot.slane %v779, %v792
  %v794 = vmul.f32 %v789, %v783
  %v795 = vmul.f32 %v793, %v783
  %v796 = vlaneseq
  %v797 = vshrl.u32 %v796, 7
  %v798 = vsub.s32 0, %v797
  %v799 = vrot.slane %v780, %v798
  %v800 = vlaneseq
  %v801 = vshrl.u32 %v800, 7
  %v802 = vsub.s32 0, %v801
  %v803 = vrot.slane %v781, %v802
  %v804 = vmul.f32 %v799, %v785
  %v805 = vmul.f32 %v803, %v785
  %v806 = vadd.f32 %v778, %v780
  %v807 = vadd.f32 %v779, %v781
  %v808 = vadd.f32 %v783, %v785
  %v809 = vlaneseq
  %v810 = vshrl.u32 %v809, 7
  %v811 = vsub.s32 0, %v810
  %v812 = vrot.slane %v806, %v811
  %v813 = vlaneseq
  %v814 = vshrl.u32 %v813, 7
  %v815 = vsub.s32 0, %v814
  %v816 = vrot.slane %v807, %v815
  %v817 = vmul.f32 %v812, %v808
  %v818 = vmul.f32 %v816, %v808
  %v819 = vsub.f32 %v794, %v804
  %v820 = vsub.f32 %v795, %v805
  %v821 = vsub.f32 %v817, %v794
  %v822 = vsub.f32 %v818, %v795
  %v823 = vsub.f32 %v821, %v804
  %v824 = vsub.f32 %v822, %v805
  %v825 = vadd.f32 %v774, %v819
  %v826 = vadd.f32 %v775, %v820
  %v827 = vadd.f32 %v776, %v823
  %v828 = vadd.f32 %v777, %v824
  %v829 = vld [vmem:[%s0 + $0x10] sm:$0x1]
  %v830 = vld [vmem:[%s0 + $0x30] sm:$0x1]
  %v831 = vld [vmem:[%s1 + $0x10] sm:$0x1]
  %v832 = vld [vmem:[%s1 + $0x30] sm:$0x1]
  %s833 = scalar_lea.vmem %s2, 64
  %v834 = vld [vmem:[%s833] sm:$0xf]
  %s835 = scalar_lea.vmem %s3, 64
  %v836 = vld [vmem:[%s835] sm:$0xf]
  %v837 = vlaneseq
  %v838 = vshrl.u32 %v837, 7
  %v839 = vsub.s32 0, %v838
  %v840 = vrot.slane %v829, %v839
  %v841 = vlaneseq
  %v842 = vshrl.u32 %v841, 7
  %v843 = vsub.s32 0, %v842
  %v844 = vrot.slane %v830, %v843
  %v845 = vmul.f32 %v840, %v834
  %v846 = vmul.f32 %v844, %v834
  %v847 = vlaneseq
  %v848 = vshrl.u32 %v847, 7
  %v849 = vsub.s32 0, %v848
  %v850 = vrot.slane %v831, %v849
  %v851 = vlaneseq
  %v852 = vshrl.u32 %v851, 7
  %v853 = vsub.s32 0, %v852
  %v854 = vrot.slane %v832, %v853
  %v855 = vmul.f32 %v850, %v836
  %v856 = vmul.f32 %v854, %v836
  %v857 = vadd.f32 %v829, %v831
  %v858 = vadd.f32 %v830, %v832
  %v859 = vadd.f32 %v834, %v836
  %v860 = vlaneseq
  %v861 = vshrl.u32 %v860, 7
  %v862 = vsub.s32 0, %v861
  %v863 = vrot.slane %v857, %v862
  %v864 = vlaneseq
  %v865 = vshrl.u32 %v864, 7
  %v866 = vsub.s32 0, %v865
  %v867 = vrot.slane %v858, %v866
  %v868 = vmul.f32 %v863, %v859
  %v869 = vmul.f32 %v867, %v859
  %v870 = vsub.f32 %v845, %v855
  %v871 = vsub.f32 %v846, %v856
  %v872 = vsub.f32 %v868, %v845
  %v873 = vsub.f32 %v869, %v846
  %v874 = vsub.f32 %v872, %v855
  %v875 = vsub.f32 %v873, %v856
  %v876 = vadd.f32 %v825, %v870
  %v877 = vadd.f32 %v826, %v871
  %v878 = vadd.f32 %v827, %v874
  %v879 = vadd.f32 %v828, %v875
  %v880 = vld [vmem:[%s0 + $0x11] sm:$0x1]
  %v881 = vld [vmem:[%s0 + $0x31] sm:$0x1]
  %v882 = vld [vmem:[%s1 + $0x11] sm:$0x1]
  %v883 = vld [vmem:[%s1 + $0x31] sm:$0x1]
  %s884 = scalar_lea.vmem %s2, 68
  %v885 = vld [vmem:[%s884] sm:$0xf]
  %s886 = scalar_lea.vmem %s3, 68
  %v887 = vld [vmem:[%s886] sm:$0xf]
  %v888 = vlaneseq
  %v889 = vshrl.u32 %v888, 7
  %v890 = vsub.s32 0, %v889
  %v891 = vrot.slane %v880, %v890
  %v892 = vlaneseq
  %v893 = vshrl.u32 %v892, 7
  %v894 = vsub.s32 0, %v893
  %v895 = vrot.slane %v881, %v894
  %v896 = vmul.f32 %v891, %v885
  %v897 = vmul.f32 %v895, %v885
  %v898 = vlaneseq
  %v899 = vshrl.u32 %v898, 7
  %v900 = vsub.s32 0, %v899
  %v901 = vrot.slane %v882, %v900
  %v902 = vlaneseq
  %v903 = vshrl.u32 %v902, 7
  %v904 = vsub.s32 0, %v903
  %v905 = vrot.slane %v883, %v904
  %v906 = vmul.f32 %v901, %v887
  %v907 = vmul.f32 %v905, %v887
  %v908 = vadd.f32 %v880, %v882
  %v909 = vadd.f32 %v881, %v883
  %v910 = vadd.f32 %v885, %v887
  %v911 = vlaneseq
  %v912 = vshrl.u32 %v911, 7
  %v913 = vsub.s32 0, %v912
  %v914 = vrot.slane %v908, %v913
  %v915 = vlaneseq
  %v916 = vshrl.u32 %v915, 7
  %v917 = vsub.s32 0, %v916
  %v918 = vrot.slane %v909, %v917
  %v919 = vmul.f32 %v914, %v910
  %v920 = vmul.f32 %v918, %v910
  %v921 = vsub.f32 %v896, %v906
  %v922 = vsub.f32 %v897, %v907
  %v923 = vsub.f32 %v919, %v896
  %v924 = vsub.f32 %v920, %v897
  %v925 = vsub.f32 %v923, %v906
  %v926 = vsub.f32 %v924, %v907
  %v927 = vadd.f32 %v876, %v921
  %v928 = vadd.f32 %v877, %v922
  %v929 = vadd.f32 %v878, %v925
  %v930 = vadd.f32 %v879, %v926
  %v931 = vld [vmem:[%s0 + $0x12] sm:$0x1]
  %v932 = vld [vmem:[%s0 + $0x32] sm:$0x1]
  %v933 = vld [vmem:[%s1 + $0x12] sm:$0x1]
  %v934 = vld [vmem:[%s1 + $0x32] sm:$0x1]
  %s935 = scalar_lea.vmem %s2, 72
  %v936 = vld [vmem:[%s935] sm:$0xf]
  %s937 = scalar_lea.vmem %s3, 72
  %v938 = vld [vmem:[%s937] sm:$0xf]
  %v939 = vlaneseq
  %v940 = vshrl.u32 %v939, 7
  %v941 = vsub.s32 0, %v940
  %v942 = vrot.slane %v931, %v941
  %v943 = vlaneseq
  %v944 = vshrl.u32 %v943, 7
  %v945 = vsub.s32 0, %v944
  %v946 = vrot.slane %v932, %v945
  %v947 = vmul.f32 %v942, %v936
  %v948 = vmul.f32 %v946, %v936
  %v949 = vlaneseq
  %v950 = vshrl.u32 %v949, 7
  %v951 = vsub.s32 0, %v950
  %v952 = vrot.slane %v933, %v951
  %v953 = vlaneseq
  %v954 = vshrl.u32 %v953, 7
  %v955 = vsub.s32 0, %v954
  %v956 = vrot.slane %v934, %v955
  %v957 = vmul.f32 %v952, %v938
  %v958 = vmul.f32 %v956, %v938
  %v959 = vadd.f32 %v931, %v933
  %v960 = vadd.f32 %v932, %v934
  %v961 = vadd.f32 %v936, %v938
  %v962 = vlaneseq
  %v963 = vshrl.u32 %v962, 7
  %v964 = vsub.s32 0, %v963
  %v965 = vrot.slane %v959, %v964
  %v966 = vlaneseq
  %v967 = vshrl.u32 %v966, 7
  %v968 = vsub.s32 0, %v967
  %v969 = vrot.slane %v960, %v968
  %v970 = vmul.f32 %v965, %v961
  %v971 = vmul.f32 %v969, %v961
  %v972 = vsub.f32 %v947, %v957
  %v973 = vsub.f32 %v948, %v958
  %v974 = vsub.f32 %v970, %v947
  %v975 = vsub.f32 %v971, %v948
  %v976 = vsub.f32 %v974, %v957
  %v977 = vsub.f32 %v975, %v958
  %v978 = vadd.f32 %v927, %v972
  %v979 = vadd.f32 %v928, %v973
  %v980 = vadd.f32 %v929, %v976
  %v981 = vadd.f32 %v930, %v977
  %v982 = vld [vmem:[%s0 + $0x13] sm:$0x1]
  %v983 = vld [vmem:[%s0 + $0x33] sm:$0x1]
  %v984 = vld [vmem:[%s1 + $0x13] sm:$0x1]
  %v985 = vld [vmem:[%s1 + $0x33] sm:$0x1]
  %s986 = scalar_lea.vmem %s2, 76
  %v987 = vld [vmem:[%s986] sm:$0xf]
  %s988 = scalar_lea.vmem %s3, 76
  %v989 = vld [vmem:[%s988] sm:$0xf]
  %v990 = vlaneseq
  %v991 = vshrl.u32 %v990, 7
  %v992 = vsub.s32 0, %v991
  %v993 = vrot.slane %v982, %v992
  %v994 = vlaneseq
  %v995 = vshrl.u32 %v994, 7
  %v996 = vsub.s32 0, %v995
  %v997 = vrot.slane %v983, %v996
  %v998 = vmul.f32 %v993, %v987
  %v999 = vmul.f32 %v997, %v987
  %v1000 = vlaneseq
  %v1001 = vshrl.u32 %v1000, 7
  %v1002 = vsub.s32 0, %v1001
  %v1003 = vrot.slane %v984, %v1002
  %v1004 = vlaneseq
  %v1005 = vshrl.u32 %v1004, 7
  %v1006 = vsub.s32 0, %v1005
  %v1007 = vrot.slane %v985, %v1006
  %v1008 = vmul.f32 %v1003, %v989
  %v1009 = vmul.f32 %v1007, %v989
  %v1010 = vadd.f32 %v982, %v984
  %v1011 = vadd.f32 %v983, %v985
  %v1012 = vadd.f32 %v987, %v989
  %v1013 = vlaneseq
  %v1014 = vshrl.u32 %v1013, 7
  %v1015 = vsub.s32 0, %v1014
  %v1016 = vrot.slane %v1010, %v1015
  %v1017 = vlaneseq
  %v1018 = vshrl.u32 %v1017, 7
  %v1019 = vsub.s32 0, %v1018
  %v1020 = vrot.slane %v1011, %v1019
  %v1021 = vmul.f32 %v1016, %v1012
  %v1022 = vmul.f32 %v1020, %v1012
  %v1023 = vsub.f32 %v998, %v1008
  %v1024 = vsub.f32 %v999, %v1009
  %v1025 = vsub.f32 %v1021, %v998
  %v1026 = vsub.f32 %v1022, %v999
  %v1027 = vsub.f32 %v1025, %v1008
  %v1028 = vsub.f32 %v1026, %v1009
  %v1029 = vadd.f32 %v978, %v1023
  %v1030 = vadd.f32 %v979, %v1024
  %v1031 = vadd.f32 %v980, %v1027
  %v1032 = vadd.f32 %v981, %v1028
  %v1033 = vld [vmem:[%s0 + $0x14] sm:$0x1]
  %v1034 = vld [vmem:[%s0 + $0x34] sm:$0x1]
  %v1035 = vld [vmem:[%s1 + $0x14] sm:$0x1]
  %v1036 = vld [vmem:[%s1 + $0x34] sm:$0x1]
  %s1037 = scalar_lea.vmem %s2, 80
  %v1038 = vld [vmem:[%s1037] sm:$0xf]
  %s1039 = scalar_lea.vmem %s3, 80
  %v1040 = vld [vmem:[%s1039] sm:$0xf]
  %v1041 = vlaneseq
  %v1042 = vshrl.u32 %v1041, 7
  %v1043 = vsub.s32 0, %v1042
  %v1044 = vrot.slane %v1033, %v1043
  %v1045 = vlaneseq
  %v1046 = vshrl.u32 %v1045, 7
  %v1047 = vsub.s32 0, %v1046
  %v1048 = vrot.slane %v1034, %v1047
  %v1049 = vmul.f32 %v1044, %v1038
  %v1050 = vmul.f32 %v1048, %v1038
  %v1051 = vlaneseq
  %v1052 = vshrl.u32 %v1051, 7
  %v1053 = vsub.s32 0, %v1052
  %v1054 = vrot.slane %v1035, %v1053
  %v1055 = vlaneseq
  %v1056 = vshrl.u32 %v1055, 7
  %v1057 = vsub.s32 0, %v1056
  %v1058 = vrot.slane %v1036, %v1057
  %v1059 = vmul.f32 %v1054, %v1040
  %v1060 = vmul.f32 %v1058, %v1040
  %v1061 = vadd.f32 %v1033, %v1035
  %v1062 = vadd.f32 %v1034, %v1036
  %v1063 = vadd.f32 %v1038, %v1040
  %v1064 = vlaneseq
  %v1065 = vshrl.u32 %v1064, 7
  %v1066 = vsub.s32 0, %v1065
  %v1067 = vrot.slane %v1061, %v1066
  %v1068 = vlaneseq
  %v1069 = vshrl.u32 %v1068, 7
  %v1070 = vsub.s32 0, %v1069
  %v1071 = vrot.slane %v1062, %v1070
  %v1072 = vmul.f32 %v1067, %v1063
  %v1073 = vmul.f32 %v1071, %v1063
  %v1074 = vsub.f32 %v1049, %v1059
  %v1075 = vsub.f32 %v1050, %v1060
  %v1076 = vsub.f32 %v1072, %v1049
  %v1077 = vsub.f32 %v1073, %v1050
  %v1078 = vsub.f32 %v1076, %v1059
  %v1079 = vsub.f32 %v1077, %v1060
  %v1080 = vadd.f32 %v1029, %v1074
  %v1081 = vadd.f32 %v1030, %v1075
  %v1082 = vadd.f32 %v1031, %v1078
  %v1083 = vadd.f32 %v1032, %v1079
  %v1084 = vld [vmem:[%s0 + $0x15] sm:$0x1]
  %v1085 = vld [vmem:[%s0 + $0x35] sm:$0x1]
  %v1086 = vld [vmem:[%s1 + $0x15] sm:$0x1]
  %v1087 = vld [vmem:[%s1 + $0x35] sm:$0x1]
  %s1088 = scalar_lea.vmem %s2, 84
  %v1089 = vld [vmem:[%s1088] sm:$0xf]
  %s1090 = scalar_lea.vmem %s3, 84
  %v1091 = vld [vmem:[%s1090] sm:$0xf]
  %v1092 = vlaneseq
  %v1093 = vshrl.u32 %v1092, 7
  %v1094 = vsub.s32 0, %v1093
  %v1095 = vrot.slane %v1084, %v1094
  %v1096 = vlaneseq
  %v1097 = vshrl.u32 %v1096, 7
  %v1098 = vsub.s32 0, %v1097
  %v1099 = vrot.slane %v1085, %v1098
  %v1100 = vmul.f32 %v1095, %v1089
  %v1101 = vmul.f32 %v1099, %v1089
  %v1102 = vlaneseq
  %v1103 = vshrl.u32 %v1102, 7
  %v1104 = vsub.s32 0, %v1103
  %v1105 = vrot.slane %v1086, %v1104
  %v1106 = vlaneseq
  %v1107 = vshrl.u32 %v1106, 7
  %v1108 = vsub.s32 0, %v1107
  %v1109 = vrot.slane %v1087, %v1108
  %v1110 = vmul.f32 %v1105, %v1091
  %v1111 = vmul.f32 %v1109, %v1091
  %v1112 = vadd.f32 %v1084, %v1086
  %v1113 = vadd.f32 %v1085, %v1087
  %v1114 = vadd.f32 %v1089, %v1091
  %v1115 = vlaneseq
  %v1116 = vshrl.u32 %v1115, 7
  %v1117 = vsub.s32 0, %v1116
  %v1118 = vrot.slane %v1112, %v1117
  %v1119 = vlaneseq
  %v1120 = vshrl.u32 %v1119, 7
  %v1121 = vsub.s32 0, %v1120
  %v1122 = vrot.slane %v1113, %v1121
  %v1123 = vmul.f32 %v1118, %v1114
  %v1124 = vmul.f32 %v1122, %v1114
  %v1125 = vsub.f32 %v1100, %v1110
  %v1126 = vsub.f32 %v1101, %v1111
  %v1127 = vsub.f32 %v1123, %v1100
  %v1128 = vsub.f32 %v1124, %v1101
  %v1129 = vsub.f32 %v1127, %v1110
  %v1130 = vsub.f32 %v1128, %v1111
  %v1131 = vadd.f32 %v1080, %v1125
  %v1132 = vadd.f32 %v1081, %v1126
  %v1133 = vadd.f32 %v1082, %v1129
  %v1134 = vadd.f32 %v1083, %v1130
  %v1135 = vld [vmem:[%s0 + $0x16] sm:$0x1]
  %v1136 = vld [vmem:[%s0 + $0x36] sm:$0x1]
  %v1137 = vld [vmem:[%s1 + $0x16] sm:$0x1]
  %v1138 = vld [vmem:[%s1 + $0x36] sm:$0x1]
  %s1139 = scalar_lea.vmem %s2, 88
  %v1140 = vld [vmem:[%s1139] sm:$0xf]
  %s1141 = scalar_lea.vmem %s3, 88
  %v1142 = vld [vmem:[%s1141] sm:$0xf]
  %v1143 = vlaneseq
  %v1144 = vshrl.u32 %v1143, 7
  %v1145 = vsub.s32 0, %v1144
  %v1146 = vrot.slane %v1135, %v1145
  %v1147 = vlaneseq
  %v1148 = vshrl.u32 %v1147, 7
  %v1149 = vsub.s32 0, %v1148
  %v1150 = vrot.slane %v1136, %v1149
  %v1151 = vmul.f32 %v1146, %v1140
  %v1152 = vmul.f32 %v1150, %v1140
  %v1153 = vlaneseq
  %v1154 = vshrl.u32 %v1153, 7
  %v1155 = vsub.s32 0, %v1154
  %v1156 = vrot.slane %v1137, %v1155
  %v1157 = vlaneseq
  %v1158 = vshrl.u32 %v1157, 7
  %v1159 = vsub.s32 0, %v1158
  %v1160 = vrot.slane %v1138, %v1159
  %v1161 = vmul.f32 %v1156, %v1142
  %v1162 = vmul.f32 %v1160, %v1142
  %v1163 = vadd.f32 %v1135, %v1137
  %v1164 = vadd.f32 %v1136, %v1138
  %v1165 = vadd.f32 %v1140, %v1142
  %v1166 = vlaneseq
  %v1167 = vshrl.u32 %v1166, 7
  %v1168 = vsub.s32 0, %v1167
  %v1169 = vrot.slane %v1163, %v1168
  %v1170 = vlaneseq
  %v1171 = vshrl.u32 %v1170, 7
  %v1172 = vsub.s32 0, %v1171
  %v1173 = vrot.slane %v1164, %v1172
  %v1174 = vmul.f32 %v1169, %v1165
  %v1175 = vmul.f32 %v1173, %v1165
  %v1176 = vsub.f32 %v1151, %v1161
  %v1177 = vsub.f32 %v1152, %v1162
  %v1178 = vsub.f32 %v1174, %v1151
  %v1179 = vsub.f32 %v1175, %v1152
  %v1180 = vsub.f32 %v1178, %v1161
  %v1181 = vsub.f32 %v1179, %v1162
  %v1182 = vadd.f32 %v1131, %v1176
  %v1183 = vadd.f32 %v1132, %v1177
  %v1184 = vadd.f32 %v1133, %v1180
  %v1185 = vadd.f32 %v1134, %v1181
  %v1186 = vld [vmem:[%s0 + $0x17] sm:$0x1]
  %v1187 = vld [vmem:[%s0 + $0x37] sm:$0x1]
  %v1188 = vld [vmem:[%s1 + $0x17] sm:$0x1]
  %v1189 = vld [vmem:[%s1 + $0x37] sm:$0x1]
  %s1190 = scalar_lea.vmem %s2, 92
  %v1191 = vld [vmem:[%s1190] sm:$0xf]
  %s1192 = scalar_lea.vmem %s3, 92
  %v1193 = vld [vmem:[%s1192] sm:$0xf]
  %v1194 = vlaneseq
  %v1195 = vshrl.u32 %v1194, 7
  %v1196 = vsub.s32 0, %v1195
  %v1197 = vrot.slane %v1186, %v1196
  %v1198 = vlaneseq
  %v1199 = vshrl.u32 %v1198, 7
  %v1200 = vsub.s32 0, %v1199
  %v1201 = vrot.slane %v1187, %v1200
  %v1202 = vmul.f32 %v1197, %v1191
  %v1203 = vmul.f32 %v1201, %v1191
  %v1204 = vlaneseq
  %v1205 = vshrl.u32 %v1204, 7
  %v1206 = vsub.s32 0, %v1205
  %v1207 = vrot.slane %v1188, %v1206
  %v1208 = vlaneseq
  %v1209 = vshrl.u32 %v1208, 7
  %v1210 = vsub.s32 0, %v1209
  %v1211 = vrot.slane %v1189, %v1210
  %v1212 = vmul.f32 %v1207, %v1193
  %v1213 = vmul.f32 %v1211, %v1193
  %v1214 = vadd.f32 %v1186, %v1188
  %v1215 = vadd.f32 %v1187, %v1189
  %v1216 = vadd.f32 %v1191, %v1193
  %v1217 = vlaneseq
  %v1218 = vshrl.u32 %v1217, 7
  %v1219 = vsub.s32 0, %v1218
  %v1220 = vrot.slane %v1214, %v1219
  %v1221 = vlaneseq
  %v1222 = vshrl.u32 %v1221, 7
  %v1223 = vsub.s32 0, %v1222
  %v1224 = vrot.slane %v1215, %v1223
  %v1225 = vmul.f32 %v1220, %v1216
  %v1226 = vmul.f32 %v1224, %v1216
  %v1227 = vsub.f32 %v1202, %v1212
  %v1228 = vsub.f32 %v1203, %v1213
  %v1229 = vsub.f32 %v1225, %v1202
  %v1230 = vsub.f32 %v1226, %v1203
  %v1231 = vsub.f32 %v1229, %v1212
  %v1232 = vsub.f32 %v1230, %v1213
  %v1233 = vadd.f32 %v1182, %v1227
  %v1234 = vadd.f32 %v1183, %v1228
  %v1235 = vadd.f32 %v1184, %v1231
  %v1236 = vadd.f32 %v1185, %v1232
  %v1237 = vld [vmem:[%s0 + $0x18] sm:$0x1]
  %v1238 = vld [vmem:[%s0 + $0x38] sm:$0x1]
  %v1239 = vld [vmem:[%s1 + $0x18] sm:$0x1]
  %v1240 = vld [vmem:[%s1 + $0x38] sm:$0x1]
  %s1241 = scalar_lea.vmem %s2, 96
  %v1242 = vld [vmem:[%s1241] sm:$0xf]
  %s1243 = scalar_lea.vmem %s3, 96
  %v1244 = vld [vmem:[%s1243] sm:$0xf]
  %v1245 = vlaneseq
  %v1246 = vshrl.u32 %v1245, 7
  %v1247 = vsub.s32 0, %v1246
  %v1248 = vrot.slane %v1237, %v1247
  %v1249 = vlaneseq
  %v1250 = vshrl.u32 %v1249, 7
  %v1251 = vsub.s32 0, %v1250
  %v1252 = vrot.slane %v1238, %v1251
  %v1253 = vmul.f32 %v1248, %v1242
  %v1254 = vmul.f32 %v1252, %v1242
  %v1255 = vlaneseq
  %v1256 = vshrl.u32 %v1255, 7
  %v1257 = vsub.s32 0, %v1256
  %v1258 = vrot.slane %v1239, %v1257
  %v1259 = vlaneseq
  %v1260 = vshrl.u32 %v1259, 7
  %v1261 = vsub.s32 0, %v1260
  %v1262 = vrot.slane %v1240, %v1261
  %v1263 = vmul.f32 %v1258, %v1244
  %v1264 = vmul.f32 %v1262, %v1244
  %v1265 = vadd.f32 %v1237, %v1239
  %v1266 = vadd.f32 %v1238, %v1240
  %v1267 = vadd.f32 %v1242, %v1244
  %v1268 = vlaneseq
  %v1269 = vshrl.u32 %v1268, 7
  %v1270 = vsub.s32 0, %v1269
  %v1271 = vrot.slane %v1265, %v1270
  %v1272 = vlaneseq
  %v1273 = vshrl.u32 %v1272, 7
  %v1274 = vsub.s32 0, %v1273
  %v1275 = vrot.slane %v1266, %v1274
  %v1276 = vmul.f32 %v1271, %v1267
  %v1277 = vmul.f32 %v1275, %v1267
  %v1278 = vsub.f32 %v1253, %v1263
  %v1279 = vsub.f32 %v1254, %v1264
  %v1280 = vsub.f32 %v1276, %v1253
  %v1281 = vsub.f32 %v1277, %v1254
  %v1282 = vsub.f32 %v1280, %v1263
  %v1283 = vsub.f32 %v1281, %v1264
  %v1284 = vadd.f32 %v1233, %v1278
  %v1285 = vadd.f32 %v1234, %v1279
  %v1286 = vadd.f32 %v1235, %v1282
  %v1287 = vadd.f32 %v1236, %v1283
  %v1288 = vld [vmem:[%s0 + $0x19] sm:$0x1]
  %v1289 = vld [vmem:[%s0 + $0x39] sm:$0x1]
  %v1290 = vld [vmem:[%s1 + $0x19] sm:$0x1]
  %v1291 = vld [vmem:[%s1 + $0x39] sm:$0x1]
  %s1292 = scalar_lea.vmem %s2, 100
  %v1293 = vld [vmem:[%s1292] sm:$0xf]
  %s1294 = scalar_lea.vmem %s3, 100
  %v1295 = vld [vmem:[%s1294] sm:$0xf]
  %v1296 = vlaneseq
  %v1297 = vshrl.u32 %v1296, 7
  %v1298 = vsub.s32 0, %v1297
  %v1299 = vrot.slane %v1288, %v1298
  %v1300 = vlaneseq
  %v1301 = vshrl.u32 %v1300, 7
  %v1302 = vsub.s32 0, %v1301
  %v1303 = vrot.slane %v1289, %v1302
  %v1304 = vmul.f32 %v1299, %v1293
  %v1305 = vmul.f32 %v1303, %v1293
  %v1306 = vlaneseq
  %v1307 = vshrl.u32 %v1306, 7
  %v1308 = vsub.s32 0, %v1307
  %v1309 = vrot.slane %v1290, %v1308
  %v1310 = vlaneseq
  %v1311 = vshrl.u32 %v1310, 7
  %v1312 = vsub.s32 0, %v1311
  %v1313 = vrot.slane %v1291, %v1312
  %v1314 = vmul.f32 %v1309, %v1295
  %v1315 = vmul.f32 %v1313, %v1295
  %v1316 = vadd.f32 %v1288, %v1290
  %v1317 = vadd.f32 %v1289, %v1291
  %v1318 = vadd.f32 %v1293, %v1295
  %v1319 = vlaneseq
  %v1320 = vshrl.u32 %v1319, 7
  %v1321 = vsub.s32 0, %v1320
  %v1322 = vrot.slane %v1316, %v1321
  %v1323 = vlaneseq
  %v1324 = vshrl.u32 %v1323, 7
  %v1325 = vsub.s32 0, %v1324
  %v1326 = vrot.slane %v1317, %v1325
  %v1327 = vmul.f32 %v1322, %v1318
  %v1328 = vmul.f32 %v1326, %v1318
  %v1329 = vsub.f32 %v1304, %v1314
  %v1330 = vsub.f32 %v1305, %v1315
  %v1331 = vsub.f32 %v1327, %v1304
  %v1332 = vsub.f32 %v1328, %v1305
  %v1333 = vsub.f32 %v1331, %v1314
  %v1334 = vsub.f32 %v1332, %v1315
  %v1335 = vadd.f32 %v1284, %v1329
  %v1336 = vadd.f32 %v1285, %v1330
  %v1337 = vadd.f32 %v1286, %v1333
  %v1338 = vadd.f32 %v1287, %v1334
  %v1339 = vld [vmem:[%s0 + $0x1a] sm:$0x1]
  %v1340 = vld [vmem:[%s0 + $0x3a] sm:$0x1]
  %v1341 = vld [vmem:[%s1 + $0x1a] sm:$0x1]
  %v1342 = vld [vmem:[%s1 + $0x3a] sm:$0x1]
  %s1343 = scalar_lea.vmem %s2, 104
  %v1344 = vld [vmem:[%s1343] sm:$0xf]
  %s1345 = scalar_lea.vmem %s3, 104
  %v1346 = vld [vmem:[%s1345] sm:$0xf]
  %v1347 = vlaneseq
  %v1348 = vshrl.u32 %v1347, 7
  %v1349 = vsub.s32 0, %v1348
  %v1350 = vrot.slane %v1339, %v1349
  %v1351 = vlaneseq
  %v1352 = vshrl.u32 %v1351, 7
  %v1353 = vsub.s32 0, %v1352
  %v1354 = vrot.slane %v1340, %v1353
  %v1355 = vmul.f32 %v1350, %v1344
  %v1356 = vmul.f32 %v1354, %v1344
  %v1357 = vlaneseq
  %v1358 = vshrl.u32 %v1357, 7
  %v1359 = vsub.s32 0, %v1358
  %v1360 = vrot.slane %v1341, %v1359
  %v1361 = vlaneseq
  %v1362 = vshrl.u32 %v1361, 7
  %v1363 = vsub.s32 0, %v1362
  %v1364 = vrot.slane %v1342, %v1363
  %v1365 = vmul.f32 %v1360, %v1346
  %v1366 = vmul.f32 %v1364, %v1346
  %v1367 = vadd.f32 %v1339, %v1341
  %v1368 = vadd.f32 %v1340, %v1342
  %v1369 = vadd.f32 %v1344, %v1346
  %v1370 = vlaneseq
  %v1371 = vshrl.u32 %v1370, 7
  %v1372 = vsub.s32 0, %v1371
  %v1373 = vrot.slane %v1367, %v1372
  %v1374 = vlaneseq
  %v1375 = vshrl.u32 %v1374, 7
  %v1376 = vsub.s32 0, %v1375
  %v1377 = vrot.slane %v1368, %v1376
  %v1378 = vmul.f32 %v1373, %v1369
  %v1379 = vmul.f32 %v1377, %v1369
  %v1380 = vsub.f32 %v1355, %v1365
  %v1381 = vsub.f32 %v1356, %v1366
  %v1382 = vsub.f32 %v1378, %v1355
  %v1383 = vsub.f32 %v1379, %v1356
  %v1384 = vsub.f32 %v1382, %v1365
  %v1385 = vsub.f32 %v1383, %v1366
  %v1386 = vadd.f32 %v1335, %v1380
  %v1387 = vadd.f32 %v1336, %v1381
  %v1388 = vadd.f32 %v1337, %v1384
  %v1389 = vadd.f32 %v1338, %v1385
  %v1390 = vld [vmem:[%s0 + $0x1b] sm:$0x1]
  %v1391 = vld [vmem:[%s0 + $0x3b] sm:$0x1]
  %v1392 = vld [vmem:[%s1 + $0x1b] sm:$0x1]
  %v1393 = vld [vmem:[%s1 + $0x3b] sm:$0x1]
  %s1394 = scalar_lea.vmem %s2, 108
  %v1395 = vld [vmem:[%s1394] sm:$0xf]
  %s1396 = scalar_lea.vmem %s3, 108
  %v1397 = vld [vmem:[%s1396] sm:$0xf]
  %v1398 = vlaneseq
  %v1399 = vshrl.u32 %v1398, 7
  %v1400 = vsub.s32 0, %v1399
  %v1401 = vrot.slane %v1390, %v1400
  %v1402 = vlaneseq
  %v1403 = vshrl.u32 %v1402, 7
  %v1404 = vsub.s32 0, %v1403
  %v1405 = vrot.slane %v1391, %v1404
  %v1406 = vmul.f32 %v1401, %v1395
  %v1407 = vmul.f32 %v1405, %v1395
  %v1408 = vlaneseq
  %v1409 = vshrl.u32 %v1408, 7
  %v1410 = vsub.s32 0, %v1409
  %v1411 = vrot.slane %v1392, %v1410
  %v1412 = vlaneseq
  %v1413 = vshrl.u32 %v1412, 7
  %v1414 = vsub.s32 0, %v1413
  %v1415 = vrot.slane %v1393, %v1414
  %v1416 = vmul.f32 %v1411, %v1397
  %v1417 = vmul.f32 %v1415, %v1397
  %v1418 = vadd.f32 %v1390, %v1392
  %v1419 = vadd.f32 %v1391, %v1393
  %v1420 = vadd.f32 %v1395, %v1397
  %v1421 = vlaneseq
  %v1422 = vshrl.u32 %v1421, 7
  %v1423 = vsub.s32 0, %v1422
  %v1424 = vrot.slane %v1418, %v1423
  %v1425 = vlaneseq
  %v1426 = vshrl.u32 %v1425, 7
  %v1427 = vsub.s32 0, %v1426
  %v1428 = vrot.slane %v1419, %v1427
  %v1429 = vmul.f32 %v1424, %v1420
  %v1430 = vmul.f32 %v1428, %v1420
  %v1431 = vsub.f32 %v1406, %v1416
  %v1432 = vsub.f32 %v1407, %v1417
  %v1433 = vsub.f32 %v1429, %v1406
  %v1434 = vsub.f32 %v1430, %v1407
  %v1435 = vsub.f32 %v1433, %v1416
  %v1436 = vsub.f32 %v1434, %v1417
  %v1437 = vadd.f32 %v1386, %v1431
  %v1438 = vadd.f32 %v1387, %v1432
  %v1439 = vadd.f32 %v1388, %v1435
  %v1440 = vadd.f32 %v1389, %v1436
  %v1441 = vld [vmem:[%s0 + $0x1c] sm:$0x1]
  %v1442 = vld [vmem:[%s0 + $0x3c] sm:$0x1]
  %v1443 = vld [vmem:[%s1 + $0x1c] sm:$0x1]
  %v1444 = vld [vmem:[%s1 + $0x3c] sm:$0x1]
  %s1445 = scalar_lea.vmem %s2, 112
  %v1446 = vld [vmem:[%s1445] sm:$0xf]
  %s1447 = scalar_lea.vmem %s3, 112
  %v1448 = vld [vmem:[%s1447] sm:$0xf]
  %v1449 = vlaneseq
  %v1450 = vshrl.u32 %v1449, 7
  %v1451 = vsub.s32 0, %v1450
  %v1452 = vrot.slane %v1441, %v1451
  %v1453 = vlaneseq
  %v1454 = vshrl.u32 %v1453, 7
  %v1455 = vsub.s32 0, %v1454
  %v1456 = vrot.slane %v1442, %v1455
  %v1457 = vmul.f32 %v1452, %v1446
  %v1458 = vmul.f32 %v1456, %v1446
  %v1459 = vlaneseq
  %v1460 = vshrl.u32 %v1459, 7
  %v1461 = vsub.s32 0, %v1460
  %v1462 = vrot.slane %v1443, %v1461
  %v1463 = vlaneseq
  %v1464 = vshrl.u32 %v1463, 7
  %v1465 = vsub.s32 0, %v1464
  %v1466 = vrot.slane %v1444, %v1465
  %v1467 = vmul.f32 %v1462, %v1448
  %v1468 = vmul.f32 %v1466, %v1448
  %v1469 = vadd.f32 %v1441, %v1443
  %v1470 = vadd.f32 %v1442, %v1444
  %v1471 = vadd.f32 %v1446, %v1448
  %v1472 = vlaneseq
  %v1473 = vshrl.u32 %v1472, 7
  %v1474 = vsub.s32 0, %v1473
  %v1475 = vrot.slane %v1469, %v1474
  %v1476 = vlaneseq
  %v1477 = vshrl.u32 %v1476, 7
  %v1478 = vsub.s32 0, %v1477
  %v1479 = vrot.slane %v1470, %v1478
  %v1480 = vmul.f32 %v1475, %v1471
  %v1481 = vmul.f32 %v1479, %v1471
  %v1482 = vsub.f32 %v1457, %v1467
  %v1483 = vsub.f32 %v1458, %v1468
  %v1484 = vsub.f32 %v1480, %v1457
  %v1485 = vsub.f32 %v1481, %v1458
  %v1486 = vsub.f32 %v1484, %v1467
  %v1487 = vsub.f32 %v1485, %v1468
  %v1488 = vadd.f32 %v1437, %v1482
  %v1489 = vadd.f32 %v1438, %v1483
  %v1490 = vadd.f32 %v1439, %v1486
  %v1491 = vadd.f32 %v1440, %v1487
  %v1492 = vld [vmem:[%s0 + $0x1d] sm:$0x1]
  %v1493 = vld [vmem:[%s0 + $0x3d] sm:$0x1]
  %v1494 = vld [vmem:[%s1 + $0x1d] sm:$0x1]
  %v1495 = vld [vmem:[%s1 + $0x3d] sm:$0x1]
  %s1496 = scalar_lea.vmem %s2, 116
  %v1497 = vld [vmem:[%s1496] sm:$0xf]
  %s1498 = scalar_lea.vmem %s3, 116
  %v1499 = vld [vmem:[%s1498] sm:$0xf]
  %v1500 = vlaneseq
  %v1501 = vshrl.u32 %v1500, 7
  %v1502 = vsub.s32 0, %v1501
  %v1503 = vrot.slane %v1492, %v1502
  %v1504 = vlaneseq
  %v1505 = vshrl.u32 %v1504, 7
  %v1506 = vsub.s32 0, %v1505
  %v1507 = vrot.slane %v1493, %v1506
  %v1508 = vmul.f32 %v1503, %v1497
  %v1509 = vmul.f32 %v1507, %v1497
  %v1510 = vlaneseq
  %v1511 = vshrl.u32 %v1510, 7
  %v1512 = vsub.s32 0, %v1511
  %v1513 = vrot.slane %v1494, %v1512
  %v1514 = vlaneseq
  %v1515 = vshrl.u32 %v1514, 7
  %v1516 = vsub.s32 0, %v1515
  %v1517 = vrot.slane %v1495, %v1516
  %v1518 = vmul.f32 %v1513, %v1499
  %v1519 = vmul.f32 %v1517, %v1499
  %v1520 = vadd.f32 %v1492, %v1494
  %v1521 = vadd.f32 %v1493, %v1495
  %v1522 = vadd.f32 %v1497, %v1499
  %v1523 = vlaneseq
  %v1524 = vshrl.u32 %v1523, 7
  %v1525 = vsub.s32 0, %v1524
  %v1526 = vrot.slane %v1520, %v1525
  %v1527 = vlaneseq
  %v1528 = vshrl.u32 %v1527, 7
  %v1529 = vsub.s32 0, %v1528
  %v1530 = vrot.slane %v1521, %v1529
  %v1531 = vmul.f32 %v1526, %v1522
  %v1532 = vmul.f32 %v1530, %v1522
  %v1533 = vsub.f32 %v1508, %v1518
  %v1534 = vsub.f32 %v1509, %v1519
  %v1535 = vsub.f32 %v1531, %v1508
  %v1536 = vsub.f32 %v1532, %v1509
  %v1537 = vsub.f32 %v1535, %v1518
  %v1538 = vsub.f32 %v1536, %v1519
  %v1539 = vadd.f32 %v1488, %v1533
  %v1540 = vadd.f32 %v1489, %v1534
  %v1541 = vadd.f32 %v1490, %v1537
  %v1542 = vadd.f32 %v1491, %v1538
  %v1543 = vld [vmem:[%s0 + $0x1e] sm:$0x1]
  %v1544 = vld [vmem:[%s0 + $0x3e] sm:$0x1]
  %v1545 = vld [vmem:[%s1 + $0x1e] sm:$0x1]
  %v1546 = vld [vmem:[%s1 + $0x3e] sm:$0x1]
  %s1547 = scalar_lea.vmem %s2, 120
  %v1548 = vld [vmem:[%s1547] sm:$0xf]
  %s1549 = scalar_lea.vmem %s3, 120
  %v1550 = vld [vmem:[%s1549] sm:$0xf]
  %v1551 = vlaneseq
  %v1552 = vshrl.u32 %v1551, 7
  %v1553 = vsub.s32 0, %v1552
  %v1554 = vrot.slane %v1543, %v1553
  %v1555 = vlaneseq
  %v1556 = vshrl.u32 %v1555, 7
  %v1557 = vsub.s32 0, %v1556
  %v1558 = vrot.slane %v1544, %v1557
  %v1559 = vmul.f32 %v1554, %v1548
  %v1560 = vmul.f32 %v1558, %v1548
  %v1561 = vlaneseq
  %v1562 = vshrl.u32 %v1561, 7
  %v1563 = vsub.s32 0, %v1562
  %v1564 = vrot.slane %v1545, %v1563
  %v1565 = vlaneseq
  %v1566 = vshrl.u32 %v1565, 7
  %v1567 = vsub.s32 0, %v1566
  %v1568 = vrot.slane %v1546, %v1567
  %v1569 = vmul.f32 %v1564, %v1550
  %v1570 = vmul.f32 %v1568, %v1550
  %v1571 = vadd.f32 %v1543, %v1545
  %v1572 = vadd.f32 %v1544, %v1546
  %v1573 = vadd.f32 %v1548, %v1550
  %v1574 = vlaneseq
  %v1575 = vshrl.u32 %v1574, 7
  %v1576 = vsub.s32 0, %v1575
  %v1577 = vrot.slane %v1571, %v1576
  %v1578 = vlaneseq
  %v1579 = vshrl.u32 %v1578, 7
  %v1580 = vsub.s32 0, %v1579
  %v1581 = vrot.slane %v1572, %v1580
  %v1582 = vmul.f32 %v1577, %v1573
  %v1583 = vmul.f32 %v1581, %v1573
  %v1584 = vsub.f32 %v1559, %v1569
  %v1585 = vsub.f32 %v1560, %v1570
  %v1586 = vsub.f32 %v1582, %v1559
  %v1587 = vsub.f32 %v1583, %v1560
  %v1588 = vsub.f32 %v1586, %v1569
  %v1589 = vsub.f32 %v1587, %v1570
  %v1590 = vadd.f32 %v1539, %v1584
  %v1591 = vadd.f32 %v1540, %v1585
  %v1592 = vadd.f32 %v1541, %v1588
  %v1593 = vadd.f32 %v1542, %v1589
  %v1594 = vld [vmem:[%s0 + $0x1f] sm:$0x1]
  %v1595 = vld [vmem:[%s0 + $0x3f] sm:$0x1]
  %v1596 = vld [vmem:[%s1 + $0x1f] sm:$0x1]
  %v1597 = vld [vmem:[%s1 + $0x3f] sm:$0x1]
  %s1598 = scalar_lea.vmem %s2, 124
  %v1599 = vld [vmem:[%s1598] sm:$0xf]
  %s1600 = scalar_lea.vmem %s3, 124
  %v1601 = vld [vmem:[%s1600] sm:$0xf]
  %v1602 = vlaneseq
  %v1603 = vshrl.u32 %v1602, 7
  %v1604 = vsub.s32 0, %v1603
  %v1605 = vrot.slane %v1594, %v1604
  %v1606 = vlaneseq
  %v1607 = vshrl.u32 %v1606, 7
  %v1608 = vsub.s32 0, %v1607
  %v1609 = vrot.slane %v1595, %v1608
  %v1610 = vmul.f32 %v1605, %v1599
  %v1611 = vmul.f32 %v1609, %v1599
  %v1612 = vlaneseq
  %v1613 = vshrl.u32 %v1612, 7
  %v1614 = vsub.s32 0, %v1613
  %v1615 = vrot.slane %v1596, %v1614
  %v1616 = vlaneseq
  %v1617 = vshrl.u32 %v1616, 7
  %v1618 = vsub.s32 0, %v1617
  %v1619 = vrot.slane %v1597, %v1618
  %v1620 = vmul.f32 %v1615, %v1601
  %v1621 = vmul.f32 %v1619, %v1601
  %v1622 = vadd.f32 %v1594, %v1596
  %v1623 = vadd.f32 %v1595, %v1597
  %v1624 = vadd.f32 %v1599, %v1601
  %v1625 = vlaneseq
  %v1626 = vshrl.u32 %v1625, 7
  %v1627 = vsub.s32 0, %v1626
  %v1628 = vrot.slane %v1622, %v1627
  %v1629 = vlaneseq
  %v1630 = vshrl.u32 %v1629, 7
  %v1631 = vsub.s32 0, %v1630
  %v1632 = vrot.slane %v1623, %v1631
  %v1633 = vmul.f32 %v1628, %v1624
  %v1634 = vmul.f32 %v1632, %v1624
  %v1635 = vsub.f32 %v1610, %v1620
  %v1636 = vsub.f32 %v1611, %v1621
  %v1637 = vsub.f32 %v1633, %v1610
  %v1638 = vsub.f32 %v1634, %v1611
  %v1639 = vsub.f32 %v1637, %v1620
  %v1640 = vsub.f32 %v1638, %v1621
  %v1641 = vadd.f32 %v1590, %v1635
  %v1642 = vadd.f32 %v1591, %v1636
  %v1643 = vadd.f32 %v1592, %v1639
  %v1644 = vadd.f32 %v1593, %v1640
  %1645 = vst [vmem:[%s4] sm:$0xf] %v1641
  %1646 = vst [vmem:[%s4 + $0x4] sm:$0xf] %v1642
  %1647 = vst [vmem:[%s5] sm:$0xf] %v1643
  %1648 = vst [vmem:[%s5 + $0x4] sm:$0xf] %v1644
  // Predicated region
  $region18: #{spatial_extension_forward.5} parent=0 // pred_check
    _
  $region19: #{spatial_extension_forward.5} parent=0 // pred_check_branch
    %1650 = sbr.rel (0) target = $region21
  $region20: #{spatial_extension_forward.5} parent=0 // pred_region
    _
  $region21: #{spatial_extension_forward.5} parent=0 // pred_fallthru
    _
  // Predicated region
  $region22: #{spatial_extension_forward.5} parent=0 // pred_check
    _
  $region23: #{spatial_extension_forward.5} parent=0 // pred_check_branch
    %1652 = sbr.rel (0) target = $region25
  $region24: #{spatial_extension_forward.5} parent=0 // pred_region
    _
  $region25: #{spatial_extension_forward.5} parent=0 // pred_fallthru
    _
  // Predicated region
  $region26: #{spatial_extension_forward.5} parent=0 // pred_check
    _
  $region27: #{spatial_extension_forward.5} parent=0 // pred_check_branch
    %1654 = sbr.rel (0) target = $region29
  $region28: #{spatial_extension_forward.5} parent=0 // pred_region
    _
  $region29: #{spatial_extension_forward.5} parent=0 // pred_fallthru
    _
  // Predicated region
  $region30: #{spatial_extension_forward.5} parent=0 // pred_check
    _
  $region31: #{spatial_extension_forward.5} parent=0 // pred_check_branch
    %1656 = sbr.rel (0) target = $region33
  $region32: #{spatial_extension_forward.5} parent=0 // pred_region
    _
  $region33: #{spatial_extension_forward.5} parent=0 // pred_fallthru
    _

</llo_original>
